<compile_context>
chip_gen: v6e
topology: v6e:2x2x1
jax: 0.10.0
libtpu: 0.0.40
codegen_flags: <defaults>
</compile_context>

<pallas_src>
import functools
import math

import jax
import jax.numpy as jnp
from jax import lax
from jax.experimental import pallas as pl
from jax.experimental.pallas import tpu as pltpu

_DILATIONS = (1, 2, 4)
_PAD = 4          # spatial zero pad of the input = max dilation
_NC = 128         # lane-padded weight / accumulator columns (cols 0..2 used)


# ----------------------------------------------------------------------------
# Fused kernel: one grid step = (batch element n, output row band r)
# ----------------------------------------------------------------------------
def _hdro_kernel(x_ref, wd_ref, bd_ref, wf_ref, out_ref, cat_ref, *, H, W, TM):
    """
    x_ref  : (H+8, W+8, C) bf16  zero-padded input, NHWC
    wd_ref : (27, C, 128)  bf16  per-tap dilated-conv weights (col d <- dilation d)
    bd_ref : (1, 128)      f32   dilated-conv biases in columns 0..2
    wf_ref : (1, 28)       f32   final 3x3 conv: 27 weights (c,ky,kx) + bias
    out_ref: (TM, W)       f32   output row band
    cat_ref: (3, TM+2, W+2) f32  scratch: [fea1,fea2,fea3] band incl. the final
                                 conv's zero-padding ring
    """
    r = pl.program_id(1)
    band0 = r * TM

    # Zero the intermediate scratch: gives the final conv's zero padding ring
    # and zeros for halo rows that fall outside the image.
    cat_ref[...] = jnp.zeros((3, TM + 2, W + 2), jnp.float32)

    # ---- Stage 1: three dilated 3x3 convs (C -> 3 channels), fused im2col.
    # For every intermediate row: accumulate 27 shifted (W x C) @ (C x 128)
    # bf16 matmuls into an f32 accumulator, add biases, transpose to put W on
    # lanes and stash the 3 useful channels into the cat scratch.
    def _inter_row(y_loc, carry):
        y_int = band0 - 1 + y_loc            # global intermediate (=image) row

        @pl.when(jnp.logical_and(y_int >= 0, y_int < H))
        def _():
            acc = jnp.zeros((W, _NC), jnp.float32)
            for di, d in enumerate(_DILATIONS):
                for ky in range(3):
                    row_p = y_int + _PAD + d * (ky - 1)      # padded row index
                    for kx in range(3):
                        col0 = _PAD + d * (kx - 1)           # static col offset
                        t = di * 9 + ky * 3 + kx
                        xs = x_ref[row_p, pl.ds(col0, W), :]          # (W, C) bf16
                        acc = acc + jnp.dot(
                            xs, wd_ref[t], preferred_element_type=jnp.float32)
            acc = acc + bd_ref[...]                                   # + biases
            acc_t = jnp.transpose(acc, (1, 0))                        # (128, W)
            for c in range(3):
                cat_ref[c, pl.ds(y_loc, 1), pl.ds(1, W)] = acc_t[c:c + 1, :]

        return carry

    lax.fori_loop(0, TM + 2, _inter_row, 0)

    # ---- Stage 2: final 3x3 conv (3 -> 1 channel), VPU MACs, W on lanes.
    wf_taps = [wf_ref[0:1, i:i + 1] for i in range(27)]   # (1,1) each, hoisted
    bias_f = wf_ref[0:1, 27:28]

    def _out_row(y_rel, carry):
        o = jnp.zeros((1, W), jnp.float32) + bias_f
        for c in range(3):
            for ky in range(3):
                for kx in range(3):
                    o = o + wf_taps[c * 9 + ky * 3 + kx] * \
                        cat_ref[c, pl.ds(y_rel + ky, 1), pl.ds(kx, W)]
        out_ref[pl.ds(y_rel, 1), :] = o
        return carry

    lax.fori_loop(0, TM, _out_row, 0)


# ----------------------------------------------------------------------------
# Wrapper
# ----------------------------------------------------------------------------
def _pick_tm(h):
    if h % 32 == 0 and h > 32:
        return 32
    if h % 8 == 0 and h > 8:
        return 8
    return h


def pack_hdro_params(w1, b1, w2, b2, w3, b3, wf, bf):
    """Re-pack PyTorch-layout HDRO weights for the fused kernel (done once)."""
    C = w1.shape[1]
    # per-tap dilated conv weights: wd[t, k, col] nonzero only for col == di,
    # with t = di*9 + ky*3 + kx and wd[t, k, di] = w_di[0, k, ky, kx].
    wl = jnp.stack([w1[0], w2[0], w3[0]], axis=0)                 # (3, C, 3, 3)
    wd_rows = jnp.transpose(wl, (0, 2, 3, 1)).reshape(27, C)      # (27, C)
    onehot = (jnp.arange(27)[:, None] // 9 ==
              jnp.arange(_NC)[None, :]).astype(jnp.float32)       # (27, 128)
    wd = (wd_rows[:, :, None] * onehot[:, None, :]).astype(jnp.bfloat16)
    bd = jnp.zeros((1, _NC), jnp.float32).at[0, 0:3].set(
        jnp.concatenate([b1, b2, b3]).astype(jnp.float32))
    wf_flat = jnp.concatenate(
        [wf.reshape(-1), bf.reshape(-1)]).astype(jnp.float32).reshape(1, 28)
    return wd, bd, wf_flat


def hdro_forward(fea, wd, bd, wf_flat):
    """fea: (N, C, H, W) float32 (PyTorch NCHW). Returns (N, 1, H, W) float32."""
    N, C, H, W = fea.shape
    # TODO(synk): pad H/W that are not multiples of 8 (sublane granularity).
    assert H % 8 == 0 and W % 8 == 0, "this demo assumes H, W multiples of 8"
    TM = _pick_tm(H)
    R = H // TM
    Hp, Wp = H + 2 * _PAD, W + 2 * _PAD

    # NHWC, zero-pad by 4 (covers dilations 1/2/4), bf16 for the MXU.
    x = jnp.transpose(fea, (0, 2, 3, 1))
    xp = jnp.pad(x, ((0, 0), (_PAD, _PAD), (_PAD, _PAD), (0, 0))
                 ).astype(jnp.bfloat16)

    # Computed VMEM budget (double-buffered blocks + scratch + headroom),
    # capped below any generation's physical VMEM (v7x: 64 MiB / core).
    need = 2 * (Hp * Wp * C * 2 + 27 * C * _NC * 2 + _NC * 4 + 28 * 4
                + TM * W * 4) + 3 * (TM + 2) * max(W + 2, 128) * 4
    vmem_limit = int(min(max(2 * need, 16 * 2**20), 48 * 2**20))

    kernel = functools.partial(_hdro_kernel, H=H, W=W, TM=TM)
    out = pl.pallas_call(
        kernel,
        out_shape=jax.ShapeDtypeStruct((N, H, W), jnp.float32),
        grid_spec=pltpu.PrefetchScalarGridSpec(
            num_scalar_prefetch=0,
            grid=(N, R),
            in_specs=[
                pl.BlockSpec((None, Hp, Wp, C), lambda n, r: (n, 0, 0, 0)),
                pl.BlockSpec((27, C, _NC), lambda n, r: (0, 0, 0)),
                pl.BlockSpec((1, _NC), lambda n, r: (0, 0)),
                pl.BlockSpec((1, 28), lambda n, r: (0, 0)),
            ],
            out_specs=pl.BlockSpec((None, TM, W), lambda n, r: (n, r, 0)),
            scratch_shapes=[pltpu.VMEM((3, TM + 2, W + 2), jnp.float32)],
        ),
        compiler_params=pltpu.CompilerParams(
            dimension_semantics=("parallel", "parallel"),
            vmem_limit_bytes=vmem_limit,
        ),
    )(xp, wd, bd, wf_flat)
    return out.reshape(N, 1, H, W)


# ----------------------------------------------------------------------------
# Plain-JAX reference (f32, matches the PyTorch module) for validation
# ----------------------------------------------------------------------------
def hdro_reference(fea, w1, b1, w2, b2, w3, b3, wf, bf):
    def conv(x, w, b, dil, pad):
        y = lax.conv_general_dilated(
            x, w, window_strides=(1, 1),
            padding=((pad, pad), (pad, pad)),
            rhs_dilation=(dil, dil),
            dimension_numbers=("NCHW", "OIHW", "NCHW"),
            precision=lax.Precision.HIGHEST)
        return y + b.reshape(1, -1, 1, 1)

    f1 = conv(fea, w1, b1, 1, 1)
    f2 = conv(fea, w2, b2, 2, 2)
    f3 = conv(fea, w3, b3, 4, 4)
    return conv(jnp.concatenate([f1, f2, f3], axis=1), wf, bf, 1, 1)


if __name__ == "__main__":
    key = jax.random.PRNGKey(0)
    keys = jax.random.split(key, 9)
    N, C, H, W = 2, 64, 16, 16      # nf=64, out_nc=1 (module defaults), small HxW

    fea = jax.random.normal(keys[0], (N, C, H, W), jnp.float32)

    def conv_init(kw, kb, cout, cin, k):
        std = 1.0 / math.sqrt(cin * k * k)
        w = jax.random.normal(kw, (cout, cin, k, k), jnp.float32) * std
        b = jax.random.normal(kb, (cout,), jnp.float32) * 0.1
        return w, b

    w1, b1 = conv_init(keys[1], keys[2], 1, C, 3)
    w2, b2 = conv_init(keys[3], keys[4], 1, C, 3)
    w3, b3 = conv_init(keys[5], keys[6], 1, C, 3)
    wf, bf = conv_init(keys[7], keys[8], 1, 3, 3)

    wd, bd, wf_flat = pack_hdro_params(w1, b1, w2, b2, w3, b3, wf, bf)

    fwd = jax.jit(hdro_forward)
    out = fwd(fea, wd, bd, wf_flat)
    jax.block_until_ready(out)

    assert out.shape == (N, 1, H, W)
    assert bool(jnp.all(jnp.isfinite(out)))

    ref = hdro_reference(fea, w1, b1, w2, b2, w3, b3, wf, bf)
    err = float(jnp.max(jnp.abs(out - ref)))
    assert err < 5e-2, f"max abs err vs reference: {err}"
    print("KERNEL_OK")
</pallas_src>

<mosaic_0001>
module attributes {stable_mosaic.version = 11 : i64} {
  func.func @_hdro_kernel(%arg0: i32, %arg1: i32, %arg2: memref<1x24x24x64xbf16, #tpu.memory_space<vmem>>, %arg3: memref<27x64x128xbf16, #tpu.memory_space<vmem>>, %arg4: memref<1x128xf32, #tpu.memory_space<vmem>>, %arg5: memref<1x28xf32, #tpu.memory_space<vmem>>, %arg6: memref<1x8x16xf32, #tpu.memory_space<vmem>>, %arg7: memref<3x10x18xf32, #tpu.memory_space<vmem>>) attributes {dimension_semantics = [#tpu.dimension_semantics<parallel>, #tpu.dimension_semantics<parallel>], iteration_bounds = array<i64: 2, 2>, scalar_prefetch = 0 : i64, scratch_operands = 1 : i64, tpu.core_type = #tpu.core_type<tc>, window_params = [{transform_indices = @transform_0, window_bounds = array<i64: 1, 24, 24, 64>}, {pipeline_mode = #tpu.pipeline_mode<synchronous>, transform_indices = @transform_1, window_bounds = array<i64: 27, 64, 128>}, {pipeline_mode = #tpu.pipeline_mode<synchronous>, transform_indices = @transform_2, window_bounds = array<i64: 1, 128>}, {pipeline_mode = #tpu.pipeline_mode<synchronous>, transform_indices = @transform_3, window_bounds = array<i64: 1, 28>}, {transform_indices = @transform_4, window_bounds = array<i64: 1, 8, 16>}]} {
    %c8_i32 = arith.constant 8 : i32
    %0 = arith.muli %arg1, %c8_i32 : i32
    %cst = arith.constant 0.000000e+00 : f32
    %1 = vector.broadcast %cst : f32 to vector<3x10x18xf32>
    %c0 = arith.constant 0 : index
    %c0_0 = arith.constant 0 : index
    %c0_1 = arith.constant 0 : index
    %2 = vector.load %arg7[%c0, %c0_0, %c0_1] : memref<3x10x18xf32, #tpu.memory_space<vmem>>, vector<3x10x18xf32>
    tpu.vector_store %arg7[%c0, %c0_0, %c0_1], %1 {strides = array<i32>} : memref<3x10x18xf32, #tpu.memory_space<vmem>>, vector<3x10x18xf32>,
    %c0_i32 = arith.constant 0 : i32
    %c10_i32 = arith.constant 10 : i32
    %3 = arith.addi %c0_i32, %c10_i32 : i32
    %c1_i32 = arith.constant 1 : i32
    scf.for %arg8 = %c0_i32 to %3 step %c1_i32  : i32 {
      %c1_i32_36 = arith.constant 1 : i32
      %33 = arith.subi %0, %c1_i32_36 : i32
      %34 = arith.addi %33, %arg8 : i32
      %c0_i32_37 = arith.constant 0 : i32
      %35 = arith.cmpi sge, %34, %c0_i32_37 : i32
      %c16_i32 = arith.constant 16 : i32
      %36 = arith.cmpi slt, %34, %c16_i32 : i32
      %37 = arith.andi %35, %36 : i1
      %38 = arith.extui %37 : i1 to i32
      %c0_i32_38 = arith.constant 0 : i32
      %39 = arith.cmpi ne, %38, %c0_i32_38 : i32
      scf.if %39 {
        %cst_39 = arith.constant 0.000000e+00 : f32
        %40 = vector.broadcast %cst_39 : f32 to vector<16x128xf32>
        %c4_i32 = arith.constant 4 : i32
        %41 = arith.addi %34, %c4_i32 : i32
        %c-1_i32 = arith.constant -1 : i32
        %42 = arith.addi %41, %c-1_i32 : i32
        %c0_40 = arith.constant 0 : index
        %43 = arith.index_cast %42 : i32 to index
        %c3_41 = arith.constant 3 : index
        %c0_42 = arith.constant 0 : index
        %44 = vector.load %arg2[%c0_40, %43, %c3_41, %c0_42] : memref<1x24x24x64xbf16, #tpu.memory_space<vmem>>, vector<1x1x16x64xbf16>
        %45 = vector.shape_cast %44 : vector<1x1x16x64xbf16> to vector<16x64xbf16>
        %c0_43 = arith.constant 0 : index
        %c0_44 = arith.constant 0 : index
        %c0_45 = arith.constant 0 : index
        %46 = vector.load %arg3[%c0_43, %c0_44, %c0_45] : memref<27x64x128xbf16, #tpu.memory_space<vmem>>, vector<1x64x128xbf16>
        %47 = vector.shape_cast %46 : vector<1x64x128xbf16> to vector<64x128xbf16>
        %cst_46 = arith.constant dense<0.000000e+00> : vector<16x128xf32>
        %48 = tpu.matmul %45, %47, %cst_46 {dimension_numbers = #tpu.dot_dimension_numbers<[1], [0], [0], [1], [0, 0, 1, 1], [], []>} : vector<16x64xbf16>, vector<64x128xbf16>, vector<16x128xf32> -> vector<16x128xf32>
        %49 = arith.addf %40, %48 : vector<16x128xf32>
        %c0_47 = arith.constant 0 : index
        %50 = arith.index_cast %42 : i32 to index
        %c4_48 = arith.constant 4 : index
        %c0_49 = arith.constant 0 : index
        %51 = vector.load %arg2[%c0_47, %50, %c4_48, %c0_49] : memref<1x24x24x64xbf16, #tpu.memory_space<vmem>>, vector<1x1x16x64xbf16>
        %52 = vector.shape_cast %51 : vector<1x1x16x64xbf16> to vector<16x64xbf16>
        %c1_50 = arith.constant 1 : index
        %c0_51 = arith.constant 0 : index
        %c0_52 = arith.constant 0 : index
        %53 = vector.load %arg3[%c1_50, %c0_51, %c0_52] : memref<27x64x128xbf16, #tpu.memory_space<vmem>>, vector<1x64x128xbf16>
        %54 = vector.shape_cast %53 : vector<1x64x128xbf16> to vector<64x128xbf16>
        %cst_53 = arith.constant dense<0.000000e+00> : vector<16x128xf32>
        %55 = tpu.matmul %52, %54, %cst_53 {dimension_numbers = #tpu.dot_dimension_numbers<[1], [0], [0], [1], [0, 0, 1, 1], [], []>} : vector<16x64xbf16>, vector<64x128xbf16>, vector<16x128xf32> -> vector<16x128xf32>
        %56 = arith.addf %49, %55 : vector<16x128xf32>
        %c0_54 = arith.constant 0 : index
        %57 = arith.index_cast %42 : i32 to index
        %c5_55 = arith.constant 5 : index
        %c0_56 = arith.constant 0 : index
        %58 = vector.load %arg2[%c0_54, %57, %c5_55, %c0_56] : memref<1x24x24x64xbf16, #tpu.memory_space<vmem>>, vector<1x1x16x64xbf16>
        %59 = vector.shape_cast %58 : vector<1x1x16x64xbf16> to vector<16x64xbf16>
        %c2_57 = arith.constant 2 : index
        %c0_58 = arith.constant 0 : index
        %c0_59 = arith.constant 0 : index
        %60 = vector.load %arg3[%c2_57, %c0_58, %c0_59] : memref<27x64x128xbf16, #tpu.memory_space<vmem>>, vector<1x64x128xbf16>
        %61 = vector.shape_cast %60 : vector<1x64x128xbf16> to vector<64x128xbf16>
        %cst_60 = arith.constant dense<0.000000e+00> : vector<16x128xf32>
        %62 = tpu.matmul %59, %61, %cst_60 {dimension_numbers = #tpu.dot_dimension_numbers<[1], [0], [0], [1], [0, 0, 1, 1], [], []>} : vector<16x64xbf16>, vector<64x128xbf16>, vector<16x128xf32> -> vector<16x128xf32>
        %63 = arith.addf %56, %62 : vector<16x128xf32>
        %c4_i32_61 = arith.constant 4 : i32
        %64 = arith.addi %34, %c4_i32_61 : i32
        %c0_i32_62 = arith.constant 0 : i32
        %65 = arith.addi %64, %c0_i32_62 : i32
        %c0_63 = arith.constant 0 : index
        %66 = arith.index_cast %65 : i32 to index
        %c3_64 = arith.constant 3 : index
        %c0_65 = arith.constant 0 : index
        %67 = vector.load %arg2[%c0_63, %66, %c3_64, %c0_65] : memref<1x24x24x64xbf16, #tpu.memory_space<vmem>>, vector<1x1x16x64xbf16>
        %68 = vector.shape_cast %67 : vector<1x1x16x64xbf16> to vector<16x64xbf16>
        %c3_66 = arith.constant 3 : index
        %c0_67 = arith.constant 0 : index
        %c0_68 = arith.constant 0 : index
        %69 = vector.load %arg3[%c3_66, %c0_67, %c0_68] : memref<27x64x128xbf16, #tpu.memory_space<vmem>>, vector<1x64x128xbf16>
        %70 = vector.shape_cast %69 : vector<1x64x128xbf16> to vector<64x128xbf16>
        %cst_69 = arith.constant dense<0.000000e+00> : vector<16x128xf32>
        %71 = tpu.matmul %68, %70, %cst_69 {dimension_numbers = #tpu.dot_dimension_numbers<[1], [0], [0], [1], [0, 0, 1, 1], [], []>} : vector<16x64xbf16>, vector<64x128xbf16>, vector<16x128xf32> -> vector<16x128xf32>
        %72 = arith.addf %63, %71 : vector<16x128xf32>
        %c0_70 = arith.constant 0 : index
        %73 = arith.index_cast %65 : i32 to index
        %c4_71 = arith.constant 4 : index
        %c0_72 = arith.constant 0 : index
        %74 = vector.load %arg2[%c0_70, %73, %c4_71, %c0_72] : memref<1x24x24x64xbf16, #tpu.memory_space<vmem>>, vector<1x1x16x64xbf16>
        %75 = vector.shape_cast %74 : vector<1x1x16x64xbf16> to vector<16x64xbf16>
        %c4_73 = arith.constant 4 : index
        %c0_74 = arith.constant 0 : index
        %c0_75 = arith.constant 0 : index
        %76 = vector.load %arg3[%c4_73, %c0_74, %c0_75] : memref<27x64x128xbf16, #tpu.memory_space<vmem>>, vector<1x64x128xbf16>
        %77 = vector.shape_cast %76 : vector<1x64x128xbf16> to vector<64x128xbf16>
        %cst_76 = arith.constant dense<0.000000e+00> : vector<16x128xf32>
        %78 = tpu.matmul %75, %77, %cst_76 {dimension_numbers = #tpu.dot_dimension_numbers<[1], [0], [0], [1], [0, 0, 1, 1], [], []>} : vector<16x64xbf16>, vector<64x128xbf16>, vector<16x128xf32> -> vector<16x128xf32>
        %79 = arith.addf %72, %78 : vector<16x128xf32>
        %c0_77 = arith.constant 0 : index
        %80 = arith.index_cast %65 : i32 to index
        %c5_78 = arith.constant 5 : index
        %c0_79 = arith.constant 0 : index
        %81 = vector.load %arg2[%c0_77, %80, %c5_78, %c0_79] : memref<1x24x24x64xbf16, #tpu.memory_space<vmem>>, vector<1x1x16x64xbf16>
        %82 = vector.shape_cast %81 : vector<1x1x16x64xbf16> to vector<16x64xbf16>
        %c5_80 = arith.constant 5 : index
        %c0_81 = arith.constant 0 : index
        %c0_82 = arith.constant 0 : index
        %83 = vector.load %arg3[%c5_80, %c0_81, %c0_82] : memref<27x64x128xbf16, #tpu.memory_space<vmem>>, vector<1x64x128xbf16>
        %84 = vector.shape_cast %83 : vector<1x64x128xbf16> to vector<64x128xbf16>
        %cst_83 = arith.constant dense<0.000000e+00> : vector<16x128xf32>
        %85 = tpu.matmul %82, %84, %cst_83 {dimension_numbers = #tpu.dot_dimension_numbers<[1], [0], [0], [1], [0, 0, 1, 1], [], []>} : vector<16x64xbf16>, vector<64x128xbf16>, vector<16x128xf32> -> vector<16x128xf32>
        %86 = arith.addf %79, %85 : vector<16x128xf32>
        %c4_i32_84 = arith.constant 4 : i32
        %87 = arith.addi %34, %c4_i32_84 : i32
        %c1_i32_85 = arith.constant 1 : i32
        %88 = arith.addi %87, %c1_i32_85 : i32
        %c0_86 = arith.constant 0 : index
        %89 = arith.index_cast %88 : i32 to index
        %c3_87 = arith.constant 3 : index
        %c0_88 = arith.constant 0 : index
        %90 = vector.load %arg2[%c0_86, %89, %c3_87, %c0_88] : memref<1x24x24x64xbf16, #tpu.memory_space<vmem>>, vector<1x1x16x64xbf16>
        %91 = vector.shape_cast %90 : vector<1x1x16x64xbf16> to vector<16x64xbf16>
        %c6_89 = arith.constant 6 : index
        %c0_90 = arith.constant 0 : index
        %c0_91 = arith.constant 0 : index
        %92 = vector.load %arg3[%c6_89, %c0_90, %c0_91] : memref<27x64x128xbf16, #tpu.memory_space<vmem>>, vector<1x64x128xbf16>
        %93 = vector.shape_cast %92 : vector<1x64x128xbf16> to vector<64x128xbf16>
        %cst_92 = arith.constant dense<0.000000e+00> : vector<16x128xf32>
        %94 = tpu.matmul %91, %93, %cst_92 {dimension_numbers = #tpu.dot_dimension_numbers<[1], [0], [0], [1], [0, 0, 1, 1], [], []>} : vector<16x64xbf16>, vector<64x128xbf16>, vector<16x128xf32> -> vector<16x128xf32>
        %95 = arith.addf %86, %94 : vector<16x128xf32>
        %c0_93 = arith.constant 0 : index
        %96 = arith.index_cast %88 : i32 to index
        %c4_94 = arith.constant 4 : index
        %c0_95 = arith.constant 0 : index
        %97 = vector.load %arg2[%c0_93, %96, %c4_94, %c0_95] : memref<1x24x24x64xbf16, #tpu.memory_space<vmem>>, vector<1x1x16x64xbf16>
        %98 = vector.shape_cast %97 : vector<1x1x16x64xbf16> to vector<16x64xbf16>
        %c7_96 = arith.constant 7 : index
        %c0_97 = arith.constant 0 : index
        %c0_98 = arith.constant 0 : index
        %99 = vector.load %arg3[%c7_96, %c0_97, %c0_98] : memref<27x64x128xbf16, #tpu.memory_space<vmem>>, vector<1x64x128xbf16>
        %100 = vector.shape_cast %99 : vector<1x64x128xbf16> to vector<64x128xbf16>
        %cst_99 = arith.constant dense<0.000000e+00> : vector<16x128xf32>
        %101 = tpu.matmul %98, %100, %cst_99 {dimension_numbers = #tpu.dot_dimension_numbers<[1], [0], [0], [1], [0, 0, 1, 1], [], []>} : vector<16x64xbf16>, vector<64x128xbf16>, vector<16x128xf32> -> vector<16x128xf32>
        %102 = arith.addf %95, %101 : vector<16x128xf32>
        %c0_100 = arith.constant 0 : index
        %103 = arith.index_cast %88 : i32 to index
        %c5_101 = arith.constant 5 : index
        %c0_102 = arith.constant 0 : index
        %104 = vector.load %arg2[%c0_100, %103, %c5_101, %c0_102] : memref<1x24x24x64xbf16, #tpu.memory_space<vmem>>, vector<1x1x16x64xbf16>
        %105 = vector.shape_cast %104 : vector<1x1x16x64xbf16> to vector<16x64xbf16>
        %c8_103 = arith.constant 8 : index
        %c0_104 = arith.constant 0 : index
        %c0_105 = arith.constant 0 : index
        %106 = vector.load %arg3[%c8_103, %c0_104, %c0_105] : memref<27x64x128xbf16, #tpu.memory_space<vmem>>, vector<1x64x128xbf16>
        %107 = vector.shape_cast %106 : vector<1x64x128xbf16> to vector<64x128xbf16>
        %cst_106 = arith.constant dense<0.000000e+00> : vector<16x128xf32>
        %108 = tpu.matmul %105, %107, %cst_106 {dimension_numbers = #tpu.dot_dimension_numbers<[1], [0], [0], [1], [0, 0, 1, 1], [], []>} : vector<16x64xbf16>, vector<64x128xbf16>, vector<16x128xf32> -> vector<16x128xf32>
        %109 = arith.addf %102, %108 : vector<16x128xf32>
        %c4_i32_107 = arith.constant 4 : i32
        %110 = arith.addi %34, %c4_i32_107 : i32
        %c-2_i32 = arith.constant -2 : i32
        %111 = arith.addi %110, %c-2_i32 : i32
        %c0_108 = arith.constant 0 : index
        %112 = arith.index_cast %111 : i32 to index
        %c2_109 = arith.constant 2 : index
        %c0_110 = arith.constant 0 : index
        %113 = vector.load %arg2[%c0_108, %112, %c2_109, %c0_110] : memref<1x24x24x64xbf16, #tpu.memory_space<vmem>>, vector<1x1x16x64xbf16>
        %114 = vector.shape_cast %113 : vector<1x1x16x64xbf16> to vector<16x64xbf16>
        %c9_111 = arith.constant 9 : index
        %c0_112 = arith.constant 0 : index
        %c0_113 = arith.constant 0 : index
        %115 = vector.load %arg3[%c9_111, %c0_112, %c0_113] : memref<27x64x128xbf16, #tpu.memory_space<vmem>>, vector<1x64x128xbf16>
        %116 = vector.shape_cast %115 : vector<1x64x128xbf16> to vector<64x128xbf16>
        %cst_114 = arith.constant dense<0.000000e+00> : vector<16x128xf32>
        %117 = tpu.matmul %114, %116, %cst_114 {dimension_numbers = #tpu.dot_dimension_numbers<[1], [0], [0], [1], [0, 0, 1, 1], [], []>} : vector<16x64xbf16>, vector<64x128xbf16>, vector<16x128xf32> -> vector<16x128xf32>
        %118 = arith.addf %109, %117 : vector<16x128xf32>
        %c0_115 = arith.constant 0 : index
        %119 = arith.index_cast %111 : i32 to index
        %c4_116 = arith.constant 4 : index
        %c0_117 = arith.constant 0 : index
        %120 = vector.load %arg2[%c0_115, %119, %c4_116, %c0_117] : memref<1x24x24x64xbf16, #tpu.memory_space<vmem>>, vector<1x1x16x64xbf16>
        %121 = vector.shape_cast %120 : vector<1x1x16x64xbf16> to vector<16x64xbf16>
        %c10_118 = arith.constant 10 : index
        %c0_119 = arith.constant 0 : index
        %c0_120 = arith.constant 0 : index
        %122 = vector.load %arg3[%c10_118, %c0_119, %c0_120] : memref<27x64x128xbf16, #tpu.memory_space<vmem>>, vector<1x64x128xbf16>
        %123 = vector.shape_cast %122 : vector<1x64x128xbf16> to vector<64x128xbf16>
        %cst_121 = arith.constant dense<0.000000e+00> : vector<16x128xf32>
        %124 = tpu.matmul %121, %123, %cst_121 {dimension_numbers = #tpu.dot_dimension_numbers<[1], [0], [0], [1], [0, 0, 1, 1], [], []>} : vector<16x64xbf16>, vector<64x128xbf16>, vector<16x128xf32> -> vector<16x128xf32>
        %125 = arith.addf %118, %124 : vector<16x128xf32>
        %c0_122 = arith.constant 0 : index
        %126 = arith.index_cast %111 : i32 to index
        %c6_123 = arith.constant 6 : index
        %c0_124 = arith.constant 0 : index
        %127 = vector.load %arg2[%c0_122, %126, %c6_123, %c0_124] : memref<1x24x24x64xbf16, #tpu.memory_space<vmem>>, vector<1x1x16x64xbf16>
        %128 = vector.shape_cast %127 : vector<1x1x16x64xbf16> to vector<16x64xbf16>
        %c11_125 = arith.constant 11 : index
        %c0_126 = arith.constant 0 : index
        %c0_127 = arith.constant 0 : index
        %129 = vector.load %arg3[%c11_125, %c0_126, %c0_127] : memref<27x64x128xbf16, #tpu.memory_space<vmem>>, vector<1x64x128xbf16>
        %130 = vector.shape_cast %129 : vector<1x64x128xbf16> to vector<64x128xbf16>
        %cst_128 = arith.constant dense<0.000000e+00> : vector<16x128xf32>
        %131 = tpu.matmul %128, %130, %cst_128 {dimension_numbers = #tpu.dot_dimension_numbers<[1], [0], [0], [1], [0, 0, 1, 1], [], []>} : vector<16x64xbf16>, vector<64x128xbf16>, vector<16x128xf32> -> vector<16x128xf32>
        %132 = arith.addf %125, %131 : vector<16x128xf32>
        %c4_i32_129 = arith.constant 4 : i32
        %133 = arith.addi %34, %c4_i32_129 : i32
        %c0_i32_130 = arith.constant 0 : i32
        %134 = arith.addi %133, %c0_i32_130 : i32
        %c0_131 = arith.constant 0 : index
        %135 = arith.index_cast %134 : i32 to index
        %c2_132 = arith.constant 2 : index
        %c0_133 = arith.constant 0 : index
        %136 = vector.load %arg2[%c0_131, %135, %c2_132, %c0_133] : memref<1x24x24x64xbf16, #tpu.memory_space<vmem>>, vector<1x1x16x64xbf16>
        %137 = vector.shape_cast %136 : vector<1x1x16x64xbf16> to vector<16x64xbf16>
        %c12_134 = arith.constant 12 : index
        %c0_135 = arith.constant 0 : index
        %c0_136 = arith.constant 0 : index
        %138 = vector.load %arg3[%c12_134, %c0_135, %c0_136] : memref<27x64x128xbf16, #tpu.memory_space<vmem>>, vector<1x64x128xbf16>
        %139 = vector.shape_cast %138 : vector<1x64x128xbf16> to vector<64x128xbf16>
        %cst_137 = arith.constant dense<0.000000e+00> : vector<16x128xf32>
        %140 = tpu.matmul %137, %139, %cst_137 {dimension_numbers = #tpu.dot_dimension_numbers<[1], [0], [0], [1], [0, 0, 1, 1], [], []>} : vector<16x64xbf16>, vector<64x128xbf16>, vector<16x128xf32> -> vector<16x128xf32>
        %141 = arith.addf %132, %140 : vector<16x128xf32>
        %c0_138 = arith.constant 0 : index
        %142 = arith.index_cast %134 : i32 to index
        %c4_139 = arith.constant 4 : index
        %c0_140 = arith.constant 0 : index
        %143 = vector.load %arg2[%c0_138, %142, %c4_139, %c0_140] : memref<1x24x24x64xbf16, #tpu.memory_space<vmem>>, vector<1x1x16x64xbf16>
        %144 = vector.shape_cast %143 : vector<1x1x16x64xbf16> to vector<16x64xbf16>
        %c13_141 = arith.constant 13 : index
        %c0_142 = arith.constant 0 : index
        %c0_143 = arith.constant 0 : index
        %145 = vector.load %arg3[%c13_141, %c0_142, %c0_143] : memref<27x64x128xbf16, #tpu.memory_space<vmem>>, vector<1x64x128xbf16>
        %146 = vector.shape_cast %145 : vector<1x64x128xbf16> to vector<64x128xbf16>
        %cst_144 = arith.constant dense<0.000000e+00> : vector<16x128xf32>
        %147 = tpu.matmul %144, %146, %cst_144 {dimension_numbers = #tpu.dot_dimension_numbers<[1], [0], [0], [1], [0, 0, 1, 1], [], []>} : vector<16x64xbf16>, vector<64x128xbf16>, vector<16x128xf32> -> vector<16x128xf32>
        %148 = arith.addf %141, %147 : vector<16x128xf32>
        %c0_145 = arith.constant 0 : index
        %149 = arith.index_cast %134 : i32 to index
        %c6_146 = arith.constant 6 : index
        %c0_147 = arith.constant 0 : index
        %150 = vector.load %arg2[%c0_145, %149, %c6_146, %c0_147] : memref<1x24x24x64xbf16, #tpu.memory_space<vmem>>, vector<1x1x16x64xbf16>
        %151 = vector.shape_cast %150 : vector<1x1x16x64xbf16> to vector<16x64xbf16>
        %c14_148 = arith.constant 14 : index
        %c0_149 = arith.constant 0 : index
        %c0_150 = arith.constant 0 : index
        %152 = vector.load %arg3[%c14_148, %c0_149, %c0_150] : memref<27x64x128xbf16, #tpu.memory_space<vmem>>, vector<1x64x128xbf16>
        %153 = vector.shape_cast %152 : vector<1x64x128xbf16> to vector<64x128xbf16>
        %cst_151 = arith.constant dense<0.000000e+00> : vector<16x128xf32>
        %154 = tpu.matmul %151, %153, %cst_151 {dimension_numbers = #tpu.dot_dimension_numbers<[1], [0], [0], [1], [0, 0, 1, 1], [], []>} : vector<16x64xbf16>, vector<64x128xbf16>, vector<16x128xf32> -> vector<16x128xf32>
        %155 = arith.addf %148, %154 : vector<16x128xf32>
        %c4_i32_152 = arith.constant 4 : i32
        %156 = arith.addi %34, %c4_i32_152 : i32
        %c2_i32 = arith.constant 2 : i32
        %157 = arith.addi %156, %c2_i32 : i32
        %c0_153 = arith.constant 0 : index
        %158 = arith.index_cast %157 : i32 to index
        %c2_154 = arith.constant 2 : index
        %c0_155 = arith.constant 0 : index
        %159 = vector.load %arg2[%c0_153, %158, %c2_154, %c0_155] : memref<1x24x24x64xbf16, #tpu.memory_space<vmem>>, vector<1x1x16x64xbf16>
        %160 = vector.shape_cast %159 : vector<1x1x16x64xbf16> to vector<16x64xbf16>
        %c15_156 = arith.constant 15 : index
        %c0_157 = arith.constant 0 : index
        %c0_158 = arith.constant 0 : index
        %161 = vector.load %arg3[%c15_156, %c0_157, %c0_158] : memref<27x64x128xbf16, #tpu.memory_space<vmem>>, vector<1x64x128xbf16>
        %162 = vector.shape_cast %161 : vector<1x64x128xbf16> to vector<64x128xbf16>
        %cst_159 = arith.constant dense<0.000000e+00> : vector<16x128xf32>
        %163 = tpu.matmul %160, %162, %cst_159 {dimension_numbers = #tpu.dot_dimension_numbers<[1], [0], [0], [1], [0, 0, 1, 1], [], []>} : vector<16x64xbf16>, vector<64x128xbf16>, vector<16x128xf32> -> vector<16x128xf32>
        %164 = arith.addf %155, %163 : vector<16x128xf32>
        %c0_160 = arith.constant 0 : index
        %165 = arith.index_cast %157 : i32 to index
        %c4_161 = arith.constant 4 : index
        %c0_162 = arith.constant 0 : index
        %166 = vector.load %arg2[%c0_160, %165, %c4_161, %c0_162] : memref<1x24x24x64xbf16, #tpu.memory_space<vmem>>, vector<1x1x16x64xbf16>
        %167 = vector.shape_cast %166 : vector<1x1x16x64xbf16> to vector<16x64xbf16>
        %c16_163 = arith.constant 16 : index
        %c0_164 = arith.constant 0 : index
        %c0_165 = arith.constant 0 : index
        %168 = vector.load %arg3[%c16_163, %c0_164, %c0_165] : memref<27x64x128xbf16, #tpu.memory_space<vmem>>, vector<1x64x128xbf16>
        %169 = vector.shape_cast %168 : vector<1x64x128xbf16> to vector<64x128xbf16>
        %cst_166 = arith.constant dense<0.000000e+00> : vector<16x128xf32>
        %170 = tpu.matmul %167, %169, %cst_166 {dimension_numbers = #tpu.dot_dimension_numbers<[1], [0], [0], [1], [0, 0, 1, 1], [], []>} : vector<16x64xbf16>, vector<64x128xbf16>, vector<16x128xf32> -> vector<16x128xf32>
        %171 = arith.addf %164, %170 : vector<16x128xf32>
        %c0_167 = arith.constant 0 : index
        %172 = arith.index_cast %157 : i32 to index
        %c6_168 = arith.constant 6 : index
        %c0_169 = arith.constant 0 : index
        %173 = vector.load %arg2[%c0_167, %172, %c6_168, %c0_169] : memref<1x24x24x64xbf16, #tpu.memory_space<vmem>>, vector<1x1x16x64xbf16>
        %174 = vector.shape_cast %173 : vector<1x1x16x64xbf16> to vector<16x64xbf16>
        %c17_170 = arith.constant 17 : index
        %c0_171 = arith.constant 0 : index
        %c0_172 = arith.constant 0 : index
        %175 = vector.load %arg3[%c17_170, %c0_171, %c0_172] : memref<27x64x128xbf16, #tpu.memory_space<vmem>>, vector<1x64x128xbf16>
        %176 = vector.shape_cast %175 : vector<1x64x128xbf16> to vector<64x128xbf16>
        %cst_173 = arith.constant dense<0.000000e+00> : vector<16x128xf32>
        %177 = tpu.matmul %174, %176, %cst_173 {dimension_numbers = #tpu.dot_dimension_numbers<[1], [0], [0], [1], [0, 0, 1, 1], [], []>} : vector<16x64xbf16>, vector<64x128xbf16>, vector<16x128xf32> -> vector<16x128xf32>
        %178 = arith.addf %171, %177 : vector<16x128xf32>
        %c4_i32_174 = arith.constant 4 : i32
        %179 = arith.addi %34, %c4_i32_174 : i32
        %c-4_i32 = arith.constant -4 : i32
        %180 = arith.addi %179, %c-4_i32 : i32
        %c0_175 = arith.constant 0 : index
        %181 = arith.index_cast %180 : i32 to index
        %c0_176 = arith.constant 0 : index
        %c0_177 = arith.constant 0 : index
        %182 = vector.load %arg2[%c0_175, %181, %c0_176, %c0_177] : memref<1x24x24x64xbf16, #tpu.memory_space<vmem>>, vector<1x1x16x64xbf16>
        %183 = vector.shape_cast %182 : vector<1x1x16x64xbf16> to vector<16x64xbf16>
        %c18_178 = arith.constant 18 : index
        %c0_179 = arith.constant 0 : index
        %c0_180 = arith.constant 0 : index
        %184 = vector.load %arg3[%c18_178, %c0_179, %c0_180] : memref<27x64x128xbf16, #tpu.memory_space<vmem>>, vector<1x64x128xbf16>
        %185 = vector.shape_cast %184 : vector<1x64x128xbf16> to vector<64x128xbf16>
        %cst_181 = arith.constant dense<0.000000e+00> : vector<16x128xf32>
        %186 = tpu.matmul %183, %185, %cst_181 {dimension_numbers = #tpu.dot_dimension_numbers<[1], [0], [0], [1], [0, 0, 1, 1], [], []>} : vector<16x64xbf16>, vector<64x128xbf16>, vector<16x128xf32> -> vector<16x128xf32>
        %187 = arith.addf %178, %186 : vector<16x128xf32>
        %c0_182 = arith.constant 0 : index
        %188 = arith.index_cast %180 : i32 to index
        %c4_183 = arith.constant 4 : index
        %c0_184 = arith.constant 0 : index
        %189 = vector.load %arg2[%c0_182, %188, %c4_183, %c0_184] : memref<1x24x24x64xbf16, #tpu.memory_space<vmem>>, vector<1x1x16x64xbf16>
        %190 = vector.shape_cast %189 : vector<1x1x16x64xbf16> to vector<16x64xbf16>
        %c19_185 = arith.constant 19 : index
        %c0_186 = arith.constant 0 : index
        %c0_187 = arith.constant 0 : index
        %191 = vector.load %arg3[%c19_185, %c0_186, %c0_187] : memref<27x64x128xbf16, #tpu.memory_space<vmem>>, vector<1x64x128xbf16>
        %192 = vector.shape_cast %191 : vector<1x64x128xbf16> to vector<64x128xbf16>
        %cst_188 = arith.constant dense<0.000000e+00> : vector<16x128xf32>
        %193 = tpu.matmul %190, %192, %cst_188 {dimension_numbers = #tpu.dot_dimension_numbers<[1], [0], [0], [1], [0, 0, 1, 1], [], []>} : vector<16x64xbf16>, vector<64x128xbf16>, vector<16x128xf32> -> vector<16x128xf32>
        %194 = arith.addf %187, %193 : vector<16x128xf32>
        %c0_189 = arith.constant 0 : index
        %195 = arith.index_cast %180 : i32 to index
        %c8_190 = arith.constant 8 : index
        %c0_191 = arith.constant 0 : index
        %196 = vector.load %arg2[%c0_189, %195, %c8_190, %c0_191] : memref<1x24x24x64xbf16, #tpu.memory_space<vmem>>, vector<1x1x16x64xbf16>
        %197 = vector.shape_cast %196 : vector<1x1x16x64xbf16> to vector<16x64xbf16>
        %c20_192 = arith.constant 20 : index
        %c0_193 = arith.constant 0 : index
        %c0_194 = arith.constant 0 : index
        %198 = vector.load %arg3[%c20_192, %c0_193, %c0_194] : memref<27x64x128xbf16, #tpu.memory_space<vmem>>, vector<1x64x128xbf16>
        %199 = vector.shape_cast %198 : vector<1x64x128xbf16> to vector<64x128xbf16>
        %cst_195 = arith.constant dense<0.000000e+00> : vector<16x128xf32>
        %200 = tpu.matmul %197, %199, %cst_195 {dimension_numbers = #tpu.dot_dimension_numbers<[1], [0], [0], [1], [0, 0, 1, 1], [], []>} : vector<16x64xbf16>, vector<64x128xbf16>, vector<16x128xf32> -> vector<16x128xf32>
        %201 = arith.addf %194, %200 : vector<16x128xf32>
        %c4_i32_196 = arith.constant 4 : i32
        %202 = arith.addi %34, %c4_i32_196 : i32
        %c0_i32_197 = arith.constant 0 : i32
        %203 = arith.addi %202, %c0_i32_197 : i32
        %c0_198 = arith.constant 0 : index
        %204 = arith.index_cast %203 : i32 to index
        %c0_199 = arith.constant 0 : index
        %c0_200 = arith.constant 0 : index
        %205 = vector.load %arg2[%c0_198, %204, %c0_199, %c0_200] : memref<1x24x24x64xbf16, #tpu.memory_space<vmem>>, vector<1x1x16x64xbf16>
        %206 = vector.shape_cast %205 : vector<1x1x16x64xbf16> to vector<16x64xbf16>
        %c21_201 = arith.constant 21 : index
        %c0_202 = arith.constant 0 : index
        %c0_203 = arith.constant 0 : index
        %207 = vector.load %arg3[%c21_201, %c0_202, %c0_203] : memref<27x64x128xbf16, #tpu.memory_space<vmem>>, vector<1x64x128xbf16>
        %208 = vector.shape_cast %207 : vector<1x64x128xbf16> to vector<64x128xbf16>
        %cst_204 = arith.constant dense<0.000000e+00> : vector<16x128xf32>
        %209 = tpu.matmul %206, %208, %cst_204 {dimension_numbers = #tpu.dot_dimension_numbers<[1], [0], [0], [1], [0, 0, 1, 1], [], []>} : vector<16x64xbf16>, vector<64x128xbf16>, vector<16x128xf32> -> vector<16x128xf32>
        %210 = arith.addf %201, %209 : vector<16x128xf32>
        %c0_205 = arith.constant 0 : index
        %211 = arith.index_cast %203 : i32 to index
        %c4_206 = arith.constant 4 : index
        %c0_207 = arith.constant 0 : index
        %212 = vector.load %arg2[%c0_205, %211, %c4_206, %c0_207] : memref<1x24x24x64xbf16, #tpu.memory_space<vmem>>, vector<1x1x16x64xbf16>
        %213 = vector.shape_cast %212 : vector<1x1x16x64xbf16> to vector<16x64xbf16>
        %c22_208 = arith.constant 22 : index
        %c0_209 = arith.constant 0 : index
        %c0_210 = arith.constant 0 : index
        %214 = vector.load %arg3[%c22_208, %c0_209, %c0_210] : memref<27x64x128xbf16, #tpu.memory_space<vmem>>, vector<1x64x128xbf16>
        %215 = vector.shape_cast %214 : vector<1x64x128xbf16> to vector<64x128xbf16>
        %cst_211 = arith.constant dense<0.000000e+00> : vector<16x128xf32>
        %216 = tpu.matmul %213, %215, %cst_211 {dimension_numbers = #tpu.dot_dimension_numbers<[1], [0], [0], [1], [0, 0, 1, 1], [], []>} : vector<16x64xbf16>, vector<64x128xbf16>, vector<16x128xf32> -> vector<16x128xf32>
        %217 = arith.addf %210, %216 : vector<16x128xf32>
        %c0_212 = arith.constant 0 : index
        %218 = arith.index_cast %203 : i32 to index
        %c8_213 = arith.constant 8 : index
        %c0_214 = arith.constant 0 : index
        %219 = vector.load %arg2[%c0_212, %218, %c8_213, %c0_214] : memref<1x24x24x64xbf16, #tpu.memory_space<vmem>>, vector<1x1x16x64xbf16>
        %220 = vector.shape_cast %219 : vector<1x1x16x64xbf16> to vector<16x64xbf16>
        %c23_215 = arith.constant 23 : index
        %c0_216 = arith.constant 0 : index
        %c0_217 = arith.constant 0 : index
        %221 = vector.load %arg3[%c23_215, %c0_216, %c0_217] : memref<27x64x128xbf16, #tpu.memory_space<vmem>>, vector<1x64x128xbf16>
        %222 = vector.shape_cast %221 : vector<1x64x128xbf16> to vector<64x128xbf16>
        %cst_218 = arith.constant dense<0.000000e+00> : vector<16x128xf32>
        %223 = tpu.matmul %220, %222, %cst_218 {dimension_numbers = #tpu.dot_dimension_numbers<[1], [0], [0], [1], [0, 0, 1, 1], [], []>} : vector<16x64xbf16>, vector<64x128xbf16>, vector<16x128xf32> -> vector<16x128xf32>
        %224 = arith.addf %217, %223 : vector<16x128xf32>
        %c4_i32_219 = arith.constant 4 : i32
        %225 = arith.addi %34, %c4_i32_219 : i32
        %c4_i32_220 = arith.constant 4 : i32
        %226 = arith.addi %225, %c4_i32_220 : i32
        %c0_221 = arith.constant 0 : index
        %227 = arith.index_cast %226 : i32 to index
        %c0_222 = arith.constant 0 : index
        %c0_223 = arith.constant 0 : index
        %228 = vector.load %arg2[%c0_221, %227, %c0_222, %c0_223] : memref<1x24x24x64xbf16, #tpu.memory_space<vmem>>, vector<1x1x16x64xbf16>
        %229 = vector.shape_cast %228 : vector<1x1x16x64xbf16> to vector<16x64xbf16>
        %c24_224 = arith.constant 24 : index
        %c0_225 = arith.constant 0 : index
        %c0_226 = arith.constant 0 : index
        %230 = vector.load %arg3[%c24_224, %c0_225, %c0_226] : memref<27x64x128xbf16, #tpu.memory_space<vmem>>, vector<1x64x128xbf16>
        %231 = vector.shape_cast %230 : vector<1x64x128xbf16> to vector<64x128xbf16>
        %cst_227 = arith.constant dense<0.000000e+00> : vector<16x128xf32>
        %232 = tpu.matmul %229, %231, %cst_227 {dimension_numbers = #tpu.dot_dimension_numbers<[1], [0], [0], [1], [0, 0, 1, 1], [], []>} : vector<16x64xbf16>, vector<64x128xbf16>, vector<16x128xf32> -> vector<16x128xf32>
        %233 = arith.addf %224, %232 : vector<16x128xf32>
        %c0_228 = arith.constant 0 : index
        %234 = arith.index_cast %226 : i32 to index
        %c4_229 = arith.constant 4 : index
        %c0_230 = arith.constant 0 : index
        %235 = vector.load %arg2[%c0_228, %234, %c4_229, %c0_230] : memref<1x24x24x64xbf16, #tpu.memory_space<vmem>>, vector<1x1x16x64xbf16>
        %236 = vector.shape_cast %235 : vector<1x1x16x64xbf16> to vector<16x64xbf16>
        %c25_231 = arith.constant 25 : index
        %c0_232 = arith.constant 0 : index
        %c0_233 = arith.constant 0 : index
        %237 = vector.load %arg3[%c25_231, %c0_232, %c0_233] : memref<27x64x128xbf16, #tpu.memory_space<vmem>>, vector<1x64x128xbf16>
        %238 = vector.shape_cast %237 : vector<1x64x128xbf16> to vector<64x128xbf16>
        %cst_234 = arith.constant dense<0.000000e+00> : vector<16x128xf32>
        %239 = tpu.matmul %236, %238, %cst_234 {dimension_numbers = #tpu.dot_dimension_numbers<[1], [0], [0], [1], [0, 0, 1, 1], [], []>} : vector<16x64xbf16>, vector<64x128xbf16>, vector<16x128xf32> -> vector<16x128xf32>
        %240 = arith.addf %233, %239 : vector<16x128xf32>
        %c0_235 = arith.constant 0 : index
        %241 = arith.index_cast %226 : i32 to index
        %c8_236 = arith.constant 8 : index
        %c0_237 = arith.constant 0 : index
        %242 = vector.load %arg2[%c0_235, %241, %c8_236, %c0_237] : memref<1x24x24x64xbf16, #tpu.memory_space<vmem>>, vector<1x1x16x64xbf16>
        %243 = vector.shape_cast %242 : vector<1x1x16x64xbf16> to vector<16x64xbf16>
        %c26_238 = arith.constant 26 : index
        %c0_239 = arith.constant 0 : index
        %c0_240 = arith.constant 0 : index
        %244 = vector.load %arg3[%c26_238, %c0_239, %c0_240] : memref<27x64x128xbf16, #tpu.memory_space<vmem>>, vector<1x64x128xbf16>
        %245 = vector.shape_cast %244 : vector<1x64x128xbf16> to vector<64x128xbf16>
        %cst_241 = arith.constant dense<0.000000e+00> : vector<16x128xf32>
        %246 = tpu.matmul %243, %245, %cst_241 {dimension_numbers = #tpu.dot_dimension_numbers<[1], [0], [0], [1], [0, 0, 1, 1], [], []>} : vector<16x64xbf16>, vector<64x128xbf16>, vector<16x128xf32> -> vector<16x128xf32>
        %247 = arith.addf %240, %246 : vector<16x128xf32>
        %c0_242 = arith.constant 0 : index
        %c0_243 = arith.constant 0 : index
        %248 = vector.load %arg4[%c0_242, %c0_243] : memref<1x128xf32, #tpu.memory_space<vmem>>, vector<1x128xf32>
        %249 = vector.broadcast %248 : vector<1x128xf32> to vector<16x128xf32>
        %250 = arith.addf %247, %249 : vector<16x128xf32>
        %251 = tpu.transpose %250, [1, 0] : vector<16x128xf32> -> vector<128x16xf32>
        %252 = vector.extract_strided_slice %251 {offsets = [0, 0], sizes = [1, 16], strides = [1, 1]} : vector<128x16xf32> to vector<1x16xf32>
        %c0_244 = arith.constant 0 : index
        %253 = arith.index_cast %arg8 : i32 to index
        %c1_245 = arith.constant 1 : index
        %254 = vector.load %arg7[%c0_244, %253, %c1_245] : memref<3x10x18xf32, #tpu.memory_space<vmem>>, vector<1x1x16xf32>
        %255 = vector.shape_cast %254 : vector<1x1x16xf32> to vector<1x16xf32>
        %256 = vector.shape_cast %252 : vector<1x16xf32> to vector<1x1x16xf32>
        tpu.vector_store %arg7[%c0_244, %253, %c1_245], %256 {strides = array<i32>} : memref<3x10x18xf32, #tpu.memory_space<vmem>>, vector<1x1x16xf32>,
        %257 = vector.extract_strided_slice %251 {offsets = [1, 0], sizes = [1, 16], strides = [1, 1]} : vector<128x16xf32> to vector<1x16xf32>
        %c1_246 = arith.constant 1 : index
        %258 = arith.index_cast %arg8 : i32 to index
        %c1_247 = arith.constant 1 : index
        %259 = vector.load %arg7[%c1_246, %258, %c1_247] : memref<3x10x18xf32, #tpu.memory_space<vmem>>, vector<1x1x16xf32>
        %260 = vector.shape_cast %259 : vector<1x1x16xf32> to vector<1x16xf32>
        %261 = vector.shape_cast %257 : vector<1x16xf32> to vector<1x1x16xf32>
        tpu.vector_store %arg7[%c1_246, %258, %c1_247], %261 {strides = array<i32>} : memref<3x10x18xf32, #tpu.memory_space<vmem>>, vector<1x1x16xf32>,
        %262 = vector.extract_strided_slice %251 {offsets = [2, 0], sizes = [1, 16], strides = [1, 1]} : vector<128x16xf32> to vector<1x16xf32>
        %c2_248 = arith.constant 2 : index
        %263 = arith.index_cast %arg8 : i32 to index
        %c1_249 = arith.constant 1 : index
        %264 = vector.load %arg7[%c2_248, %263, %c1_249] : memref<3x10x18xf32, #tpu.memory_space<vmem>>, vector<1x1x16xf32>
        %265 = vector.shape_cast %264 : vector<1x1x16xf32> to vector<1x16xf32>
        %266 = vector.shape_cast %262 : vector<1x16xf32> to vector<1x1x16xf32>
        tpu.vector_store %arg7[%c2_248, %263, %c1_249], %266 {strides = array<i32>} : memref<3x10x18xf32, #tpu.memory_space<vmem>>, vector<1x1x16xf32>,
      } else {
      }
    }
    %c10_i32_2 = arith.constant 10 : i32
    %c0_3 = arith.constant 0 : index
    %c0_4 = arith.constant 0 : index
    %4 = vector.load %arg5[%c0_3, %c0_4] : memref<1x28xf32, #tpu.memory_space<vmem>>, vector<1x1xf32>
    %c0_5 = arith.constant 0 : index
    %c1 = arith.constant 1 : index
    %5 = vector.load %arg5[%c0_5, %c1] : memref<1x28xf32, #tpu.memory_space<vmem>>, vector<1x1xf32>
    %c0_6 = arith.constant 0 : index
    %c2 = arith.constant 2 : index
    %6 = vector.load %arg5[%c0_6, %c2] : memref<1x28xf32, #tpu.memory_space<vmem>>, vector<1x1xf32>
    %c0_7 = arith.constant 0 : index
    %c3 = arith.constant 3 : index
    %7 = vector.load %arg5[%c0_7, %c3] : memref<1x28xf32, #tpu.memory_space<vmem>>, vector<1x1xf32>
    %c0_8 = arith.constant 0 : index
    %c4 = arith.constant 4 : index
    %8 = vector.load %arg5[%c0_8, %c4] : memref<1x28xf32, #tpu.memory_space<vmem>>, vector<1x1xf32>
    %c0_9 = arith.constant 0 : index
    %c5 = arith.constant 5 : index
    %9 = vector.load %arg5[%c0_9, %c5] : memref<1x28xf32, #tpu.memory_space<vmem>>, vector<1x1xf32>
    %c0_10 = arith.constant 0 : index
    %c6 = arith.constant 6 : index
    %10 = vector.load %arg5[%c0_10, %c6] : memref<1x28xf32, #tpu.memory_space<vmem>>, vector<1x1xf32>
    %c0_11 = arith.constant 0 : index
    %c7 = arith.constant 7 : index
    %11 = vector.load %arg5[%c0_11, %c7] : memref<1x28xf32, #tpu.memory_space<vmem>>, vector<1x1xf32>
    %c0_12 = arith.constant 0 : index
    %c8 = arith.constant 8 : index
    %12 = vector.load %arg5[%c0_12, %c8] : memref<1x28xf32, #tpu.memory_space<vmem>>, vector<1x1xf32>
    %c0_13 = arith.constant 0 : index
    %c9 = arith.constant 9 : index
    %13 = vector.load %arg5[%c0_13, %c9] : memref<1x28xf32, #tpu.memory_space<vmem>>, vector<1x1xf32>
    %c0_14 = arith.constant 0 : index
    %c10 = arith.constant 10 : index
    %14 = vector.load %arg5[%c0_14, %c10] : memref<1x28xf32, #tpu.memory_space<vmem>>, vector<1x1xf32>
    %c0_15 = arith.constant 0 : index
    %c11 = arith.constant 11 : index
    %15 = vector.load %arg5[%c0_15, %c11] : memref<1x28xf32, #tpu.memory_space<vmem>>, vector<1x1xf32>
    %c0_16 = arith.constant 0 : index
    %c12 = arith.constant 12 : index
    %16 = vector.load %arg5[%c0_16, %c12] : memref<1x28xf32, #tpu.memory_space<vmem>>, vector<1x1xf32>
    %c0_17 = arith.constant 0 : index
    %c13 = arith.constant 13 : index
    %17 = vector.load %arg5[%c0_17, %c13] : memref<1x28xf32, #tpu.memory_space<vmem>>, vector<1x1xf32>
    %c0_18 = arith.constant 0 : index
    %c14 = arith.constant 14 : index
    %18 = vector.load %arg5[%c0_18, %c14] : memref<1x28xf32, #tpu.memory_space<vmem>>, vector<1x1xf32>
    %c0_19 = arith.constant 0 : index
    %c15 = arith.constant 15 : index
    %19 = vector.load %arg5[%c0_19, %c15] : memref<1x28xf32, #tpu.memory_space<vmem>>, vector<1x1xf32>
    %c0_20 = arith.constant 0 : index
    %c16 = arith.constant 16 : index
    %20 = vector.load %arg5[%c0_20, %c16] : memref<1x28xf32, #tpu.memory_space<vmem>>, vector<1x1xf32>
    %c0_21 = arith.constant 0 : index
    %c17 = arith.constant 17 : index
    %21 = vector.load %arg5[%c0_21, %c17] : memref<1x28xf32, #tpu.memory_space<vmem>>, vector<1x1xf32>
    %c0_22 = arith.constant 0 : index
    %c18 = arith.constant 18 : index
    %22 = vector.load %arg5[%c0_22, %c18] : memref<1x28xf32, #tpu.memory_space<vmem>>, vector<1x1xf32>
    %c0_23 = arith.constant 0 : index
    %c19 = arith.constant 19 : index
    %23 = vector.load %arg5[%c0_23, %c19] : memref<1x28xf32, #tpu.memory_space<vmem>>, vector<1x1xf32>
    %c0_24 = arith.constant 0 : index
    %c20 = arith.constant 20 : index
    %24 = vector.load %arg5[%c0_24, %c20] : memref<1x28xf32, #tpu.memory_space<vmem>>, vector<1x1xf32>
    %c0_25 = arith.constant 0 : index
    %c21 = arith.constant 21 : index
    %25 = vector.load %arg5[%c0_25, %c21] : memref<1x28xf32, #tpu.memory_space<vmem>>, vector<1x1xf32>
    %c0_26 = arith.constant 0 : index
    %c22 = arith.constant 22 : index
    %26 = vector.load %arg5[%c0_26, %c22] : memref<1x28xf32, #tpu.memory_space<vmem>>, vector<1x1xf32>
    %c0_27 = arith.constant 0 : index
    %c23 = arith.constant 23 : index
    %27 = vector.load %arg5[%c0_27, %c23] : memref<1x28xf32, #tpu.memory_space<vmem>>, vector<1x1xf32>
    %c0_28 = arith.constant 0 : index
    %c24 = arith.constant 24 : index
    %28 = vector.load %arg5[%c0_28, %c24] : memref<1x28xf32, #tpu.memory_space<vmem>>, vector<1x1xf32>
    %c0_29 = arith.constant 0 : index
    %c25 = arith.constant 25 : index
    %29 = vector.load %arg5[%c0_29, %c25] : memref<1x28xf32, #tpu.memory_space<vmem>>, vector<1x1xf32>
    %c0_30 = arith.constant 0 : index
    %c26 = arith.constant 26 : index
    %30 = vector.load %arg5[%c0_30, %c26] : memref<1x28xf32, #tpu.memory_space<vmem>>, vector<1x1xf32>
    %c0_31 = arith.constant 0 : index
    %c27 = arith.constant 27 : index
    %31 = vector.load %arg5[%c0_31, %c27] : memref<1x28xf32, #tpu.memory_space<vmem>>, vector<1x1xf32>
    %c0_i32_32 = arith.constant 0 : i32
    %c8_i32_33 = arith.constant 8 : i32
    %32 = arith.addi %c0_i32_32, %c8_i32_33 : i32
    %c1_i32_34 = arith.constant 1 : i32
    scf.for %arg8 = %c0_i32_32 to %32 step %c1_i32_34  : i32 {
      %cst_36 = arith.constant 0.000000e+00 : f32
      %33 = vector.broadcast %cst_36 : f32 to vector<1x16xf32>
      %34 = vector.broadcast %31 : vector<1x1xf32> to vector<1x16xf32>
      %35 = arith.addf %33, %34 : vector<1x16xf32>
      %c0_i32_37 = arith.constant 0 : i32
      %36 = arith.addi %arg8, %c0_i32_37 : i32
      %c0_38 = arith.constant 0 : index
      %37 = arith.index_cast %36 : i32 to index
      %c0_39 = arith.constant 0 : index
      %38 = vector.load %arg7[%c0_38, %37, %c0_39] : memref<3x10x18xf32, #tpu.memory_space<vmem>>, vector<1x1x16xf32>
      %39 = vector.shape_cast %38 : vector<1x1x16xf32> to vector<1x16xf32>
      %40 = vector.broadcast %4 : vector<1x1xf32> to vector<1x16xf32>
      %41 = arith.mulf %40, %39 : vector<1x16xf32>
      %42 = arith.addf %35, %41 : vector<1x16xf32>
      %c0_i32_40 = arith.constant 0 : i32
      %43 = arith.addi %arg8, %c0_i32_40 : i32
      %c0_41 = arith.constant 0 : index
      %44 = arith.index_cast %43 : i32 to index
      %c1_42 = arith.constant 1 : index
      %45 = vector.load %arg7[%c0_41, %44, %c1_42] : memref<3x10x18xf32, #tpu.memory_space<vmem>>, vector<1x1x16xf32>
      %46 = vector.shape_cast %45 : vector<1x1x16xf32> to vector<1x16xf32>
      %47 = vector.broadcast %5 : vector<1x1xf32> to vector<1x16xf32>
      %48 = arith.mulf %47, %46 : vector<1x16xf32>
      %49 = arith.addf %42, %48 : vector<1x16xf32>
      %c0_i32_43 = arith.constant 0 : i32
      %50 = arith.addi %arg8, %c0_i32_43 : i32
      %c0_44 = arith.constant 0 : index
      %51 = arith.index_cast %50 : i32 to index
      %c2_45 = arith.constant 2 : index
      %52 = vector.load %arg7[%c0_44, %51, %c2_45] : memref<3x10x18xf32, #tpu.memory_space<vmem>>, vector<1x1x16xf32>
      %53 = vector.shape_cast %52 : vector<1x1x16xf32> to vector<1x16xf32>
      %54 = vector.broadcast %6 : vector<1x1xf32> to vector<1x16xf32>
      %55 = arith.mulf %54, %53 : vector<1x16xf32>
      %56 = arith.addf %49, %55 : vector<1x16xf32>
      %c1_i32_46 = arith.constant 1 : i32
      %57 = arith.addi %arg8, %c1_i32_46 : i32
      %c0_47 = arith.constant 0 : index
      %58 = arith.index_cast %57 : i32 to index
      %c0_48 = arith.constant 0 : index
      %59 = vector.load %arg7[%c0_47, %58, %c0_48] : memref<3x10x18xf32, #tpu.memory_space<vmem>>, vector<1x1x16xf32>
      %60 = vector.shape_cast %59 : vector<1x1x16xf32> to vector<1x16xf32>
      %61 = vector.broadcast %7 : vector<1x1xf32> to vector<1x16xf32>
      %62 = arith.mulf %61, %60 : vector<1x16xf32>
      %63 = arith.addf %56, %62 : vector<1x16xf32>
      %c1_i32_49 = arith.constant 1 : i32
      %64 = arith.addi %arg8, %c1_i32_49 : i32
      %c0_50 = arith.constant 0 : index
      %65 = arith.index_cast %64 : i32 to index
      %c1_51 = arith.constant 1 : index
      %66 = vector.load %arg7[%c0_50, %65, %c1_51] : memref<3x10x18xf32, #tpu.memory_space<vmem>>, vector<1x1x16xf32>
      %67 = vector.shape_cast %66 : vector<1x1x16xf32> to vector<1x16xf32>
      %68 = vector.broadcast %8 : vector<1x1xf32> to vector<1x16xf32>
      %69 = arith.mulf %68, %67 : vector<1x16xf32>
      %70 = arith.addf %63, %69 : vector<1x16xf32>
      %c1_i32_52 = arith.constant 1 : i32
      %71 = arith.addi %arg8, %c1_i32_52 : i32
      %c0_53 = arith.constant 0 : index
      %72 = arith.index_cast %71 : i32 to index
      %c2_54 = arith.constant 2 : index
      %73 = vector.load %arg7[%c0_53, %72, %c2_54] : memref<3x10x18xf32, #tpu.memory_space<vmem>>, vector<1x1x16xf32>
      %74 = vector.shape_cast %73 : vector<1x1x16xf32> to vector<1x16xf32>
      %75 = vector.broadcast %9 : vector<1x1xf32> to vector<1x16xf32>
      %76 = arith.mulf %75, %74 : vector<1x16xf32>
      %77 = arith.addf %70, %76 : vector<1x16xf32>
      %c2_i32 = arith.constant 2 : i32
      %78 = arith.addi %arg8, %c2_i32 : i32
      %c0_55 = arith.constant 0 : index
      %79 = arith.index_cast %78 : i32 to index
      %c0_56 = arith.constant 0 : index
      %80 = vector.load %arg7[%c0_55, %79, %c0_56] : memref<3x10x18xf32, #tpu.memory_space<vmem>>, vector<1x1x16xf32>
      %81 = vector.shape_cast %80 : vector<1x1x16xf32> to vector<1x16xf32>
      %82 = vector.broadcast %10 : vector<1x1xf32> to vector<1x16xf32>
      %83 = arith.mulf %82, %81 : vector<1x16xf32>
      %84 = arith.addf %77, %83 : vector<1x16xf32>
      %c2_i32_57 = arith.constant 2 : i32
      %85 = arith.addi %arg8, %c2_i32_57 : i32
      %c0_58 = arith.constant 0 : index
      %86 = arith.index_cast %85 : i32 to index
      %c1_59 = arith.constant 1 : index
      %87 = vector.load %arg7[%c0_58, %86, %c1_59] : memref<3x10x18xf32, #tpu.memory_space<vmem>>, vector<1x1x16xf32>
      %88 = vector.shape_cast %87 : vector<1x1x16xf32> to vector<1x16xf32>
      %89 = vector.broadcast %11 : vector<1x1xf32> to vector<1x16xf32>
      %90 = arith.mulf %89, %88 : vector<1x16xf32>
      %91 = arith.addf %84, %90 : vector<1x16xf32>
      %c2_i32_60 = arith.constant 2 : i32
      %92 = arith.addi %arg8, %c2_i32_60 : i32
      %c0_61 = arith.constant 0 : index
      %93 = arith.index_cast %92 : i32 to index
      %c2_62 = arith.constant 2 : index
      %94 = vector.load %arg7[%c0_61, %93, %c2_62] : memref<3x10x18xf32, #tpu.memory_space<vmem>>, vector<1x1x16xf32>
      %95 = vector.shape_cast %94 : vector<1x1x16xf32> to vector<1x16xf32>
      %96 = vector.broadcast %12 : vector<1x1xf32> to vector<1x16xf32>
      %97 = arith.mulf %96, %95 : vector<1x16xf32>
      %98 = arith.addf %91, %97 : vector<1x16xf32>
      %c0_i32_63 = arith.constant 0 : i32
      %99 = arith.addi %arg8, %c0_i32_63 : i32
      %c1_64 = arith.constant 1 : index
      %100 = arith.index_cast %99 : i32 to index
      %c0_65 = arith.constant 0 : index
      %101 = vector.load %arg7[%c1_64, %100, %c0_65] : memref<3x10x18xf32, #tpu.memory_space<vmem>>, vector<1x1x16xf32>
      %102 = vector.shape_cast %101 : vector<1x1x16xf32> to vector<1x16xf32>
      %103 = vector.broadcast %13 : vector<1x1xf32> to vector<1x16xf32>
      %104 = arith.mulf %103, %102 : vector<1x16xf32>
      %105 = arith.addf %98, %104 : vector<1x16xf32>
      %c0_i32_66 = arith.constant 0 : i32
      %106 = arith.addi %arg8, %c0_i32_66 : i32
      %c1_67 = arith.constant 1 : index
      %107 = arith.index_cast %106 : i32 to index
      %c1_68 = arith.constant 1 : index
      %108 = vector.load %arg7[%c1_67, %107, %c1_68] : memref<3x10x18xf32, #tpu.memory_space<vmem>>, vector<1x1x16xf32>
      %109 = vector.shape_cast %108 : vector<1x1x16xf32> to vector<1x16xf32>
      %110 = vector.broadcast %14 : vector<1x1xf32> to vector<1x16xf32>
      %111 = arith.mulf %110, %109 : vector<1x16xf32>
      %112 = arith.addf %105, %111 : vector<1x16xf32>
      %c0_i32_69 = arith.constant 0 : i32
      %113 = arith.addi %arg8, %c0_i32_69 : i32
      %c1_70 = arith.constant 1 : index
      %114 = arith.index_cast %113 : i32 to index
      %c2_71 = arith.constant 2 : index
      %115 = vector.load %arg7[%c1_70, %114, %c2_71] : memref<3x10x18xf32, #tpu.memory_space<vmem>>, vector<1x1x16xf32>
      %116 = vector.shape_cast %115 : vector<1x1x16xf32> to vector<1x16xf32>
      %117 = vector.broadcast %15 : vector<1x1xf32> to vector<1x16xf32>
      %118 = arith.mulf %117, %116 : vector<1x16xf32>
      %119 = arith.addf %112, %118 : vector<1x16xf32>
      %c1_i32_72 = arith.constant 1 : i32
      %120 = arith.addi %arg8, %c1_i32_72 : i32
      %c1_73 = arith.constant 1 : index
      %121 = arith.index_cast %120 : i32 to index
      %c0_74 = arith.constant 0 : index
      %122 = vector.load %arg7[%c1_73, %121, %c0_74] : memref<3x10x18xf32, #tpu.memory_space<vmem>>, vector<1x1x16xf32>
      %123 = vector.shape_cast %122 : vector<1x1x16xf32> to vector<1x16xf32>
      %124 = vector.broadcast %16 : vector<1x1xf32> to vector<1x16xf32>
      %125 = arith.mulf %124, %123 : vector<1x16xf32>
      %126 = arith.addf %119, %125 : vector<1x16xf32>
      %c1_i32_75 = arith.constant 1 : i32
      %127 = arith.addi %arg8, %c1_i32_75 : i32
      %c1_76 = arith.constant 1 : index
      %128 = arith.index_cast %127 : i32 to index
      %c1_77 = arith.constant 1 : index
      %129 = vector.load %arg7[%c1_76, %128, %c1_77] : memref<3x10x18xf32, #tpu.memory_space<vmem>>, vector<1x1x16xf32>
      %130 = vector.shape_cast %129 : vector<1x1x16xf32> to vector<1x16xf32>
      %131 = vector.broadcast %17 : vector<1x1xf32> to vector<1x16xf32>
      %132 = arith.mulf %131, %130 : vector<1x16xf32>
      %133 = arith.addf %126, %132 : vector<1x16xf32>
      %c1_i32_78 = arith.constant 1 : i32
      %134 = arith.addi %arg8, %c1_i32_78 : i32
      %c1_79 = arith.constant 1 : index
      %135 = arith.index_cast %134 : i32 to index
      %c2_80 = arith.constant 2 : index
      %136 = vector.load %arg7[%c1_79, %135, %c2_80] : memref<3x10x18xf32, #tpu.memory_space<vmem>>, vector<1x1x16xf32>
      %137 = vector.shape_cast %136 : vector<1x1x16xf32> to vector<1x16xf32>
      %138 = vector.broadcast %18 : vector<1x1xf32> to vector<1x16xf32>
      %139 = arith.mulf %138, %137 : vector<1x16xf32>
      %140 = arith.addf %133, %139 : vector<1x16xf32>
      %c2_i32_81 = arith.constant 2 : i32
      %141 = arith.addi %arg8, %c2_i32_81 : i32
      %c1_82 = arith.constant 1 : index
      %142 = arith.index_cast %141 : i32 to index
      %c0_83 = arith.constant 0 : index
      %143 = vector.load %arg7[%c1_82, %142, %c0_83] : memref<3x10x18xf32, #tpu.memory_space<vmem>>, vector<1x1x16xf32>
      %144 = vector.shape_cast %143 : vector<1x1x16xf32> to vector<1x16xf32>
      %145 = vector.broadcast %19 : vector<1x1xf32> to vector<1x16xf32>
      %146 = arith.mulf %145, %144 : vector<1x16xf32>
      %147 = arith.addf %140, %146 : vector<1x16xf32>
      %c2_i32_84 = arith.constant 2 : i32
      %148 = arith.addi %arg8, %c2_i32_84 : i32
      %c1_85 = arith.constant 1 : index
      %149 = arith.index_cast %148 : i32 to index
      %c1_86 = arith.constant 1 : index
      %150 = vector.load %arg7[%c1_85, %149, %c1_86] : memref<3x10x18xf32, #tpu.memory_space<vmem>>, vector<1x1x16xf32>
      %151 = vector.shape_cast %150 : vector<1x1x16xf32> to vector<1x16xf32>
      %152 = vector.broadcast %20 : vector<1x1xf32> to vector<1x16xf32>
      %153 = arith.mulf %152, %151 : vector<1x16xf32>
      %154 = arith.addf %147, %153 : vector<1x16xf32>
      %c2_i32_87 = arith.constant 2 : i32
      %155 = arith.addi %arg8, %c2_i32_87 : i32
      %c1_88 = arith.constant 1 : index
      %156 = arith.index_cast %155 : i32 to index
      %c2_89 = arith.constant 2 : index
      %157 = vector.load %arg7[%c1_88, %156, %c2_89] : memref<3x10x18xf32, #tpu.memory_space<vmem>>, vector<1x1x16xf32>
      %158 = vector.shape_cast %157 : vector<1x1x16xf32> to vector<1x16xf32>
      %159 = vector.broadcast %21 : vector<1x1xf32> to vector<1x16xf32>
      %160 = arith.mulf %159, %158 : vector<1x16xf32>
      %161 = arith.addf %154, %160 : vector<1x16xf32>
      %c0_i32_90 = arith.constant 0 : i32
      %162 = arith.addi %arg8, %c0_i32_90 : i32
      %c2_91 = arith.constant 2 : index
      %163 = arith.index_cast %162 : i32 to index
      %c0_92 = arith.constant 0 : index
      %164 = vector.load %arg7[%c2_91, %163, %c0_92] : memref<3x10x18xf32, #tpu.memory_space<vmem>>, vector<1x1x16xf32>
      %165 = vector.shape_cast %164 : vector<1x1x16xf32> to vector<1x16xf32>
      %166 = vector.broadcast %22 : vector<1x1xf32> to vector<1x16xf32>
      %167 = arith.mulf %166, %165 : vector<1x16xf32>
      %168 = arith.addf %161, %167 : vector<1x16xf32>
      %c0_i32_93 = arith.constant 0 : i32
      %169 = arith.addi %arg8, %c0_i32_93 : i32
      %c2_94 = arith.constant 2 : index
      %170 = arith.index_cast %169 : i32 to index
      %c1_95 = arith.constant 1 : index
      %171 = vector.load %arg7[%c2_94, %170, %c1_95] : memref<3x10x18xf32, #tpu.memory_space<vmem>>, vector<1x1x16xf32>
      %172 = vector.shape_cast %171 : vector<1x1x16xf32> to vector<1x16xf32>
      %173 = vector.broadcast %23 : vector<1x1xf32> to vector<1x16xf32>
      %174 = arith.mulf %173, %172 : vector<1x16xf32>
      %175 = arith.addf %168, %174 : vector<1x16xf32>
      %c0_i32_96 = arith.constant 0 : i32
      %176 = arith.addi %arg8, %c0_i32_96 : i32
      %c2_97 = arith.constant 2 : index
      %177 = arith.index_cast %176 : i32 to index
      %c2_98 = arith.constant 2 : index
      %178 = vector.load %arg7[%c2_97, %177, %c2_98] : memref<3x10x18xf32, #tpu.memory_space<vmem>>, vector<1x1x16xf32>
      %179 = vector.shape_cast %178 : vector<1x1x16xf32> to vector<1x16xf32>
      %180 = vector.broadcast %24 : vector<1x1xf32> to vector<1x16xf32>
      %181 = arith.mulf %180, %179 : vector<1x16xf32>
      %182 = arith.addf %175, %181 : vector<1x16xf32>
      %c1_i32_99 = arith.constant 1 : i32
      %183 = arith.addi %arg8, %c1_i32_99 : i32
      %c2_100 = arith.constant 2 : index
      %184 = arith.index_cast %183 : i32 to index
      %c0_101 = arith.constant 0 : index
      %185 = vector.load %arg7[%c2_100, %184, %c0_101] : memref<3x10x18xf32, #tpu.memory_space<vmem>>, vector<1x1x16xf32>
      %186 = vector.shape_cast %185 : vector<1x1x16xf32> to vector<1x16xf32>
      %187 = vector.broadcast %25 : vector<1x1xf32> to vector<1x16xf32>
      %188 = arith.mulf %187, %186 : vector<1x16xf32>
      %189 = arith.addf %182, %188 : vector<1x16xf32>
      %c1_i32_102 = arith.constant 1 : i32
      %190 = arith.addi %arg8, %c1_i32_102 : i32
      %c2_103 = arith.constant 2 : index
      %191 = arith.index_cast %190 : i32 to index
      %c1_104 = arith.constant 1 : index
      %192 = vector.load %arg7[%c2_103, %191, %c1_104] : memref<3x10x18xf32, #tpu.memory_space<vmem>>, vector<1x1x16xf32>
      %193 = vector.shape_cast %192 : vector<1x1x16xf32> to vector<1x16xf32>
      %194 = vector.broadcast %26 : vector<1x1xf32> to vector<1x16xf32>
      %195 = arith.mulf %194, %193 : vector<1x16xf32>
      %196 = arith.addf %189, %195 : vector<1x16xf32>
      %c1_i32_105 = arith.constant 1 : i32
      %197 = arith.addi %arg8, %c1_i32_105 : i32
      %c2_106 = arith.constant 2 : index
      %198 = arith.index_cast %197 : i32 to index
      %c2_107 = arith.constant 2 : index
      %199 = vector.load %arg7[%c2_106, %198, %c2_107] : memref<3x10x18xf32, #tpu.memory_space<vmem>>, vector<1x1x16xf32>
      %200 = vector.shape_cast %199 : vector<1x1x16xf32> to vector<1x16xf32>
      %201 = vector.broadcast %27 : vector<1x1xf32> to vector<1x16xf32>
      %202 = arith.mulf %201, %200 : vector<1x16xf32>
      %203 = arith.addf %196, %202 : vector<1x16xf32>
      %c2_i32_108 = arith.constant 2 : i32
      %204 = arith.addi %arg8, %c2_i32_108 : i32
      %c2_109 = arith.constant 2 : index
      %205 = arith.index_cast %204 : i32 to index
      %c0_110 = arith.constant 0 : index
      %206 = vector.load %arg7[%c2_109, %205, %c0_110] : memref<3x10x18xf32, #tpu.memory_space<vmem>>, vector<1x1x16xf32>
      %207 = vector.shape_cast %206 : vector<1x1x16xf32> to vector<1x16xf32>
      %208 = vector.broadcast %28 : vector<1x1xf32> to vector<1x16xf32>
      %209 = arith.mulf %208, %207 : vector<1x16xf32>
      %210 = arith.addf %203, %209 : vector<1x16xf32>
      %c2_i32_111 = arith.constant 2 : i32
      %211 = arith.addi %arg8, %c2_i32_111 : i32
      %c2_112 = arith.constant 2 : index
      %212 = arith.index_cast %211 : i32 to index
      %c1_113 = arith.constant 1 : index
      %213 = vector.load %arg7[%c2_112, %212, %c1_113] : memref<3x10x18xf32, #tpu.memory_space<vmem>>, vector<1x1x16xf32>
      %214 = vector.shape_cast %213 : vector<1x1x16xf32> to vector<1x16xf32>
      %215 = vector.broadcast %29 : vector<1x1xf32> to vector<1x16xf32>
      %216 = arith.mulf %215, %214 : vector<1x16xf32>
      %217 = arith.addf %210, %216 : vector<1x16xf32>
      %c2_i32_114 = arith.constant 2 : i32
      %218 = arith.addi %arg8, %c2_i32_114 : i32
      %c2_115 = arith.constant 2 : index
      %219 = arith.index_cast %218 : i32 to index
      %c2_116 = arith.constant 2 : index
      %220 = vector.load %arg7[%c2_115, %219, %c2_116] : memref<3x10x18xf32, #tpu.memory_space<vmem>>, vector<1x1x16xf32>
      %221 = vector.shape_cast %220 : vector<1x1x16xf32> to vector<1x16xf32>
      %222 = vector.broadcast %30 : vector<1x1xf32> to vector<1x16xf32>
      %223 = arith.mulf %222, %221 : vector<1x16xf32>
      %224 = arith.addf %217, %223 : vector<1x16xf32>
      %c0_117 = arith.constant 0 : index
      %225 = arith.index_cast %arg8 : i32 to index
      %c0_118 = arith.constant 0 : index
      %226 = vector.load %arg6[%c0_117, %225, %c0_118] : memref<1x8x16xf32, #tpu.memory_space<vmem>>, vector<1x1x16xf32>
      %227 = vector.shape_cast %226 : vector<1x1x16xf32> to vector<1x16xf32>
      %228 = vector.shape_cast %224 : vector<1x16xf32> to vector<1x1x16xf32>
      tpu.vector_store %arg6[%c0_117, %225, %c0_118], %228 {strides = array<i32>} : memref<1x8x16xf32, #tpu.memory_space<vmem>>, vector<1x1x16xf32>,
    }
    %c8_i32_35 = arith.constant 8 : i32
    return
  }
  func.func @transform_0(%arg0: i32, %arg1: i32) -> (i32, i32, i32, i32) {
    %c0_i32 = arith.constant 0 : i32
    %c0_i32_0 = arith.constant 0 : i32
    %c0_i32_1 = arith.constant 0 : i32
    %c0_i32_2 = arith.constant 0 : i32
    return %arg0, %c0_i32, %c0_i32_0, %c0_i32_1 : i32, i32, i32, i32
  }
  func.func @transform_1(%arg0: i32, %arg1: i32) -> (i32, i32, i32) {
    %c0_i32 = arith.constant 0 : i32
    %c0_i32_0 = arith.constant 0 : i32
    %c0_i32_1 = arith.constant 0 : i32
    %c0_i32_2 = arith.constant 0 : i32
    return %c0_i32, %c0_i32_0, %c0_i32_1 : i32, i32, i32
  }
  func.func @transform_2(%arg0: i32, %arg1: i32) -> (i32, i32) {
    %c0_i32 = arith.constant 0 : i32
    %c0_i32_0 = arith.constant 0 : i32
    %c0_i32_1 = arith.constant 0 : i32
    return %c0_i32, %c0_i32_0 : i32, i32
  }
  func.func @transform_3(%arg0: i32, %arg1: i32) -> (i32, i32) {
    %c0_i32 = arith.constant 0 : i32
    %c0_i32_0 = arith.constant 0 : i32
    %c0_i32_1 = arith.constant 0 : i32
    return %c0_i32, %c0_i32_0 : i32, i32
  }
  func.func @transform_4(%arg0: i32, %arg1: i32) -> (i32, i32, i32) {
    %c0_i32 = arith.constant 0 : i32
    %c0_i32_0 = arith.constant 0 : i32
    return %arg0, %arg1, %c0_i32 : i32, i32, i32
  }
}

</mosaic_0001>

<llo_original>
// kernel: hdro_forward.1
$region0: #{hdro_forward.1}
  #allocation0 [shape = 'u32[]', space=smem, size = 0x4, offset = 0x4, fixed_abs, tag = 'smem constant byte address 0x4 - core index']
  #allocation1 [shape = 'u32[144,128]{1,0:T(1,128)}', space=vmem, size = 0x12000, scoped, tag = 'internal scratch']
  #allocation2 [shape = 'f32[3,10,18]{2,1,0:T(8,128)}', space=vmem, size = 0x6000, scoped, tag = 'scratch operand']
  %s0 = inlined_call_operand.vmem [shape: bf16[2,24,24,64], index: 0, kind: input, shape index: {}]
  %s1 = inlined_call_operand.vmem [shape: bf16[27,64,128], index: 1, kind: input, shape index: {}]
  %s2 = inlined_call_operand.vmem [shape: f32[1,128], index: 2, kind: input, shape index: {}]
  %s3 = inlined_call_operand.vmem [shape: f32[1,28], index: 3, kind: input, shape index: {}]
  %s4 = inlined_call_operand.hbm [shape: f32[2,16,16], index: 4, kind: output, shape index: {}]
  %s5 = sld [smem:[#allocation0]]
  $region67: #{hdro_forward.1} parent=0
    _
  %s7 = ssub.s32 1, %s5
  %s8 = scalar_select 0, %s7, %s5
  $region1: #{hdro_forward.1} parent=0
    #allocation3 [shape = 'u8[8192]{0}', space=vmem, size = 0x2000, scoped, tag = 'output window, operand 0']
    #allocation4 [shape = 's32[2]{0}', space=sflag, size = 0x8, scoped, tag = 'scoped memory for hdro_forward.1']
    %9 = vsyncpa [#allocation4], 0
    %s10 = scalar_lea.sflag [#allocation4], 1
    %11 = vsyncpa %s10, 0
    loop: start=0, step=1, limit=6
    $region2: #{hdro_forward.1} parent=1 // loop_pre_header
      _
    $region3: #{hdro_forward.1} parent=1 // loop_header
      %s13 = sphi 0, %s17
      %p14 = scmp.ge.s32.totalorder %s13, 6
      %s20 = sphi 0, %s32
      %s21 = sphi 0, %s28
      %s22 = sphi 0, %s20
      %s23 = sphi 0, %s21
      %s24 = sphi 0, %s22
      %s25 = sphi 0, %s23
      %s35 = sphi 0, %s37
      %s38 = sphi 0, %s35
      %s39 = sphi 0, %s38
      %s55 = sphi 0, %s39
      %s59 = sphi 0, %s59
      %s61 = sphi 0, %s59
      %s62 = sphi 0, %s61
      %s76 = sphi 0, %s62
      %s80 = sphi 0, %s80
      %s82 = sphi 0, %s80
      %s83 = sphi 0, %s82
      %s97 = sphi 0, %s83
      %s101 = sphi 0, %s101
      %s103 = sphi 0, %s101
      %s104 = sphi 0, %s103
      %s118 = sphi 0, %s104
      %s126 = sphi 0, %s128
      %s129 = sphi 0, %s126
      %s130 = sphi 0, %s129
      %s146 = sphi 0, %s130
    $region4: #{hdro_forward.1} parent=1 // loop_header_branch
      %16 = sbr.rel (%p14) target = $region8
    $region5: #{hdro_forward.1} parent=1 // loop_body
      %s18 = ssub.s32 %s13, 1
      %s19 = ssub.s32 %s13, 2
      %s26 = sadd.s32 1, %s21
      %p27 = scmp.ge.s32.totalorder %s26, 2
      %s28 = scalar_select %p27, 0, %s26
      %s29 = sadd.s32 1, %s20
      %s30 = scalar_select %p27, %s29, %s20
      %p31 = scmp.ge.s32.totalorder %s30, 2
      %s32 = scalar_select %p31, 0, %s30
      %s33 = ssub.s32 %s20, %s32
      %p34 = scmp.eq.s32.totalorder %s33, 0
      %s36 = sadd.s32 %s35, 1
      %s37 = scalar_select %p34, %s35, %s36
      %p40 = pneg %p34
      %p41 = scmp.eq.s32.totalorder %s13, 3
      %p42 = por %p40, %p41
      %p43 = scmp.ne.s32.totalorder %s35, %s38
      %p44 = scmp.eq.s32.totalorder %s13, 0
      %p45 = por %p43, %p44
      %p46 = scmp.ne.s32.totalorder %s35, %s38
      %p47 = scmp.eq.s32.totalorder %s18, 3
      %p48 = por %p46, %p47
      %p49 = scmp.ne.s32.totalorder %s38, %s39
      %p50 = scmp.eq.s32.totalorder %s18, 0
      %p51 = por %p49, %p50
      %p52 = scmp.ne.s32.totalorder %s38, %s39
      %p53 = scmp.eq.s32.totalorder %s19, 3
      %p54 = por %p52, %p53
      %p56 = scmp.ne.s32.totalorder %s39, %s55
      %p57 = scmp.eq.s32.totalorder %s19, 0
      %p58 = por %p56, %p57
      %s60 = sadd.s32 %s59, 1
      %p63 = scmp.eq.s32.totalorder %s13, 3
      %p64 = scmp.ne.s32.totalorder %s59, %s61
      %p65 = scmp.eq.s32.totalorder %s13, 0
      %p66 = por %p64, %p65
      %p67 = scmp.ne.s32.totalorder %s59, %s61
      %p68 = scmp.eq.s32.totalorder %s18, 3
      %p69 = por %p67, %p68
      %p70 = scmp.ne.s32.totalorder %s61, %s62
      %p71 = scmp.eq.s32.totalorder %s18, 0
      %p72 = por %p70, %p71
      %p73 = scmp.ne.s32.totalorder %s61, %s62
      %p74 = scmp.eq.s32.totalorder %s19, 3
      %p75 = por %p73, %p74
      %p77 = scmp.ne.s32.totalorder %s62, %s76
      %p78 = scmp.eq.s32.totalorder %s19, 0
      %p79 = por %p77, %p78
      %s81 = sadd.s32 %s80, 1
      %p84 = scmp.eq.s32.totalorder %s13, 3
      %p85 = scmp.ne.s32.totalorder %s80, %s82
      %p86 = scmp.eq.s32.totalorder %s13, 0
      %p87 = por %p85, %p86
      %p88 = scmp.ne.s32.totalorder %s80, %s82
      %p89 = scmp.eq.s32.totalorder %s18, 3
      %p90 = por %p88, %p89
      %p91 = scmp.ne.s32.totalorder %s82, %s83
      %p92 = scmp.eq.s32.totalorder %s18, 0
      %p93 = por %p91, %p92
      %p94 = scmp.ne.s32.totalorder %s82, %s83
      %p95 = scmp.eq.s32.totalorder %s19, 3
      %p96 = por %p94, %p95
      %p98 = scmp.ne.s32.totalorder %s83, %s97
      %p99 = scmp.eq.s32.totalorder %s19, 0
      %p100 = por %p98, %p99
      %s102 = sadd.s32 %s101, 1
      %p105 = scmp.eq.s32.totalorder %s13, 3
      %p106 = scmp.ne.s32.totalorder %s101, %s103
      %p107 = scmp.eq.s32.totalorder %s13, 0
      %p108 = por %p106, %p107
      %p109 = scmp.ne.s32.totalorder %s101, %s103
      %p110 = scmp.eq.s32.totalorder %s18, 3
      %p111 = por %p109, %p110
      %p112 = scmp.ne.s32.totalorder %s103, %s104
      %p113 = scmp.eq.s32.totalorder %s18, 0
      %p114 = por %p112, %p113
      %p115 = scmp.ne.s32.totalorder %s103, %s104
      %p116 = scmp.eq.s32.totalorder %s19, 3
      %p117 = por %p115, %p116
      %p119 = scmp.ne.s32.totalorder %s104, %s118
      %p120 = scmp.eq.s32.totalorder %s19, 0
      %p121 = por %p119, %p120
      %s122 = ssub.s32 %s20, %s32
      %s123 = ssub.s32 %s21, %s28
      %s124 = sor.u32 %s122, %s123
      %p125 = scmp.eq.s32.totalorder %s124, 0
      %s127 = sadd.s32 %s126, 1
      %s128 = scalar_select %p125, %s126, %s127
      %p131 = pneg %p125
      %p132 = scmp.eq.s32.totalorder %s13, 3
      %p133 = por %p131, %p132
      %p134 = scmp.ne.s32.totalorder %s126, %s129
      %p135 = scmp.eq.s32.totalorder %s13, 0
      %p136 = por %p134, %p135
      %p137 = scmp.ne.s32.totalorder %s126, %s129
      %p138 = scmp.eq.s32.totalorder %s18, 3
      %p139 = por %p137, %p138
      %p140 = scmp.ne.s32.totalorder %s129, %s130
      %p141 = scmp.eq.s32.totalorder %s18, 0
      %p142 = por %p140, %p141
      %p143 = scmp.ne.s32.totalorder %s129, %s130
      %p144 = scmp.eq.s32.totalorder %s19, 3
      %p145 = por %p143, %p144
      %p147 = scmp.ne.s32.totalorder %s130, %s146
      %p148 = scmp.eq.s32.totalorder %s19, 0
      %p149 = por %p147, %p148
      %p150 = scmp.le.s32.totalorder 1, %s13
      %p151 = scmp.lt.s32.totalorder %s13, 5
      %p152 = pnand %p150, %p151
      %p153 = pneg %p152
      // Predicated region
      $region9: #{hdro_forward.1} parent=5 // pred_check
        _
      $region10: #{hdro_forward.1} parent=5 // pred_check_branch
        %155 = sbr.rel (%p152) target = $region12
      $region11: #{hdro_forward.1} parent=5 // pred_region
        %s156 = ssub.s32 %s13, 1
        // Predicated region
        $region13: #{hdro_forward.1} parent=11 // pred_check
          %p157 = pneg %p72
        $region14: #{hdro_forward.1} parent=11 // pred_check_branch
          %159 = sbr.rel (%p157) target = $region16
        $region15: #{hdro_forward.1} parent=11 // pred_region
          _
        $region16: #{hdro_forward.1} parent=11 // pred_fallthru
          _
        // Predicated region
        $region17: #{hdro_forward.1} parent=11 // pred_check
          %p160 = pneg %p93
        $region18: #{hdro_forward.1} parent=11 // pred_check_branch
          %162 = sbr.rel (%p160) target = $region20
        $region19: #{hdro_forward.1} parent=11 // pred_region
          _
        $region20: #{hdro_forward.1} parent=11 // pred_fallthru
          _
        // Predicated region
        $region21: #{hdro_forward.1} parent=11 // pred_check
          %p163 = pneg %p114
        $region22: #{hdro_forward.1} parent=11 // pred_check_branch
          %165 = sbr.rel (%p163) target = $region24
        $region23: #{hdro_forward.1} parent=11 // pred_region
          _
        $region24: #{hdro_forward.1} parent=11 // pred_fallthru
          _
      $region12: #{hdro_forward.1} parent=5 // pred_fallthru
        _
      %p166 = scmp.lt.s32.totalorder %s13, 4
      // Predicated region
      $region25: #{hdro_forward.1} parent=5 // pred_check
        %p167 = pneg %p166
      $region26: #{hdro_forward.1} parent=5 // pred_check_branch
        %169 = sbr.rel (%p167) target = $region28
      $region27: #{hdro_forward.1} parent=5 // pred_region
        // Predicated region
        $region29: #{hdro_forward.1} parent=27 // pred_check
          %p170 = pneg %p45
        $region30: #{hdro_forward.1} parent=27 // pred_check_branch
          %172 = sbr.rel (%p170) target = $region32
        $region31: #{hdro_forward.1} parent=27 // pred_region
          %p173 = scmp.lt.s32.totalorder %s20, 1
          %s174 = scalar_select %p173, %s20, 1
          %s175 = smul.addr %s174, 72
          %s176 = smul.addr %s175, 4
          %s177 = scalar_lea.vmem %s0, %s176
        $region32: #{hdro_forward.1} parent=27 // pred_fallthru
          _
      $region28: #{hdro_forward.1} parent=5 // pred_fallthru
        _
      %p178 = scmp.le.s32.totalorder 1, %s13
      %p179 = scmp.lt.s32.totalorder %s13, 5
      %p180 = pnand %p178, %p179
      %p181 = pneg %p180
      // Predicated region
      $region33: #{hdro_forward.1} parent=5 // pred_check
        _
      $region34: #{hdro_forward.1} parent=5 // pred_check_branch
        %183 = sbr.rel (%p180) target = $region36
      $region35: #{hdro_forward.1} parent=5 // pred_region
        %s184 = ssub.s32 %s13, 1
        %p185 = scmp.lt.s32.totalorder %s22, 1
        %s186 = scalar_select %p185, %s22, 1
        %s187 = smul.addr %s186, 72
        %s188 = smul.addr %s187, 4
        %s189 = scalar_lea.vmem %s0, %s188
        %p190 = pneg %p51
        %p191 = pneg %p48
        %p192 = pneg %p72
        %p193 = pneg %p69
        %p194 = pneg %p93
        %p195 = pneg %p90
        %p196 = pneg %p114
        %p197 = pneg %p111
        %p198 = pneg %p142
        %p199 = pneg %p139
        %s200 = sand.u32 %s129, 1
        %s201 = scalar_lea.sflag [#allocation4], %s200
        %s202 = sand.u32 %s129, 1
        %s203 = smul.addr %s202, 8
        %s204 = scalar_lea.vmem [#allocation3], %s203
        %p205 = scmp.lt.s32.totalorder %s22, 1
        %s206 = scalar_select %p205, %s22, 1
        %s207 = smul.addr %s206, 72
        %s208 = smul.addr %s207, 4
        %s209 = scalar_lea.vmem %s0, %s208
        %s211 = smul.u32 %s23, 8
        %vm212 = vcmask 146432
        %213 = vst.msk [vmem:[#allocation2] sm:$0xff] %vm212, 0.0
        %vm214 = vcmask 140288
        %215 = vst.msk [vmem:[#allocation2 + $0x8] sm:$0x3] %vm214, 0.0
        %216 = vst.msk [vmem:[#allocation2 + $0x10] sm:$0xff] %vm212, 0.0
        %217 = vst.msk [vmem:[#allocation2 + $0x18] sm:$0x3] %vm214, 0.0
        %218 = vst.msk [vmem:[#allocation2 + $0x20] sm:$0xff] %vm212, 0.0
        %219 = vst.msk [vmem:[#allocation2 + $0x28] sm:$0x3] %vm214, 0.0
        loop: start=0, step=1, limit=10
        $region37: #{hdro_forward.1} parent=35 // loop_pre_header
          _
        $region38: #{hdro_forward.1} parent=35 // loop_header
          %s221 = sphi 0, %s225
          %p222 = scmp.ge.s32.totalorder %s221, 10
        $region39: #{hdro_forward.1} parent=35 // loop_header_branch
          %224 = sbr.rel (%p222) target = $region43
        $region40: #{hdro_forward.1} parent=35 // loop_body
          %s226 = ssub.s32 %s211, 1
          %s227 = sadd.s32 %s226, %s221
          %p228 = scmp.ge.s32.totalorder %s227, 0
          %p229 = scmp.lt.s32.totalorder %s227, 16
          %p230 = pnand %p228, %p229
          %p231 = pneg %p230
          // Predicated region
          $region44: #{hdro_forward.1} parent=40 // pred_check
            _
          $region45: #{hdro_forward.1} parent=40 // pred_check_branch
            %233 = sbr.rel (%p230) target = $region47
          $region46: #{hdro_forward.1} parent=40 // pred_region
            %s234 = sadd.s32 %s227, 3
            %s235 = smul.u32 %s234, 3
            %s236 = smul.addr %s235, 4
            %s237 = scalar_lea.vmem %s209, %s236
            %v238 = vld [vmem:[%s237] sm:$0xe]
            %v239 = vld [vmem:[%s237 + $0x4] sm:$0xf]
            %v240 = vld [vmem:[%s237 + $0x8] sm:$0x3]
            %v241 = vld [vmem:[%s1] sm:$0xf]
            %v242 = vld [vmem:[%s1 + $0x4] sm:$0xf]
            %v243 = vld [vmem:[%s1 + $0x8] sm:$0xf]
            %v244 = vld [vmem:[%s1 + $0xc] sm:$0xf]
            %v245 = vld [vmem:[%s1 + $0x10] sm:$0xf]
            %v246 = vld [vmem:[%s1 + $0x14] sm:$0xf]
            %v247 = vld [vmem:[%s1 + $0x18] sm:$0xf]
            %v248 = vld [vmem:[%s1 + $0x1c] sm:$0xf]
            %v249 = vld [vmem:[%s237] sm:$0xc]
            %s250 = scalar_lea.vmem %s1, 32
            %v251 = vld [vmem:[%s250] sm:$0xf]
            %v252 = vld [vmem:[%s250 + $0x4] sm:$0xf]
            %v253 = vld [vmem:[%s250 + $0x8] sm:$0xf]
            %v254 = vld [vmem:[%s250 + $0xc] sm:$0xf]
            %v255 = vld [vmem:[%s250 + $0x10] sm:$0xf]
            %v256 = vld [vmem:[%s250 + $0x14] sm:$0xf]
            %v257 = vld [vmem:[%s250 + $0x18] sm:$0xf]
            %v258 = vld [vmem:[%s250 + $0x1c] sm:$0xf]
            %v262 = vunpack.c.l.b16 %v249
            %v263 = vunpack.c.l.b16 %v239
            %v264 = vunpack.c.l.b16 %v240
            %v265 = vpack.c.b16 %v263, %v262
            %v266 = vpack.c.b16 %v264, %v264
            %vm267 = vcmask 1045504
            %v268 = vrot.slane %v265, 2
            %v269 = vrot.slane %v266, 2
            %v270 = vsel %vm267, %v268, %v269
            %v279 = vunpack.c.l.b16 %v251
            %v280 = vunpack.c.l.b16 %v252
            %v281 = vunpack.c.l.b16 %v253
            %v282 = vunpack.c.l.b16 %v254
            %v283 = vunpack.c.l.b16 %v255
            %v284 = vunpack.c.l.b16 %v256
            %v285 = vunpack.c.l.b16 %v257
            %v286 = vunpack.c.l.b16 %v258
            %v287 = vpack.c.b16 %v280, %v279
            %v288 = vpack.c.b16 %v282, %v281
            %v289 = vpack.c.b16 %v284, %v283
            %v290 = vpack.c.b16 %v286, %v285
            %vm295 = vcmask 523264
            %v297 = vsel %vm295, %v270, 0
            %299 = vmatprep.subr.bf16.mxu0 0
            %300 = vmatpush1.bf16.msra.mxu0 0
            %301 = vmatprep.subr.bf16.mxu0 0
            %302 = vmatpush1.bf16.msra.mxu0 0
            %303 = vmatprep.subr.bf16.mxu0 0
            %304 = vmatpush1.bf16.msra.mxu0 0
            %305 = vmatprep.subr.bf16.mxu0 0
            %306 = vmatpush1.bf16.msra.mxu0 0
            %307 = vmatprep.subr.bf16.mxu0 0
            %308 = vmatpush1.bf16.msra.mxu0 %v290
            %309 = vmatprep.subr.bf16.mxu0 0
            %310 = vmatpush1.bf16.msra.mxu0 %v289
            %311 = vmatprep.subr.bf16.mxu0 0
            %312 = vmatpush1.bf16.msra.mxu0 %v288
            %313 = vmatprep.subr.bf16.mxu0 0
            %314 = vmatpush1.bf16.msra.mxu0 %v287
            %315 = vmatprep.subr.bf16.mxu0 0
            %316 = vmatpush2.bf16.msra.mxu0 0
            %317 = vmatprep.subr.bf16.mxu0 0
            %318 = vmatpush2.bf16.msra.mxu0 0
            %319 = vmatprep.subr.bf16.mxu0 0
            %320 = vmatpush2.bf16.msra.mxu0 0
            %321 = vmatprep.subr.bf16.mxu0 0
            %322 = vmatpush2.bf16.msra.mxu0 0
            %323 = vmatprep.subr.bf16.mxu0 0
            %324 = vmatpush2.bf16.msra.mxu0 0
            %325 = vmatprep.subr.bf16.mxu0 0
            %326 = vmatpush2.bf16.msra.mxu0 0
            %327 = vmatprep.subr.bf16.mxu0 0
            %328 = vmatpush2.bf16.msra.mxu0 0
            %329 = vmatprep.subr.bf16.mxu0 0
            %330 = vmatpush2.bf16.msra.mxu0 0
            %331 = vmatprep.mubr.bf16.mxu0 0
            %332 = vmatmul.mubr.bf16.gmra.mxu0 %v297
            %v333 = vpop.f32.mrf.mxu0
            %v334 = vadd.f32 0.0, %v333
            %v335 = vpop.f32.mrf.mxu0
            %v336 = vpop.f32.mrf.mxu0
            %v337 = vadd.f32 0.0, %v336
            %v338 = vpop.f32.mrf.mxu0
            %339 = vdwg.mxu0
            %v341 = vunpack.c.l.b16 %v238
            %v342 = vpack.c.b16 %v263, %v341
            %vm343 = vsmask.f32 6400
            %v345 = vshrl.u32 %v342, 16
            %v347 = vrot.slane %v345, 1
            %v348 = vshll.u32 %v342, 16
            %v350 = vrot.slane %v348, 2
            %v351 = vor.u32 %v347, %v350
            %v353 = vshrl.u32 %v266, 16
            %v355 = vrot.slane %v353, 1
            %v356 = vshll.u32 %v266, 16
            %v358 = vrot.slane %v356, 2
            %v359 = vor.u32 %v355, %v358
            %v360 = vsel %vm343, %v351, %v359
            %v369 = vunpack.c.l.b16 %v241
            %v370 = vunpack.c.l.b16 %v242
            %v371 = vunpack.c.l.b16 %v243
            %v372 = vunpack.c.l.b16 %v244
            %v373 = vunpack.c.l.b16 %v245
            %v374 = vunpack.c.l.b16 %v246
            %v375 = vunpack.c.l.b16 %v247
            %v376 = vunpack.c.l.b16 %v248
            %v377 = vpack.c.b16 %v370, %v369
            %v378 = vpack.c.b16 %v372, %v371
            %v379 = vpack.c.b16 %v374, %v373
            %v380 = vpack.c.b16 %v376, %v375
            %v386 = vsel %vm295, %v360, 0
            %388 = vmatprep.subr.bf16.mxu0 0
            %389 = vmatpush1.bf16.msra.mxu0 0
            %390 = vmatprep.subr.bf16.mxu0 0
            %391 = vmatpush1.bf16.msra.mxu0 0
            %392 = vmatprep.subr.bf16.mxu0 0
            %393 = vmatpush1.bf16.msra.mxu0 0
            %394 = vmatprep.subr.bf16.mxu0 0
            %395 = vmatpush1.bf16.msra.mxu0 0
            %396 = vmatprep.subr.bf16.mxu0 0
            %397 = vmatpush1.bf16.msra.mxu0 %v380
            %398 = vmatprep.subr.bf16.mxu0 0
            %399 = vmatpush1.bf16.msra.mxu0 %v379
            %400 = vmatprep.subr.bf16.mxu0 0
            %401 = vmatpush1.bf16.msra.mxu0 %v378
            %402 = vmatprep.subr.bf16.mxu0 0
            %403 = vmatpush1.bf16.msra.mxu0 %v377
            %404 = vmatprep.subr.bf16.mxu0 0
            %405 = vmatpush2.bf16.msra.mxu0 0
            %406 = vmatprep.subr.bf16.mxu0 0
            %407 = vmatpush2.bf16.msra.mxu0 0
            %408 = vmatprep.subr.bf16.mxu0 0
            %409 = vmatpush2.bf16.msra.mxu0 0
            %410 = vmatprep.subr.bf16.mxu0 0
            %411 = vmatpush2.bf16.msra.mxu0 0
            %412 = vmatprep.subr.bf16.mxu0 0
            %413 = vmatpush2.bf16.msra.mxu0 0
            %414 = vmatprep.subr.bf16.mxu0 0
            %415 = vmatpush2.bf16.msra.mxu0 0
            %416 = vmatprep.subr.bf16.mxu0 0
            %417 = vmatpush2.bf16.msra.mxu0 0
            %418 = vmatprep.subr.bf16.mxu0 0
            %419 = vmatpush2.bf16.msra.mxu0 0
            %420 = vmatprep.mubr.bf16.mxu0 0
            %421 = vmatmul.mubr.bf16.gmra.mxu0 %v386
            %v422 = vpop.f32.mrf.mxu0
            %v423 = vadd.f32 %v334, %v422
            %v424 = vpop.f32.mrf.mxu0
            %v425 = vpop.f32.mrf.mxu0
            %v426 = vadd.f32 %v337, %v425
            %v427 = vpop.f32.mrf.mxu0
            %428 = vdwg.mxu0
            %v429 = vld [vmem:[%s237 + $0x8] sm:$0x7]
            %s430 = scalar_lea.vmem %s1, 64
            %v431 = vld [vmem:[%s430] sm:$0xf]
            %v432 = vld [vmem:[%s430 + $0x4] sm:$0xf]
            %v433 = vld [vmem:[%s430 + $0x8] sm:$0xf]
            %v434 = vld [vmem:[%s430 + $0xc] sm:$0xf]
            %v435 = vld [vmem:[%s430 + $0x10] sm:$0xf]
            %v436 = vld [vmem:[%s430 + $0x14] sm:$0xf]
            %v437 = vld [vmem:[%s430 + $0x18] sm:$0xf]
            %v438 = vld [vmem:[%s430 + $0x1c] sm:$0xf]
            %v440 = vunpack.c.l.b16 %v429
            %v441 = vpack.c.b16 %v440, %v440
            %vm442 = vsmask.f32 5376
            %v444 = vshrl.u32 %v265, 16
            %v446 = vrot.slane %v444, 2
            %v447 = vshll.u32 %v265, 16
            %v449 = vrot.slane %v447, 3
            %v450 = vor.u32 %v446, %v449
            %v452 = vshrl.u32 %v441, 16
            %v454 = vrot.slane %v452, 2
            %v455 = vshll.u32 %v441, 16
            %v457 = vrot.slane %v455, 3
            %v458 = vor.u32 %v454, %v457
            %v459 = vsel %vm442, %v450, %v458
            %v468 = vunpack.c.l.b16 %v431
            %v469 = vunpack.c.l.b16 %v432
            %v470 = vunpack.c.l.b16 %v433
            %v471 = vunpack.c.l.b16 %v434
            %v472 = vunpack.c.l.b16 %v435
            %v473 = vunpack.c.l.b16 %v436
            %v474 = vunpack.c.l.b16 %v437
            %v475 = vunpack.c.l.b16 %v438
            %v476 = vpack.c.b16 %v469, %v468
            %v477 = vpack.c.b16 %v471, %v470
            %v478 = vpack.c.b16 %v473, %v472
            %v479 = vpack.c.b16 %v475, %v474
            %v485 = vsel %vm295, %v459, 0
            %487 = vmatprep.subr.bf16.mxu0 0
            %488 = vmatpush1.bf16.msra.mxu0 0
            %489 = vmatprep.subr.bf16.mxu0 0
            %490 = vmatpush1.bf16.msra.mxu0 0
            %491 = vmatprep.subr.bf16.mxu0 0
            %492 = vmatpush1.bf16.msra.mxu0 0
            %493 = vmatprep.subr.bf16.mxu0 0
            %494 = vmatpush1.bf16.msra.mxu0 0
            %495 = vmatprep.subr.bf16.mxu0 0
            %496 = vmatpush1.bf16.msra.mxu0 %v479
            %497 = vmatprep.subr.bf16.mxu0 0
            %498 = vmatpush1.bf16.msra.mxu0 %v478
            %499 = vmatprep.subr.bf16.mxu0 0
            %500 = vmatpush1.bf16.msra.mxu0 %v477
            %501 = vmatprep.subr.bf16.mxu0 0
            %502 = vmatpush1.bf16.msra.mxu0 %v476
            %503 = vmatprep.subr.bf16.mxu0 0
            %504 = vmatpush2.bf16.msra.mxu0 0
            %505 = vmatprep.subr.bf16.mxu0 0
            %506 = vmatpush2.bf16.msra.mxu0 0
            %507 = vmatprep.subr.bf16.mxu0 0
            %508 = vmatpush2.bf16.msra.mxu0 0
            %509 = vmatprep.subr.bf16.mxu0 0
            %510 = vmatpush2.bf16.msra.mxu0 0
            %511 = vmatprep.subr.bf16.mxu0 0
            %512 = vmatpush2.bf16.msra.mxu0 0
            %513 = vmatprep.subr.bf16.mxu0 0
            %514 = vmatpush2.bf16.msra.mxu0 0
            %515 = vmatprep.subr.bf16.mxu0 0
            %516 = vmatpush2.bf16.msra.mxu0 0
            %517 = vmatprep.subr.bf16.mxu0 0
            %518 = vmatpush2.bf16.msra.mxu0 0
            %519 = vmatprep.mubr.bf16.mxu0 0
            %520 = vmatmul.mubr.bf16.gmra.mxu0 %v485
            %v521 = vpop.f32.mrf.mxu0
            %v522 = vadd.f32 0.0, %v521
            %v523 = vpop.f32.mrf.mxu0
            %v524 = vpop.f32.mrf.mxu0
            %v525 = vadd.f32 0.0, %v524
            %v526 = vpop.f32.mrf.mxu0
            %527 = vdwg.mxu0
            %v528 = vadd.f32 %v423, %v522
            %v529 = vadd.f32 %v426, %v525
            %s530 = sadd.s32 %s227, 4
            %s531 = smul.u32 %s530, 3
            %s532 = smul.addr %s531, 4
            %s533 = scalar_lea.vmem %s209, %s532
            %v534 = vld [vmem:[%s533] sm:$0xe]
            %v535 = vld [vmem:[%s533 + $0x4] sm:$0xf]
            %v536 = vld [vmem:[%s533 + $0x8] sm:$0x3]
            %s537 = scalar_lea.vmem %s1, 96
            %v538 = vld [vmem:[%s537] sm:$0xf]
            %v539 = vld [vmem:[%s537 + $0x4] sm:$0xf]
            %v540 = vld [vmem:[%s537 + $0x8] sm:$0xf]
            %v541 = vld [vmem:[%s537 + $0xc] sm:$0xf]
            %v542 = vld [vmem:[%s537 + $0x10] sm:$0xf]
            %v543 = vld [vmem:[%s537 + $0x14] sm:$0xf]
            %v544 = vld [vmem:[%s537 + $0x18] sm:$0xf]
            %v545 = vld [vmem:[%s537 + $0x1c] sm:$0xf]
            %v549 = vunpack.c.l.b16 %v534
            %v550 = vunpack.c.l.b16 %v535
            %v551 = vunpack.c.l.b16 %v536
            %v552 = vpack.c.b16 %v550, %v549
            %v553 = vpack.c.b16 %v551, %v551
            %v555 = vshrl.u32 %v552, 16
            %v557 = vrot.slane %v555, 1
            %v558 = vshll.u32 %v552, 16
            %v560 = vrot.slane %v558, 2
            %v561 = vor.u32 %v557, %v560
            %v563 = vshrl.u32 %v553, 16
            %v565 = vrot.slane %v563, 1
            %v566 = vshll.u32 %v553, 16
            %v568 = vrot.slane %v566, 2
            %v569 = vor.u32 %v565, %v568
            %v570 = vsel %vm343, %v561, %v569
            %v579 = vunpack.c.l.b16 %v538
            %v580 = vunpack.c.l.b16 %v539
            %v581 = vunpack.c.l.b16 %v540
            %v582 = vunpack.c.l.b16 %v541
            %v583 = vunpack.c.l.b16 %v542
            %v584 = vunpack.c.l.b16 %v543
            %v585 = vunpack.c.l.b16 %v544
            %v586 = vunpack.c.l.b16 %v545
            %v587 = vpack.c.b16 %v580, %v579
            %v588 = vpack.c.b16 %v582, %v581
            %v589 = vpack.c.b16 %v584, %v583
            %v590 = vpack.c.b16 %v586, %v585
            %v596 = vsel %vm295, %v570, 0
            %598 = vmatprep.subr.bf16.mxu0 0
            %599 = vmatpush1.bf16.msra.mxu0 0
            %600 = vmatprep.subr.bf16.mxu0 0
            %601 = vmatpush1.bf16.msra.mxu0 0
            %602 = vmatprep.subr.bf16.mxu0 0
            %603 = vmatpush1.bf16.msra.mxu0 0
            %604 = vmatprep.subr.bf16.mxu0 0
            %605 = vmatpush1.bf16.msra.mxu0 0
            %606 = vmatprep.subr.bf16.mxu0 0
            %607 = vmatpush1.bf16.msra.mxu0 %v590
            %608 = vmatprep.subr.bf16.mxu0 0
            %609 = vmatpush1.bf16.msra.mxu0 %v589
            %610 = vmatprep.subr.bf16.mxu0 0
            %611 = vmatpush1.bf16.msra.mxu0 %v588
            %612 = vmatprep.subr.bf16.mxu0 0
            %613 = vmatpush1.bf16.msra.mxu0 %v587
            %614 = vmatprep.subr.bf16.mxu0 0
            %615 = vmatpush2.bf16.msra.mxu0 0
            %616 = vmatprep.subr.bf16.mxu0 0
            %617 = vmatpush2.bf16.msra.mxu0 0
            %618 = vmatprep.subr.bf16.mxu0 0
            %619 = vmatpush2.bf16.msra.mxu0 0
            %620 = vmatprep.subr.bf16.mxu0 0
            %621 = vmatpush2.bf16.msra.mxu0 0
            %622 = vmatprep.subr.bf16.mxu0 0
            %623 = vmatpush2.bf16.msra.mxu0 0
            %624 = vmatprep.subr.bf16.mxu0 0
            %625 = vmatpush2.bf16.msra.mxu0 0
            %626 = vmatprep.subr.bf16.mxu0 0
            %627 = vmatpush2.bf16.msra.mxu0 0
            %628 = vmatprep.subr.bf16.mxu0 0
            %629 = vmatpush2.bf16.msra.mxu0 0
            %630 = vmatprep.mubr.bf16.mxu0 0
            %631 = vmatmul.mubr.bf16.gmra.mxu0 %v596
            %v632 = vpop.f32.mrf.mxu0
            %v633 = vadd.f32 0.0, %v632
            %v634 = vpop.f32.mrf.mxu0
            %v635 = vpop.f32.mrf.mxu0
            %v636 = vadd.f32 0.0, %v635
            %v637 = vpop.f32.mrf.mxu0
            %638 = vdwg.mxu0
            %v639 = vadd.f32 %v528, %v633
            %v640 = vadd.f32 %v529, %v636
            %v641 = vld [vmem:[%s533] sm:$0xc]
            %s642 = scalar_lea.vmem %s1, 128
            %v643 = vld [vmem:[%s642] sm:$0xf]
            %v644 = vld [vmem:[%s642 + $0x4] sm:$0xf]
            %v645 = vld [vmem:[%s642 + $0x8] sm:$0xf]
            %v646 = vld [vmem:[%s642 + $0xc] sm:$0xf]
            %v647 = vld [vmem:[%s642 + $0x10] sm:$0xf]
            %v648 = vld [vmem:[%s642 + $0x14] sm:$0xf]
            %v649 = vld [vmem:[%s642 + $0x18] sm:$0xf]
            %v650 = vld [vmem:[%s642 + $0x1c] sm:$0xf]
            %v652 = vunpack.c.l.b16 %v641
            %v653 = vpack.c.b16 %v550, %v652
            %v654 = vrot.slane %v653, 2
            %v655 = vrot.slane %v553, 2
            %v656 = vsel %vm267, %v654, %v655
            %v665 = vunpack.c.l.b16 %v643
            %v666 = vunpack.c.l.b16 %v644
            %v667 = vunpack.c.l.b16 %v645
            %v668 = vunpack.c.l.b16 %v646
            %v669 = vunpack.c.l.b16 %v647
            %v670 = vunpack.c.l.b16 %v648
            %v671 = vunpack.c.l.b16 %v649
            %v672 = vunpack.c.l.b16 %v650
            %v673 = vpack.c.b16 %v666, %v665
            %v674 = vpack.c.b16 %v668, %v667
            %v675 = vpack.c.b16 %v670, %v669
            %v676 = vpack.c.b16 %v672, %v671
            %v682 = vsel %vm295, %v656, 0
            %684 = vmatprep.subr.bf16.mxu0 0
            %685 = vmatpush1.bf16.msra.mxu0 0
            %686 = vmatprep.subr.bf16.mxu0 0
            %687 = vmatpush1.bf16.msra.mxu0 0
            %688 = vmatprep.subr.bf16.mxu0 0
            %689 = vmatpush1.bf16.msra.mxu0 0
            %690 = vmatprep.subr.bf16.mxu0 0
            %691 = vmatpush1.bf16.msra.mxu0 0
            %692 = vmatprep.subr.bf16.mxu0 0
            %693 = vmatpush1.bf16.msra.mxu0 %v676
            %694 = vmatprep.subr.bf16.mxu0 0
            %695 = vmatpush1.bf16.msra.mxu0 %v675
            %696 = vmatprep.subr.bf16.mxu0 0
            %697 = vmatpush1.bf16.msra.mxu0 %v674
            %698 = vmatprep.subr.bf16.mxu0 0
            %699 = vmatpush1.bf16.msra.mxu0 %v673
            %700 = vmatprep.subr.bf16.mxu0 0
            %701 = vmatpush2.bf16.msra.mxu0 0
            %702 = vmatprep.subr.bf16.mxu0 0
            %703 = vmatpush2.bf16.msra.mxu0 0
            %704 = vmatprep.subr.bf16.mxu0 0
            %705 = vmatpush2.bf16.msra.mxu0 0
            %706 = vmatprep.subr.bf16.mxu0 0
            %707 = vmatpush2.bf16.msra.mxu0 0
            %708 = vmatprep.subr.bf16.mxu0 0
            %709 = vmatpush2.bf16.msra.mxu0 0
            %710 = vmatprep.subr.bf16.mxu0 0
            %711 = vmatpush2.bf16.msra.mxu0 0
            %712 = vmatprep.subr.bf16.mxu0 0
            %713 = vmatpush2.bf16.msra.mxu0 0
            %714 = vmatprep.subr.bf16.mxu0 0
            %715 = vmatpush2.bf16.msra.mxu0 0
            %716 = vmatprep.mubr.bf16.mxu0 0
            %717 = vmatmul.mubr.bf16.gmra.mxu0 %v682
            %v718 = vpop.f32.mrf.mxu0
            %v719 = vadd.f32 0.0, %v718
            %v720 = vpop.f32.mrf.mxu0
            %v721 = vpop.f32.mrf.mxu0
            %v722 = vadd.f32 0.0, %v721
            %v723 = vpop.f32.mrf.mxu0
            %724 = vdwg.mxu0
            %v725 = vadd.f32 %v639, %v719
            %v726 = vadd.f32 %v640, %v722
            %v727 = vld [vmem:[%s533 + $0x8] sm:$0x7]
            %s728 = scalar_lea.vmem %s1, 160
            %v729 = vld [vmem:[%s728] sm:$0xf]
            %v730 = vld [vmem:[%s728 + $0x4] sm:$0xf]
            %v731 = vld [vmem:[%s728 + $0x8] sm:$0xf]
            %v732 = vld [vmem:[%s728 + $0xc] sm:$0xf]
            %v733 = vld [vmem:[%s728 + $0x10] sm:$0xf]
            %v734 = vld [vmem:[%s728 + $0x14] sm:$0xf]
            %v735 = vld [vmem:[%s728 + $0x18] sm:$0xf]
            %v736 = vld [vmem:[%s728 + $0x1c] sm:$0xf]
            %v738 = vunpack.c.l.b16 %v727
            %v739 = vpack.c.b16 %v738, %v738
            %v741 = vshrl.u32 %v653, 16
            %v743 = vrot.slane %v741, 2
            %v744 = vshll.u32 %v653, 16
            %v746 = vrot.slane %v744, 3
            %v747 = vor.u32 %v743, %v746
            %v749 = vshrl.u32 %v739, 16
            %v751 = vrot.slane %v749, 2
            %v752 = vshll.u32 %v739, 16
            %v754 = vrot.slane %v752, 3
            %v755 = vor.u32 %v751, %v754
            %v756 = vsel %vm442, %v747, %v755
            %v765 = vunpack.c.l.b16 %v729
            %v766 = vunpack.c.l.b16 %v730
            %v767 = vunpack.c.l.b16 %v731
            %v768 = vunpack.c.l.b16 %v732
            %v769 = vunpack.c.l.b16 %v733
            %v770 = vunpack.c.l.b16 %v734
            %v771 = vunpack.c.l.b16 %v735
            %v772 = vunpack.c.l.b16 %v736
            %v773 = vpack.c.b16 %v766, %v765
            %v774 = vpack.c.b16 %v768, %v767
            %v775 = vpack.c.b16 %v770, %v769
            %v776 = vpack.c.b16 %v772, %v771
            %v782 = vsel %vm295, %v756, 0
            %784 = vmatprep.subr.bf16.mxu0 0
            %785 = vmatpush1.bf16.msra.mxu0 0
            %786 = vmatprep.subr.bf16.mxu0 0
            %787 = vmatpush1.bf16.msra.mxu0 0
            %788 = vmatprep.subr.bf16.mxu0 0
            %789 = vmatpush1.bf16.msra.mxu0 0
            %790 = vmatprep.subr.bf16.mxu0 0
            %791 = vmatpush1.bf16.msra.mxu0 0
            %792 = vmatprep.subr.bf16.mxu0 0
            %793 = vmatpush1.bf16.msra.mxu0 %v776
            %794 = vmatprep.subr.bf16.mxu0 0
            %795 = vmatpush1.bf16.msra.mxu0 %v775
            %796 = vmatprep.subr.bf16.mxu0 0
            %797 = vmatpush1.bf16.msra.mxu0 %v774
            %798 = vmatprep.subr.bf16.mxu0 0
            %799 = vmatpush1.bf16.msra.mxu0 %v773
            %800 = vmatprep.subr.bf16.mxu0 0
            %801 = vmatpush2.bf16.msra.mxu0 0
            %802 = vmatprep.subr.bf16.mxu0 0
            %803 = vmatpush2.bf16.msra.mxu0 0
            %804 = vmatprep.subr.bf16.mxu0 0
            %805 = vmatpush2.bf16.msra.mxu0 0
            %806 = vmatprep.subr.bf16.mxu0 0
            %807 = vmatpush2.bf16.msra.mxu0 0
            %808 = vmatprep.subr.bf16.mxu0 0
            %809 = vmatpush2.bf16.msra.mxu0 0
            %810 = vmatprep.subr.bf16.mxu0 0
            %811 = vmatpush2.bf16.msra.mxu0 0
            %812 = vmatprep.subr.bf16.mxu0 0
            %813 = vmatpush2.bf16.msra.mxu0 0
            %814 = vmatprep.subr.bf16.mxu0 0
            %815 = vmatpush2.bf16.msra.mxu0 0
            %816 = vmatprep.mubr.bf16.mxu0 0
            %817 = vmatmul.mubr.bf16.gmra.mxu0 %v782
            %v818 = vpop.f32.mrf.mxu0
            %v819 = vadd.f32 0.0, %v818
            %v820 = vpop.f32.mrf.mxu0
            %v821 = vpop.f32.mrf.mxu0
            %v822 = vadd.f32 0.0, %v821
            %v823 = vpop.f32.mrf.mxu0
            %824 = vdwg.mxu0
            %v825 = vadd.f32 %v725, %v819
            %v826 = vadd.f32 %v726, %v822
            %s827 = sadd.s32 %s227, 5
            %s828 = smul.u32 %s827, 3
            %s829 = smul.addr %s828, 4
            %s830 = scalar_lea.vmem %s209, %s829
            %v831 = vld [vmem:[%s830] sm:$0xe]
            %v832 = vld [vmem:[%s830 + $0x4] sm:$0xf]
            %v833 = vld [vmem:[%s830 + $0x8] sm:$0x3]
            %s834 = scalar_lea.vmem %s1, 192
            %v835 = vld [vmem:[%s834] sm:$0xf]
            %v836 = vld [vmem:[%s834 + $0x4] sm:$0xf]
            %v837 = vld [vmem:[%s834 + $0x8] sm:$0xf]
            %v838 = vld [vmem:[%s834 + $0xc] sm:$0xf]
            %v839 = vld [vmem:[%s834 + $0x10] sm:$0xf]
            %v840 = vld [vmem:[%s834 + $0x14] sm:$0xf]
            %v841 = vld [vmem:[%s834 + $0x18] sm:$0xf]
            %v842 = vld [vmem:[%s834 + $0x1c] sm:$0xf]
            %v846 = vunpack.c.l.b16 %v831
            %v847 = vunpack.c.l.b16 %v832
            %v848 = vunpack.c.l.b16 %v833
            %v849 = vpack.c.b16 %v847, %v846
            %v850 = vpack.c.b16 %v848, %v848
            %v852 = vshrl.u32 %v849, 16
            %v854 = vrot.slane %v852, 1
            %v855 = vshll.u32 %v849, 16
            %v857 = vrot.slane %v855, 2
            %v858 = vor.u32 %v854, %v857
            %v860 = vshrl.u32 %v850, 16
            %v862 = vrot.slane %v860, 1
            %v863 = vshll.u32 %v850, 16
            %v865 = vrot.slane %v863, 2
            %v866 = vor.u32 %v862, %v865
            %v867 = vsel %vm343, %v858, %v866
            %v876 = vunpack.c.l.b16 %v835
            %v877 = vunpack.c.l.b16 %v836
            %v878 = vunpack.c.l.b16 %v837
            %v879 = vunpack.c.l.b16 %v838
            %v880 = vunpack.c.l.b16 %v839
            %v881 = vunpack.c.l.b16 %v840
            %v882 = vunpack.c.l.b16 %v841
            %v883 = vunpack.c.l.b16 %v842
            %v884 = vpack.c.b16 %v877, %v876
            %v885 = vpack.c.b16 %v879, %v878
            %v886 = vpack.c.b16 %v881, %v880
            %v887 = vpack.c.b16 %v883, %v882
            %v893 = vsel %vm295, %v867, 0
            %895 = vmatprep.subr.bf16.mxu0 0
            %896 = vmatpush1.bf16.msra.mxu0 0
            %897 = vmatprep.subr.bf16.mxu0 0
            %898 = vmatpush1.bf16.msra.mxu0 0
            %899 = vmatprep.subr.bf16.mxu0 0
            %900 = vmatpush1.bf16.msra.mxu0 0
            %901 = vmatprep.subr.bf16.mxu0 0
            %902 = vmatpush1.bf16.msra.mxu0 0
            %903 = vmatprep.subr.bf16.mxu0 0
            %904 = vmatpush1.bf16.msra.mxu0 %v887
            %905 = vmatprep.subr.bf16.mxu0 0
            %906 = vmatpush1.bf16.msra.mxu0 %v886
            %907 = vmatprep.subr.bf16.mxu0 0
            %908 = vmatpush1.bf16.msra.mxu0 %v885
            %909 = vmatprep.subr.bf16.mxu0 0
            %910 = vmatpush1.bf16.msra.mxu0 %v884
            %911 = vmatprep.subr.bf16.mxu0 0
            %912 = vmatpush2.bf16.msra.mxu0 0
            %913 = vmatprep.subr.bf16.mxu0 0
            %914 = vmatpush2.bf16.msra.mxu0 0
            %915 = vmatprep.subr.bf16.mxu0 0
            %916 = vmatpush2.bf16.msra.mxu0 0
            %917 = vmatprep.subr.bf16.mxu0 0
            %918 = vmatpush2.bf16.msra.mxu0 0
            %919 = vmatprep.subr.bf16.mxu0 0
            %920 = vmatpush2.bf16.msra.mxu0 0
            %921 = vmatprep.subr.bf16.mxu0 0
            %922 = vmatpush2.bf16.msra.mxu0 0
            %923 = vmatprep.subr.bf16.mxu0 0
            %924 = vmatpush2.bf16.msra.mxu0 0
            %925 = vmatprep.subr.bf16.mxu0 0
            %926 = vmatpush2.bf16.msra.mxu0 0
            %927 = vmatprep.mubr.bf16.mxu0 0
            %928 = vmatmul.mubr.bf16.gmra.mxu0 %v893
            %v929 = vpop.f32.mrf.mxu0
            %v930 = vadd.f32 0.0, %v929
            %v931 = vpop.f32.mrf.mxu0
            %v932 = vpop.f32.mrf.mxu0
            %v933 = vadd.f32 0.0, %v932
            %v934 = vpop.f32.mrf.mxu0
            %935 = vdwg.mxu0
            %v936 = vadd.f32 %v825, %v930
            %v937 = vadd.f32 %v826, %v933
            %v938 = vld [vmem:[%s830] sm:$0xc]
            %s939 = scalar_lea.vmem %s1, 224
            %v940 = vld [vmem:[%s939] sm:$0xf]
            %v941 = vld [vmem:[%s939 + $0x4] sm:$0xf]
            %v942 = vld [vmem:[%s939 + $0x8] sm:$0xf]
            %v943 = vld [vmem:[%s939 + $0xc] sm:$0xf]
            %v944 = vld [vmem:[%s939 + $0x10] sm:$0xf]
            %v945 = vld [vmem:[%s939 + $0x14] sm:$0xf]
            %v946 = vld [vmem:[%s939 + $0x18] sm:$0xf]
            %v947 = vld [vmem:[%s939 + $0x1c] sm:$0xf]
            %v949 = vunpack.c.l.b16 %v938
            %v950 = vpack.c.b16 %v847, %v949
            %v951 = vrot.slane %v950, 2
            %v952 = vrot.slane %v850, 2
            %v953 = vsel %vm267, %v951, %v952
            %v962 = vunpack.c.l.b16 %v940
            %v963 = vunpack.c.l.b16 %v941
            %v964 = vunpack.c.l.b16 %v942
            %v965 = vunpack.c.l.b16 %v943
            %v966 = vunpack.c.l.b16 %v944
            %v967 = vunpack.c.l.b16 %v945
            %v968 = vunpack.c.l.b16 %v946
            %v969 = vunpack.c.l.b16 %v947
            %v970 = vpack.c.b16 %v963, %v962
            %v971 = vpack.c.b16 %v965, %v964
            %v972 = vpack.c.b16 %v967, %v966
            %v973 = vpack.c.b16 %v969, %v968
            %v979 = vsel %vm295, %v953, 0
            %981 = vmatprep.subr.bf16.mxu0 0
            %982 = vmatpush1.bf16.msra.mxu0 0
            %983 = vmatprep.subr.bf16.mxu0 0
            %984 = vmatpush1.bf16.msra.mxu0 0
            %985 = vmatprep.subr.bf16.mxu0 0
            %986 = vmatpush1.bf16.msra.mxu0 0
            %987 = vmatprep.subr.bf16.mxu0 0
            %988 = vmatpush1.bf16.msra.mxu0 0
            %989 = vmatprep.subr.bf16.mxu0 0
            %990 = vmatpush1.bf16.msra.mxu0 %v973
            %991 = vmatprep.subr.bf16.mxu0 0
            %992 = vmatpush1.bf16.msra.mxu0 %v972
            %993 = vmatprep.subr.bf16.mxu0 0
            %994 = vmatpush1.bf16.msra.mxu0 %v971
            %995 = vmatprep.subr.bf16.mxu0 0
            %996 = vmatpush1.bf16.msra.mxu0 %v970
            %997 = vmatprep.subr.bf16.mxu0 0
            %998 = vmatpush2.bf16.msra.mxu0 0
            %999 = vmatprep.subr.bf16.mxu0 0
            %1000 = vmatpush2.bf16.msra.mxu0 0
            %1001 = vmatprep.subr.bf16.mxu0 0
            %1002 = vmatpush2.bf16.msra.mxu0 0
            %1003 = vmatprep.subr.bf16.mxu0 0
            %1004 = vmatpush2.bf16.msra.mxu0 0
            %1005 = vmatprep.subr.bf16.mxu0 0
            %1006 = vmatpush2.bf16.msra.mxu0 0
            %1007 = vmatprep.subr.bf16.mxu0 0
            %1008 = vmatpush2.bf16.msra.mxu0 0
            %1009 = vmatprep.subr.bf16.mxu0 0
            %1010 = vmatpush2.bf16.msra.mxu0 0
            %1011 = vmatprep.subr.bf16.mxu0 0
            %1012 = vmatpush2.bf16.msra.mxu0 0
            %1013 = vmatprep.mubr.bf16.mxu0 0
            %1014 = vmatmul.mubr.bf16.gmra.mxu0 %v979
            %v1015 = vpop.f32.mrf.mxu0
            %v1016 = vadd.f32 0.0, %v1015
            %v1017 = vpop.f32.mrf.mxu0
            %v1018 = vpop.f32.mrf.mxu0
            %v1019 = vadd.f32 0.0, %v1018
            %v1020 = vpop.f32.mrf.mxu0
            %1021 = vdwg.mxu0
            %v1022 = vadd.f32 %v936, %v1016
            %v1023 = vadd.f32 %v937, %v1019
            %v1024 = vld [vmem:[%s830 + $0x8] sm:$0x7]
            %s1025 = scalar_lea.vmem %s1, 256
            %v1026 = vld [vmem:[%s1025] sm:$0xf]
            %v1027 = vld [vmem:[%s1025 + $0x4] sm:$0xf]
            %v1028 = vld [vmem:[%s1025 + $0x8] sm:$0xf]
            %v1029 = vld [vmem:[%s1025 + $0xc] sm:$0xf]
            %v1030 = vld [vmem:[%s1025 + $0x10] sm:$0xf]
            %v1031 = vld [vmem:[%s1025 + $0x14] sm:$0xf]
            %v1032 = vld [vmem:[%s1025 + $0x18] sm:$0xf]
            %v1033 = vld [vmem:[%s1025 + $0x1c] sm:$0xf]
            %v1035 = vunpack.c.l.b16 %v1024
            %v1036 = vpack.c.b16 %v1035, %v1035
            %v1038 = vshrl.u32 %v950, 16
            %v1040 = vrot.slane %v1038, 2
            %v1041 = vshll.u32 %v950, 16
            %v1043 = vrot.slane %v1041, 3
            %v1044 = vor.u32 %v1040, %v1043
            %v1046 = vshrl.u32 %v1036, 16
            %v1048 = vrot.slane %v1046, 2
            %v1049 = vshll.u32 %v1036, 16
            %v1051 = vrot.slane %v1049, 3
            %v1052 = vor.u32 %v1048, %v1051
            %v1053 = vsel %vm442, %v1044, %v1052
            %v1062 = vunpack.c.l.b16 %v1026
            %v1063 = vunpack.c.l.b16 %v1027
            %v1064 = vunpack.c.l.b16 %v1028
            %v1065 = vunpack.c.l.b16 %v1029
            %v1066 = vunpack.c.l.b16 %v1030
            %v1067 = vunpack.c.l.b16 %v1031
            %v1068 = vunpack.c.l.b16 %v1032
            %v1069 = vunpack.c.l.b16 %v1033
            %v1070 = vpack.c.b16 %v1063, %v1062
            %v1071 = vpack.c.b16 %v1065, %v1064
            %v1072 = vpack.c.b16 %v1067, %v1066
            %v1073 = vpack.c.b16 %v1069, %v1068
            %v1079 = vsel %vm295, %v1053, 0
            %1081 = vmatprep.subr.bf16.mxu0 0
            %1082 = vmatpush1.bf16.msra.mxu0 0
            %1083 = vmatprep.subr.bf16.mxu0 0
            %1084 = vmatpush1.bf16.msra.mxu0 0
            %1085 = vmatprep.subr.bf16.mxu0 0
            %1086 = vmatpush1.bf16.msra.mxu0 0
            %1087 = vmatprep.subr.bf16.mxu0 0
            %1088 = vmatpush1.bf16.msra.mxu0 0
            %1089 = vmatprep.subr.bf16.mxu0 0
            %1090 = vmatpush1.bf16.msra.mxu0 %v1073
            %1091 = vmatprep.subr.bf16.mxu0 0
            %1092 = vmatpush1.bf16.msra.mxu0 %v1072
            %1093 = vmatprep.subr.bf16.mxu0 0
            %1094 = vmatpush1.bf16.msra.mxu0 %v1071
            %1095 = vmatprep.subr.bf16.mxu0 0
            %1096 = vmatpush1.bf16.msra.mxu0 %v1070
            %1097 = vmatprep.subr.bf16.mxu0 0
            %1098 = vmatpush2.bf16.msra.mxu0 0
            %1099 = vmatprep.subr.bf16.mxu0 0
            %1100 = vmatpush2.bf16.msra.mxu0 0
            %1101 = vmatprep.subr.bf16.mxu0 0
            %1102 = vmatpush2.bf16.msra.mxu0 0
            %1103 = vmatprep.subr.bf16.mxu0 0
            %1104 = vmatpush2.bf16.msra.mxu0 0
            %1105 = vmatprep.subr.bf16.mxu0 0
            %1106 = vmatpush2.bf16.msra.mxu0 0
            %1107 = vmatprep.subr.bf16.mxu0 0
            %1108 = vmatpush2.bf16.msra.mxu0 0
            %1109 = vmatprep.subr.bf16.mxu0 0
            %1110 = vmatpush2.bf16.msra.mxu0 0
            %1111 = vmatprep.subr.bf16.mxu0 0
            %1112 = vmatpush2.bf16.msra.mxu0 0
            %1113 = vmatprep.mubr.bf16.mxu0 0
            %1114 = vmatmul.mubr.bf16.gmra.mxu0 %v1079
            %v1115 = vpop.f32.mrf.mxu0
            %v1116 = vadd.f32 0.0, %v1115
            %v1117 = vpop.f32.mrf.mxu0
            %v1118 = vpop.f32.mrf.mxu0
            %v1119 = vadd.f32 0.0, %v1118
            %v1120 = vpop.f32.mrf.mxu0
            %1121 = vdwg.mxu0
            %v1122 = vadd.f32 %v1022, %v1116
            %v1123 = vadd.f32 %v1023, %v1119
            %s1124 = sadd.s32 %s227, 2
            %s1125 = smul.u32 %s1124, 3
            %s1126 = smul.addr %s1125, 4
            %s1127 = scalar_lea.vmem %s209, %s1126
            %v1128 = vld [vmem:[%s1127] sm:$0xe]
            %v1129 = vld [vmem:[%s1127 + $0x4] sm:$0xf]
            %v1130 = vld [vmem:[%s1127 + $0x8] sm:$0x1]
            %s1131 = scalar_lea.vmem %s1, 288
            %v1132 = vld [vmem:[%s1131] sm:$0xf]
            %v1133 = vld [vmem:[%s1131 + $0x4] sm:$0xf]
            %v1134 = vld [vmem:[%s1131 + $0x8] sm:$0xf]
            %v1135 = vld [vmem:[%s1131 + $0xc] sm:$0xf]
            %v1136 = vld [vmem:[%s1131 + $0x10] sm:$0xf]
            %v1137 = vld [vmem:[%s1131 + $0x14] sm:$0xf]
            %v1138 = vld [vmem:[%s1131 + $0x18] sm:$0xf]
            %v1139 = vld [vmem:[%s1131 + $0x1c] sm:$0xf]
            %v1143 = vunpack.c.l.b16 %v1128
            %v1144 = vunpack.c.l.b16 %v1129
            %v1145 = vunpack.c.l.b16 %v1130
            %v1146 = vpack.c.b16 %v1144, %v1143
            %v1147 = vpack.c.b16 %v1145, %v1145
            %vm1148 = vcmask 1046528
            %v1149 = vrot.slane %v1146, 1
            %v1150 = vrot.slane %v1147, 1
            %v1151 = vsel %vm1148, %v1149, %v1150
            %v1160 = vunpack.c.l.b16 %v1132
            %v1161 = vunpack.c.l.b16 %v1133
            %v1162 = vunpack.c.l.b16 %v1134
            %v1163 = vunpack.c.l.b16 %v1135
            %v1164 = vunpack.c.l.b16 %v1136
            %v1165 = vunpack.c.l.b16 %v1137
            %v1166 = vunpack.c.l.b16 %v1138
            %v1167 = vunpack.c.l.b16 %v1139
            %v1168 = vpack.c.b16 %v1161, %v1160
            %v1169 = vpack.c.b16 %v1163, %v1162
            %v1170 = vpack.c.b16 %v1165, %v1164
            %v1171 = vpack.c.b16 %v1167, %v1166
            %v1177 = vsel %vm295, %v1151, 0
            %1179 = vmatprep.subr.bf16.mxu0 0
            %1180 = vmatpush1.bf16.msra.mxu0 0
            %1181 = vmatprep.subr.bf16.mxu0 0
            %1182 = vmatpush1.bf16.msra.mxu0 0
            %1183 = vmatprep.subr.bf16.mxu0 0
            %1184 = vmatpush1.bf16.msra.mxu0 0
            %1185 = vmatprep.subr.bf16.mxu0 0
            %1186 = vmatpush1.bf16.msra.mxu0 0
            %1187 = vmatprep.subr.bf16.mxu0 0
            %1188 = vmatpush1.bf16.msra.mxu0 %v1171
            %1189 = vmatprep.subr.bf16.mxu0 0
            %1190 = vmatpush1.bf16.msra.mxu0 %v1170
            %1191 = vmatprep.subr.bf16.mxu0 0
            %1192 = vmatpush1.bf16.msra.mxu0 %v1169
            %1193 = vmatprep.subr.bf16.mxu0 0
            %1194 = vmatpush1.bf16.msra.mxu0 %v1168
            %1195 = vmatprep.subr.bf16.mxu0 0
            %1196 = vmatpush2.bf16.msra.mxu0 0
            %1197 = vmatprep.subr.bf16.mxu0 0
            %1198 = vmatpush2.bf16.msra.mxu0 0
            %1199 = vmatprep.subr.bf16.mxu0 0
            %1200 = vmatpush2.bf16.msra.mxu0 0
            %1201 = vmatprep.subr.bf16.mxu0 0
            %1202 = vmatpush2.bf16.msra.mxu0 0
            %1203 = vmatprep.subr.bf16.mxu0 0
            %1204 = vmatpush2.bf16.msra.mxu0 0
            %1205 = vmatprep.subr.bf16.mxu0 0
            %1206 = vmatpush2.bf16.msra.mxu0 0
            %1207 = vmatprep.subr.bf16.mxu0 0
            %1208 = vmatpush2.bf16.msra.mxu0 0
            %1209 = vmatprep.subr.bf16.mxu0 0
            %1210 = vmatpush2.bf16.msra.mxu0 0
            %1211 = vmatprep.mubr.bf16.mxu0 0
            %1212 = vmatmul.mubr.bf16.gmra.mxu0 %v1177
            %v1213 = vpop.f32.mrf.mxu0
            %v1214 = vadd.f32 0.0, %v1213
            %v1215 = vpop.f32.mrf.mxu0
            %v1216 = vpop.f32.mrf.mxu0
            %v1217 = vadd.f32 0.0, %v1216
            %v1218 = vpop.f32.mrf.mxu0
            %1219 = vdwg.mxu0
            %v1220 = vadd.f32 %v1122, %v1214
            %v1221 = vadd.f32 %v1123, %v1217
            %v1222 = vld [vmem:[%s1127] sm:$0xc]
            %v1223 = vld [vmem:[%s1127 + $0x8] sm:$0x3]
            %s1224 = scalar_lea.vmem %s1, 320
            %v1225 = vld [vmem:[%s1224] sm:$0xf]
            %v1226 = vld [vmem:[%s1224 + $0x4] sm:$0xf]
            %v1227 = vld [vmem:[%s1224 + $0x8] sm:$0xf]
            %v1228 = vld [vmem:[%s1224 + $0xc] sm:$0xf]
            %v1229 = vld [vmem:[%s1224 + $0x10] sm:$0xf]
            %v1230 = vld [vmem:[%s1224 + $0x14] sm:$0xf]
            %v1231 = vld [vmem:[%s1224 + $0x18] sm:$0xf]
            %v1232 = vld [vmem:[%s1224 + $0x1c] sm:$0xf]
            %v1235 = vunpack.c.l.b16 %v1222
            %v1236 = vunpack.c.l.b16 %v1223
            %v1237 = vpack.c.b16 %v1144, %v1235
            %v1238 = vpack.c.b16 %v1236, %v1236
            %v1239 = vrot.slane %v1237, 2
            %v1240 = vrot.slane %v1238, 2
            %v1241 = vsel %vm267, %v1239, %v1240
            %v1250 = vunpack.c.l.b16 %v1225
            %v1251 = vunpack.c.l.b16 %v1226
            %v1252 = vunpack.c.l.b16 %v1227
            %v1253 = vunpack.c.l.b16 %v1228
            %v1254 = vunpack.c.l.b16 %v1229
            %v1255 = vunpack.c.l.b16 %v1230
            %v1256 = vunpack.c.l.b16 %v1231
            %v1257 = vunpack.c.l.b16 %v1232
            %v1258 = vpack.c.b16 %v1251, %v1250
            %v1259 = vpack.c.b16 %v1253, %v1252
            %v1260 = vpack.c.b16 %v1255, %v1254
            %v1261 = vpack.c.b16 %v1257, %v1256
            %v1267 = vsel %vm295, %v1241, 0
            %1269 = vmatprep.subr.bf16.mxu0 0
            %1270 = vmatpush1.bf16.msra.mxu0 0
            %1271 = vmatprep.subr.bf16.mxu0 0
            %1272 = vmatpush1.bf16.msra.mxu0 0
            %1273 = vmatprep.subr.bf16.mxu0 0
            %1274 = vmatpush1.bf16.msra.mxu0 0
            %1275 = vmatprep.subr.bf16.mxu0 0
            %1276 = vmatpush1.bf16.msra.mxu0 0
            %1277 = vmatprep.subr.bf16.mxu0 0
            %1278 = vmatpush1.bf16.msra.mxu0 %v1261
            %1279 = vmatprep.subr.bf16.mxu0 0
            %1280 = vmatpush1.bf16.msra.mxu0 %v1260
            %1281 = vmatprep.subr.bf16.mxu0 0
            %1282 = vmatpush1.bf16.msra.mxu0 %v1259
            %1283 = vmatprep.subr.bf16.mxu0 0
            %1284 = vmatpush1.bf16.msra.mxu0 %v1258
            %1285 = vmatprep.subr.bf16.mxu0 0
            %1286 = vmatpush2.bf16.msra.mxu0 0
            %1287 = vmatprep.subr.bf16.mxu0 0
            %1288 = vmatpush2.bf16.msra.mxu0 0
            %1289 = vmatprep.subr.bf16.mxu0 0
            %1290 = vmatpush2.bf16.msra.mxu0 0
            %1291 = vmatprep.subr.bf16.mxu0 0
            %1292 = vmatpush2.bf16.msra.mxu0 0
            %1293 = vmatprep.subr.bf16.mxu0 0
            %1294 = vmatpush2.bf16.msra.mxu0 0
            %1295 = vmatprep.subr.bf16.mxu0 0
            %1296 = vmatpush2.bf16.msra.mxu0 0
            %1297 = vmatprep.subr.bf16.mxu0 0
            %1298 = vmatpush2.bf16.msra.mxu0 0
            %1299 = vmatprep.subr.bf16.mxu0 0
            %1300 = vmatpush2.bf16.msra.mxu0 0
            %1301 = vmatprep.mubr.bf16.mxu0 0
            %1302 = vmatmul.mubr.bf16.gmra.mxu0 %v1267
            %v1303 = vpop.f32.mrf.mxu0
            %v1304 = vadd.f32 0.0, %v1303
            %v1305 = vpop.f32.mrf.mxu0
            %v1306 = vpop.f32.mrf.mxu0
            %v1307 = vadd.f32 0.0, %v1306
            %v1308 = vpop.f32.mrf.mxu0
            %1309 = vdwg.mxu0
            %v1310 = vadd.f32 %v1220, %v1304
            %v1311 = vadd.f32 %v1221, %v1307
            %v1312 = vld [vmem:[%s1127] sm:$0x8]
            %v1313 = vld [vmem:[%s1127 + $0x8] sm:$0x7]
            %s1314 = scalar_lea.vmem %s1, 352
            %v1315 = vld [vmem:[%s1314] sm:$0xf]
            %v1316 = vld [vmem:[%s1314 + $0x4] sm:$0xf]
            %v1317 = vld [vmem:[%s1314 + $0x8] sm:$0xf]
            %v1318 = vld [vmem:[%s1314 + $0xc] sm:$0xf]
            %v1319 = vld [vmem:[%s1314 + $0x10] sm:$0xf]
            %v1320 = vld [vmem:[%s1314 + $0x14] sm:$0xf]
            %v1321 = vld [vmem:[%s1314 + $0x18] sm:$0xf]
            %v1322 = vld [vmem:[%s1314 + $0x1c] sm:$0xf]
            %v1325 = vunpack.c.l.b16 %v1312
            %v1326 = vunpack.c.l.b16 %v1313
            %v1327 = vpack.c.b16 %v1144, %v1325
            %v1328 = vpack.c.b16 %v1326, %v1326
            %vm1329 = vcmask 1044480
            %v1330 = vrot.slane %v1327, 3
            %v1331 = vrot.slane %v1328, 3
            %v1332 = vsel %vm1329, %v1330, %v1331
            %v1341 = vunpack.c.l.b16 %v1315
            %v1342 = vunpack.c.l.b16 %v1316
            %v1343 = vunpack.c.l.b16 %v1317
            %v1344 = vunpack.c.l.b16 %v1318
            %v1345 = vunpack.c.l.b16 %v1319
            %v1346 = vunpack.c.l.b16 %v1320
            %v1347 = vunpack.c.l.b16 %v1321
            %v1348 = vunpack.c.l.b16 %v1322
            %v1349 = vpack.c.b16 %v1342, %v1341
            %v1350 = vpack.c.b16 %v1344, %v1343
            %v1351 = vpack.c.b16 %v1346, %v1345
            %v1352 = vpack.c.b16 %v1348, %v1347
            %v1358 = vsel %vm295, %v1332, 0
            %1360 = vmatprep.subr.bf16.mxu0 0
            %1361 = vmatpush1.bf16.msra.mxu0 0
            %1362 = vmatprep.subr.bf16.mxu0 0
            %1363 = vmatpush1.bf16.msra.mxu0 0
            %1364 = vmatprep.subr.bf16.mxu0 0
            %1365 = vmatpush1.bf16.msra.mxu0 0
            %1366 = vmatprep.subr.bf16.mxu0 0
            %1367 = vmatpush1.bf16.msra.mxu0 0
            %1368 = vmatprep.subr.bf16.mxu0 0
            %1369 = vmatpush1.bf16.msra.mxu0 %v1352
            %1370 = vmatprep.subr.bf16.mxu0 0
            %1371 = vmatpush1.bf16.msra.mxu0 %v1351
            %1372 = vmatprep.subr.bf16.mxu0 0
            %1373 = vmatpush1.bf16.msra.mxu0 %v1350
            %1374 = vmatprep.subr.bf16.mxu0 0
            %1375 = vmatpush1.bf16.msra.mxu0 %v1349
            %1376 = vmatprep.subr.bf16.mxu0 0
            %1377 = vmatpush2.bf16.msra.mxu0 0
            %1378 = vmatprep.subr.bf16.mxu0 0
            %1379 = vmatpush2.bf16.msra.mxu0 0
            %1380 = vmatprep.subr.bf16.mxu0 0
            %1381 = vmatpush2.bf16.msra.mxu0 0
            %1382 = vmatprep.subr.bf16.mxu0 0
            %1383 = vmatpush2.bf16.msra.mxu0 0
            %1384 = vmatprep.subr.bf16.mxu0 0
            %1385 = vmatpush2.bf16.msra.mxu0 0
            %1386 = vmatprep.subr.bf16.mxu0 0
            %1387 = vmatpush2.bf16.msra.mxu0 0
            %1388 = vmatprep.subr.bf16.mxu0 0
            %1389 = vmatpush2.bf16.msra.mxu0 0
            %1390 = vmatprep.subr.bf16.mxu0 0
            %1391 = vmatpush2.bf16.msra.mxu0 0
            %1392 = vmatprep.mubr.bf16.mxu0 0
            %1393 = vmatmul.mubr.bf16.gmra.mxu0 %v1358
            %v1394 = vpop.f32.mrf.mxu0
            %v1395 = vadd.f32 0.0, %v1394
            %v1396 = vpop.f32.mrf.mxu0
            %v1397 = vpop.f32.mrf.mxu0
            %v1398 = vadd.f32 0.0, %v1397
            %v1399 = vpop.f32.mrf.mxu0
            %1400 = vdwg.mxu0
            %v1401 = vadd.f32 %v1310, %v1395
            %v1402 = vadd.f32 %v1311, %v1398
            %v1403 = vld [vmem:[%s533 + $0x8] sm:$0x1]
            %s1404 = scalar_lea.vmem %s1, 384
            %v1405 = vld [vmem:[%s1404] sm:$0xf]
            %v1406 = vld [vmem:[%s1404 + $0x4] sm:$0xf]
            %v1407 = vld [vmem:[%s1404 + $0x8] sm:$0xf]
            %v1408 = vld [vmem:[%s1404 + $0xc] sm:$0xf]
            %v1409 = vld [vmem:[%s1404 + $0x10] sm:$0xf]
            %v1410 = vld [vmem:[%s1404 + $0x14] sm:$0xf]
            %v1411 = vld [vmem:[%s1404 + $0x18] sm:$0xf]
            %v1412 = vld [vmem:[%s1404 + $0x1c] sm:$0xf]
            %v1414 = vunpack.c.l.b16 %v1403
            %v1415 = vpack.c.b16 %v1414, %v1414
            %v1416 = vrot.slane %v552, 1
            %v1417 = vrot.slane %v1415, 1
            %v1418 = vsel %vm1148, %v1416, %v1417
            %v1427 = vunpack.c.l.b16 %v1405
            %v1428 = vunpack.c.l.b16 %v1406
            %v1429 = vunpack.c.l.b16 %v1407
            %v1430 = vunpack.c.l.b16 %v1408
            %v1431 = vunpack.c.l.b16 %v1409
            %v1432 = vunpack.c.l.b16 %v1410
            %v1433 = vunpack.c.l.b16 %v1411
            %v1434 = vunpack.c.l.b16 %v1412
            %v1435 = vpack.c.b16 %v1428, %v1427
            %v1436 = vpack.c.b16 %v1430, %v1429
            %v1437 = vpack.c.b16 %v1432, %v1431
            %v1438 = vpack.c.b16 %v1434, %v1433
            %v1444 = vsel %vm295, %v1418, 0
            %1446 = vmatprep.subr.bf16.mxu0 0
            %1447 = vmatpush1.bf16.msra.mxu0 0
            %1448 = vmatprep.subr.bf16.mxu0 0
            %1449 = vmatpush1.bf16.msra.mxu0 0
            %1450 = vmatprep.subr.bf16.mxu0 0
            %1451 = vmatpush1.bf16.msra.mxu0 0
            %1452 = vmatprep.subr.bf16.mxu0 0
            %1453 = vmatpush1.bf16.msra.mxu0 0
            %1454 = vmatprep.subr.bf16.mxu0 0
            %1455 = vmatpush1.bf16.msra.mxu0 %v1438
            %1456 = vmatprep.subr.bf16.mxu0 0
            %1457 = vmatpush1.bf16.msra.mxu0 %v1437
            %1458 = vmatprep.subr.bf16.mxu0 0
            %1459 = vmatpush1.bf16.msra.mxu0 %v1436
            %1460 = vmatprep.subr.bf16.mxu0 0
            %1461 = vmatpush1.bf16.msra.mxu0 %v1435
            %1462 = vmatprep.subr.bf16.mxu0 0
            %1463 = vmatpush2.bf16.msra.mxu0 0
            %1464 = vmatprep.subr.bf16.mxu0 0
            %1465 = vmatpush2.bf16.msra.mxu0 0
            %1466 = vmatprep.subr.bf16.mxu0 0
            %1467 = vmatpush2.bf16.msra.mxu0 0
            %1468 = vmatprep.subr.bf16.mxu0 0
            %1469 = vmatpush2.bf16.msra.mxu0 0
            %1470 = vmatprep.subr.bf16.mxu0 0
            %1471 = vmatpush2.bf16.msra.mxu0 0
            %1472 = vmatprep.subr.bf16.mxu0 0
            %1473 = vmatpush2.bf16.msra.mxu0 0
            %1474 = vmatprep.subr.bf16.mxu0 0
            %1475 = vmatpush2.bf16.msra.mxu0 0
            %1476 = vmatprep.subr.bf16.mxu0 0
            %1477 = vmatpush2.bf16.msra.mxu0 0
            %1478 = vmatprep.mubr.bf16.mxu0 0
            %1479 = vmatmul.mubr.bf16.gmra.mxu0 %v1444
            %v1480 = vpop.f32.mrf.mxu0
            %v1481 = vadd.f32 0.0, %v1480
            %v1482 = vpop.f32.mrf.mxu0
            %v1483 = vpop.f32.mrf.mxu0
            %v1484 = vadd.f32 0.0, %v1483
            %v1485 = vpop.f32.mrf.mxu0
            %1486 = vdwg.mxu0
            %v1487 = vadd.f32 %v1401, %v1481
            %v1488 = vadd.f32 %v1402, %v1484
            %s1489 = scalar_lea.vmem %s1, 416
            %v1490 = vld [vmem:[%s1489] sm:$0xf]
            %v1491 = vld [vmem:[%s1489 + $0x4] sm:$0xf]
            %v1492 = vld [vmem:[%s1489 + $0x8] sm:$0xf]
            %v1493 = vld [vmem:[%s1489 + $0xc] sm:$0xf]
            %v1494 = vld [vmem:[%s1489 + $0x10] sm:$0xf]
            %v1495 = vld [vmem:[%s1489 + $0x14] sm:$0xf]
            %v1496 = vld [vmem:[%s1489 + $0x18] sm:$0xf]
            %v1497 = vld [vmem:[%s1489 + $0x1c] sm:$0xf]
            %v1506 = vunpack.c.l.b16 %v1490
            %v1507 = vunpack.c.l.b16 %v1491
            %v1508 = vunpack.c.l.b16 %v1492
            %v1509 = vunpack.c.l.b16 %v1493
            %v1510 = vunpack.c.l.b16 %v1494
            %v1511 = vunpack.c.l.b16 %v1495
            %v1512 = vunpack.c.l.b16 %v1496
            %v1513 = vunpack.c.l.b16 %v1497
            %v1514 = vpack.c.b16 %v1507, %v1506
            %v1515 = vpack.c.b16 %v1509, %v1508
            %v1516 = vpack.c.b16 %v1511, %v1510
            %v1517 = vpack.c.b16 %v1513, %v1512
            %1522 = vmatprep.subr.bf16.mxu0 0
            %1523 = vmatpush1.bf16.msra.mxu0 0
            %1524 = vmatprep.subr.bf16.mxu0 0
            %1525 = vmatpush1.bf16.msra.mxu0 0
            %1526 = vmatprep.subr.bf16.mxu0 0
            %1527 = vmatpush1.bf16.msra.mxu0 0
            %1528 = vmatprep.subr.bf16.mxu0 0
            %1529 = vmatpush1.bf16.msra.mxu0 0
            %1530 = vmatprep.subr.bf16.mxu0 0
            %1531 = vmatpush1.bf16.msra.mxu0 %v1517
            %1532 = vmatprep.subr.bf16.mxu0 0
            %1533 = vmatpush1.bf16.msra.mxu0 %v1516
            %1534 = vmatprep.subr.bf16.mxu0 0
            %1535 = vmatpush1.bf16.msra.mxu0 %v1515
            %1536 = vmatprep.subr.bf16.mxu0 0
            %1537 = vmatpush1.bf16.msra.mxu0 %v1514
            %1538 = vmatprep.subr.bf16.mxu0 0
            %1539 = vmatpush2.bf16.msra.mxu0 0
            %1540 = vmatprep.subr.bf16.mxu0 0
            %1541 = vmatpush2.bf16.msra.mxu0 0
            %1542 = vmatprep.subr.bf16.mxu0 0
            %1543 = vmatpush2.bf16.msra.mxu0 0
            %1544 = vmatprep.subr.bf16.mxu0 0
            %1545 = vmatpush2.bf16.msra.mxu0 0
            %1546 = vmatprep.subr.bf16.mxu0 0
            %1547 = vmatpush2.bf16.msra.mxu0 0
            %1548 = vmatprep.subr.bf16.mxu0 0
            %1549 = vmatpush2.bf16.msra.mxu0 0
            %1550 = vmatprep.subr.bf16.mxu0 0
            %1551 = vmatpush2.bf16.msra.mxu0 0
            %1552 = vmatprep.subr.bf16.mxu0 0
            %1553 = vmatpush2.bf16.msra.mxu0 0
            %1554 = vmatprep.mubr.bf16.mxu0 0
            %1555 = vmatmul.mubr.bf16.gmra.mxu0 %v682
            %v1556 = vpop.f32.mrf.mxu0
            %v1557 = vadd.f32 0.0, %v1556
            %v1558 = vpop.f32.mrf.mxu0
            %v1559 = vpop.f32.mrf.mxu0
            %v1560 = vadd.f32 0.0, %v1559
            %v1561 = vpop.f32.mrf.mxu0
            %1562 = vdwg.mxu0
            %v1563 = vadd.f32 %v1487, %v1557
            %v1564 = vadd.f32 %v1488, %v1560
            %v1565 = vld [vmem:[%s533] sm:$0x8]
            %s1566 = scalar_lea.vmem %s1, 448
            %v1567 = vld [vmem:[%s1566] sm:$0xf]
            %v1568 = vld [vmem:[%s1566 + $0x4] sm:$0xf]
            %v1569 = vld [vmem:[%s1566 + $0x8] sm:$0xf]
            %v1570 = vld [vmem:[%s1566 + $0xc] sm:$0xf]
            %v1571 = vld [vmem:[%s1566 + $0x10] sm:$0xf]
            %v1572 = vld [vmem:[%s1566 + $0x14] sm:$0xf]
            %v1573 = vld [vmem:[%s1566 + $0x18] sm:$0xf]
            %v1574 = vld [vmem:[%s1566 + $0x1c] sm:$0xf]
            %v1576 = vunpack.c.l.b16 %v1565
            %v1577 = vpack.c.b16 %v550, %v1576
            %v1578 = vrot.slane %v1577, 3
            %v1579 = vrot.slane %v739, 3
            %v1580 = vsel %vm1329, %v1578, %v1579
            %v1589 = vunpack.c.l.b16 %v1567
            %v1590 = vunpack.c.l.b16 %v1568
            %v1591 = vunpack.c.l.b16 %v1569
            %v1592 = vunpack.c.l.b16 %v1570
            %v1593 = vunpack.c.l.b16 %v1571
            %v1594 = vunpack.c.l.b16 %v1572
            %v1595 = vunpack.c.l.b16 %v1573
            %v1596 = vunpack.c.l.b16 %v1574
            %v1597 = vpack.c.b16 %v1590, %v1589
            %v1598 = vpack.c.b16 %v1592, %v1591
            %v1599 = vpack.c.b16 %v1594, %v1593
            %v1600 = vpack.c.b16 %v1596, %v1595
            %v1606 = vsel %vm295, %v1580, 0
            %1608 = vmatprep.subr.bf16.mxu0 0
            %1609 = vmatpush1.bf16.msra.mxu0 0
            %1610 = vmatprep.subr.bf16.mxu0 0
            %1611 = vmatpush1.bf16.msra.mxu0 0
            %1612 = vmatprep.subr.bf16.mxu0 0
            %1613 = vmatpush1.bf16.msra.mxu0 0
            %1614 = vmatprep.subr.bf16.mxu0 0
            %1615 = vmatpush1.bf16.msra.mxu0 0
            %1616 = vmatprep.subr.bf16.mxu0 0
            %1617 = vmatpush1.bf16.msra.mxu0 %v1600
            %1618 = vmatprep.subr.bf16.mxu0 0
            %1619 = vmatpush1.bf16.msra.mxu0 %v1599
            %1620 = vmatprep.subr.bf16.mxu0 0
            %1621 = vmatpush1.bf16.msra.mxu0 %v1598
            %1622 = vmatprep.subr.bf16.mxu0 0
            %1623 = vmatpush1.bf16.msra.mxu0 %v1597
            %1624 = vmatprep.subr.bf16.mxu0 0
            %1625 = vmatpush2.bf16.msra.mxu0 0
            %1626 = vmatprep.subr.bf16.mxu0 0
            %1627 = vmatpush2.bf16.msra.mxu0 0
            %1628 = vmatprep.subr.bf16.mxu0 0
            %1629 = vmatpush2.bf16.msra.mxu0 0
            %1630 = vmatprep.subr.bf16.mxu0 0
            %1631 = vmatpush2.bf16.msra.mxu0 0
            %1632 = vmatprep.subr.bf16.mxu0 0
            %1633 = vmatpush2.bf16.msra.mxu0 0
            %1634 = vmatprep.subr.bf16.mxu0 0
            %1635 = vmatpush2.bf16.msra.mxu0 0
            %1636 = vmatprep.subr.bf16.mxu0 0
            %1637 = vmatpush2.bf16.msra.mxu0 0
            %1638 = vmatprep.subr.bf16.mxu0 0
            %1639 = vmatpush2.bf16.msra.mxu0 0
            %1640 = vmatprep.mubr.bf16.mxu0 0
            %1641 = vmatmul.mubr.bf16.gmra.mxu0 %v1606
            %v1642 = vpop.f32.mrf.mxu0
            %v1643 = vadd.f32 0.0, %v1642
            %v1644 = vpop.f32.mrf.mxu0
            %v1645 = vpop.f32.mrf.mxu0
            %v1646 = vadd.f32 0.0, %v1645
            %v1647 = vpop.f32.mrf.mxu0
            %1648 = vdwg.mxu0
            %v1649 = vadd.f32 %v1563, %v1643
            %v1650 = vadd.f32 %v1564, %v1646
            %s1651 = sadd.s32 %s227, 6
            %s1652 = smul.u32 %s1651, 3
            %s1653 = smul.addr %s1652, 4
            %s1654 = scalar_lea.vmem %s209, %s1653
            %v1655 = vld [vmem:[%s1654] sm:$0xe]
            %v1656 = vld [vmem:[%s1654 + $0x4] sm:$0xf]
            %v1657 = vld [vmem:[%s1654 + $0x8] sm:$0x1]
            %s1658 = scalar_lea.vmem %s1, 480
            %v1659 = vld [vmem:[%s1658] sm:$0xf]
            %v1660 = vld [vmem:[%s1658 + $0x4] sm:$0xf]
            %v1661 = vld [vmem:[%s1658 + $0x8] sm:$0xf]
            %v1662 = vld [vmem:[%s1658 + $0xc] sm:$0xf]
            %v1663 = vld [vmem:[%s1658 + $0x10] sm:$0xf]
            %v1664 = vld [vmem:[%s1658 + $0x14] sm:$0xf]
            %v1665 = vld [vmem:[%s1658 + $0x18] sm:$0xf]
            %v1666 = vld [vmem:[%s1658 + $0x1c] sm:$0xf]
            %v1670 = vunpack.c.l.b16 %v1655
            %v1671 = vunpack.c.l.b16 %v1656
            %v1672 = vunpack.c.l.b16 %v1657
            %v1673 = vpack.c.b16 %v1671, %v1670
            %v1674 = vpack.c.b16 %v1672, %v1672
            %v1675 = vrot.slane %v1673, 1
            %v1676 = vrot.slane %v1674, 1
            %v1677 = vsel %vm1148, %v1675, %v1676
            %v1686 = vunpack.c.l.b16 %v1659
            %v1687 = vunpack.c.l.b16 %v1660
            %v1688 = vunpack.c.l.b16 %v1661
            %v1689 = vunpack.c.l.b16 %v1662
            %v1690 = vunpack.c.l.b16 %v1663
            %v1691 = vunpack.c.l.b16 %v1664
            %v1692 = vunpack.c.l.b16 %v1665
            %v1693 = vunpack.c.l.b16 %v1666
            %v1694 = vpack.c.b16 %v1687, %v1686
            %v1695 = vpack.c.b16 %v1689, %v1688
            %v1696 = vpack.c.b16 %v1691, %v1690
            %v1697 = vpack.c.b16 %v1693, %v1692
            %v1703 = vsel %vm295, %v1677, 0
            %1705 = vmatprep.subr.bf16.mxu0 0
            %1706 = vmatpush1.bf16.msra.mxu0 0
            %1707 = vmatprep.subr.bf16.mxu0 0
            %1708 = vmatpush1.bf16.msra.mxu0 0
            %1709 = vmatprep.subr.bf16.mxu0 0
            %1710 = vmatpush1.bf16.msra.mxu0 0
            %1711 = vmatprep.subr.bf16.mxu0 0
            %1712 = vmatpush1.bf16.msra.mxu0 0
            %1713 = vmatprep.subr.bf16.mxu0 0
            %1714 = vmatpush1.bf16.msra.mxu0 %v1697
            %1715 = vmatprep.subr.bf16.mxu0 0
            %1716 = vmatpush1.bf16.msra.mxu0 %v1696
            %1717 = vmatprep.subr.bf16.mxu0 0
            %1718 = vmatpush1.bf16.msra.mxu0 %v1695
            %1719 = vmatprep.subr.bf16.mxu0 0
            %1720 = vmatpush1.bf16.msra.mxu0 %v1694
            %1721 = vmatprep.subr.bf16.mxu0 0
            %1722 = vmatpush2.bf16.msra.mxu0 0
            %1723 = vmatprep.subr.bf16.mxu0 0
            %1724 = vmatpush2.bf16.msra.mxu0 0
            %1725 = vmatprep.subr.bf16.mxu0 0
            %1726 = vmatpush2.bf16.msra.mxu0 0
            %1727 = vmatprep.subr.bf16.mxu0 0
            %1728 = vmatpush2.bf16.msra.mxu0 0
            %1729 = vmatprep.subr.bf16.mxu0 0
            %1730 = vmatpush2.bf16.msra.mxu0 0
            %1731 = vmatprep.subr.bf16.mxu0 0
            %1732 = vmatpush2.bf16.msra.mxu0 0
            %1733 = vmatprep.subr.bf16.mxu0 0
            %1734 = vmatpush2.bf16.msra.mxu0 0
            %1735 = vmatprep.subr.bf16.mxu0 0
            %1736 = vmatpush2.bf16.msra.mxu0 0
            %1737 = vmatprep.mubr.bf16.mxu0 0
            %1738 = vmatmul.mubr.bf16.gmra.mxu0 %v1703
            %v1739 = vpop.f32.mrf.mxu0
            %v1740 = vadd.f32 0.0, %v1739
            %v1741 = vpop.f32.mrf.mxu0
            %v1742 = vpop.f32.mrf.mxu0
            %v1743 = vadd.f32 0.0, %v1742
            %v1744 = vpop.f32.mrf.mxu0
            %1745 = vdwg.mxu0
            %v1746 = vadd.f32 %v1649, %v1740
            %v1747 = vadd.f32 %v1650, %v1743
            %v1748 = vld [vmem:[%s1654] sm:$0xc]
            %v1749 = vld [vmem:[%s1654 + $0x8] sm:$0x3]
            %s1750 = scalar_lea.vmem %s1, 512
            %v1751 = vld [vmem:[%s1750] sm:$0xf]
            %v1752 = vld [vmem:[%s1750 + $0x4] sm:$0xf]
            %v1753 = vld [vmem:[%s1750 + $0x8] sm:$0xf]
            %v1754 = vld [vmem:[%s1750 + $0xc] sm:$0xf]
            %v1755 = vld [vmem:[%s1750 + $0x10] sm:$0xf]
            %v1756 = vld [vmem:[%s1750 + $0x14] sm:$0xf]
            %v1757 = vld [vmem:[%s1750 + $0x18] sm:$0xf]
            %v1758 = vld [vmem:[%s1750 + $0x1c] sm:$0xf]
            %v1761 = vunpack.c.l.b16 %v1748
            %v1762 = vunpack.c.l.b16 %v1749
            %v1763 = vpack.c.b16 %v1671, %v1761
            %v1764 = vpack.c.b16 %v1762, %v1762
            %v1765 = vrot.slane %v1763, 2
            %v1766 = vrot.slane %v1764, 2
            %v1767 = vsel %vm267, %v1765, %v1766
            %v1776 = vunpack.c.l.b16 %v1751
            %v1777 = vunpack.c.l.b16 %v1752
            %v1778 = vunpack.c.l.b16 %v1753
            %v1779 = vunpack.c.l.b16 %v1754
            %v1780 = vunpack.c.l.b16 %v1755
            %v1781 = vunpack.c.l.b16 %v1756
            %v1782 = vunpack.c.l.b16 %v1757
            %v1783 = vunpack.c.l.b16 %v1758
            %v1784 = vpack.c.b16 %v1777, %v1776
            %v1785 = vpack.c.b16 %v1779, %v1778
            %v1786 = vpack.c.b16 %v1781, %v1780
            %v1787 = vpack.c.b16 %v1783, %v1782
            %v1793 = vsel %vm295, %v1767, 0
            %1795 = vmatprep.subr.bf16.mxu0 0
            %1796 = vmatpush1.bf16.msra.mxu0 0
            %1797 = vmatprep.subr.bf16.mxu0 0
            %1798 = vmatpush1.bf16.msra.mxu0 0
            %1799 = vmatprep.subr.bf16.mxu0 0
            %1800 = vmatpush1.bf16.msra.mxu0 0
            %1801 = vmatprep.subr.bf16.mxu0 0
            %1802 = vmatpush1.bf16.msra.mxu0 0
            %1803 = vmatprep.subr.bf16.mxu0 0
            %1804 = vmatpush1.bf16.msra.mxu0 %v1787
            %1805 = vmatprep.subr.bf16.mxu0 0
            %1806 = vmatpush1.bf16.msra.mxu0 %v1786
            %1807 = vmatprep.subr.bf16.mxu0 0
            %1808 = vmatpush1.bf16.msra.mxu0 %v1785
            %1809 = vmatprep.subr.bf16.mxu0 0
            %1810 = vmatpush1.bf16.msra.mxu0 %v1784
            %1811 = vmatprep.subr.bf16.mxu0 0
            %1812 = vmatpush2.bf16.msra.mxu0 0
            %1813 = vmatprep.subr.bf16.mxu0 0
            %1814 = vmatpush2.bf16.msra.mxu0 0
            %1815 = vmatprep.subr.bf16.mxu0 0
            %1816 = vmatpush2.bf16.msra.mxu0 0
            %1817 = vmatprep.subr.bf16.mxu0 0
            %1818 = vmatpush2.bf16.msra.mxu0 0
            %1819 = vmatprep.subr.bf16.mxu0 0
            %1820 = vmatpush2.bf16.msra.mxu0 0
            %1821 = vmatprep.subr.bf16.mxu0 0
            %1822 = vmatpush2.bf16.msra.mxu0 0
            %1823 = vmatprep.subr.bf16.mxu0 0
            %1824 = vmatpush2.bf16.msra.mxu0 0
            %1825 = vmatprep.subr.bf16.mxu0 0
            %1826 = vmatpush2.bf16.msra.mxu0 0
            %1827 = vmatprep.mubr.bf16.mxu0 0
            %1828 = vmatmul.mubr.bf16.gmra.mxu0 %v1793
            %v1829 = vpop.f32.mrf.mxu0
            %v1830 = vadd.f32 0.0, %v1829
            %v1831 = vpop.f32.mrf.mxu0
            %v1832 = vpop.f32.mrf.mxu0
            %v1833 = vadd.f32 0.0, %v1832
            %v1834 = vpop.f32.mrf.mxu0
            %1835 = vdwg.mxu0
            %v1836 = vadd.f32 %v1746, %v1830
            %v1837 = vadd.f32 %v1747, %v1833
            %v1838 = vld [vmem:[%s1654] sm:$0x8]
            %v1839 = vld [vmem:[%s1654 + $0x8] sm:$0x7]
            %s1840 = scalar_lea.vmem %s1, 544
            %v1841 = vld [vmem:[%s1840] sm:$0xf]
            %v1842 = vld [vmem:[%s1840 + $0x4] sm:$0xf]
            %v1843 = vld [vmem:[%s1840 + $0x8] sm:$0xf]
            %v1844 = vld [vmem:[%s1840 + $0xc] sm:$0xf]
            %v1845 = vld [vmem:[%s1840 + $0x10] sm:$0xf]
            %v1846 = vld [vmem:[%s1840 + $0x14] sm:$0xf]
            %v1847 = vld [vmem:[%s1840 + $0x18] sm:$0xf]
            %v1848 = vld [vmem:[%s1840 + $0x1c] sm:$0xf]
            %v1851 = vunpack.c.l.b16 %v1838
            %v1852 = vunpack.c.l.b16 %v1839
            %v1853 = vpack.c.b16 %v1671, %v1851
            %v1854 = vpack.c.b16 %v1852, %v1852
            %v1855 = vrot.slane %v1853, 3
            %v1856 = vrot.slane %v1854, 3
            %v1857 = vsel %vm1329, %v1855, %v1856
            %v1866 = vunpack.c.l.b16 %v1841
            %v1867 = vunpack.c.l.b16 %v1842
            %v1868 = vunpack.c.l.b16 %v1843
            %v1869 = vunpack.c.l.b16 %v1844
            %v1870 = vunpack.c.l.b16 %v1845
            %v1871 = vunpack.c.l.b16 %v1846
            %v1872 = vunpack.c.l.b16 %v1847
            %v1873 = vunpack.c.l.b16 %v1848
            %v1874 = vpack.c.b16 %v1867, %v1866
            %v1875 = vpack.c.b16 %v1869, %v1868
            %v1876 = vpack.c.b16 %v1871, %v1870
            %v1877 = vpack.c.b16 %v1873, %v1872
            %v1883 = vsel %vm295, %v1857, 0
            %1885 = vmatprep.subr.bf16.mxu0 0
            %1886 = vmatpush1.bf16.msra.mxu0 0
            %1887 = vmatprep.subr.bf16.mxu0 0
            %1888 = vmatpush1.bf16.msra.mxu0 0
            %1889 = vmatprep.subr.bf16.mxu0 0
            %1890 = vmatpush1.bf16.msra.mxu0 0
            %1891 = vmatprep.subr.bf16.mxu0 0
            %1892 = vmatpush1.bf16.msra.mxu0 0
            %1893 = vmatprep.subr.bf16.mxu0 0
            %1894 = vmatpush1.bf16.msra.mxu0 %v1877
            %1895 = vmatprep.subr.bf16.mxu0 0
            %1896 = vmatpush1.bf16.msra.mxu0 %v1876
            %1897 = vmatprep.subr.bf16.mxu0 0
            %1898 = vmatpush1.bf16.msra.mxu0 %v1875
            %1899 = vmatprep.subr.bf16.mxu0 0
            %1900 = vmatpush1.bf16.msra.mxu0 %v1874
            %1901 = vmatprep.subr.bf16.mxu0 0
            %1902 = vmatpush2.bf16.msra.mxu0 0
            %1903 = vmatprep.subr.bf16.mxu0 0
            %1904 = vmatpush2.bf16.msra.mxu0 0
            %1905 = vmatprep.subr.bf16.mxu0 0
            %1906 = vmatpush2.bf16.msra.mxu0 0
            %1907 = vmatprep.subr.bf16.mxu0 0
            %1908 = vmatpush2.bf16.msra.mxu0 0
            %1909 = vmatprep.subr.bf16.mxu0 0
            %1910 = vmatpush2.bf16.msra.mxu0 0
            %1911 = vmatprep.subr.bf16.mxu0 0
            %1912 = vmatpush2.bf16.msra.mxu0 0
            %1913 = vmatprep.subr.bf16.mxu0 0
            %1914 = vmatpush2.bf16.msra.mxu0 0
            %1915 = vmatprep.subr.bf16.mxu0 0
            %1916 = vmatpush2.bf16.msra.mxu0 0
            %1917 = vmatprep.mubr.bf16.mxu0 0
            %1918 = vmatmul.mubr.bf16.gmra.mxu0 %v1883
            %v1919 = vpop.f32.mrf.mxu0
            %v1920 = vadd.f32 0.0, %v1919
            %v1921 = vpop.f32.mrf.mxu0
            %v1922 = vpop.f32.mrf.mxu0
            %v1923 = vadd.f32 0.0, %v1922
            %v1924 = vpop.f32.mrf.mxu0
            %1925 = vdwg.mxu0
            %v1926 = vadd.f32 %v1836, %v1920
            %v1927 = vadd.f32 %v1837, %v1923
            %s1928 = smul.u32 %s227, 3
            %s1929 = smul.addr %s1928, 4
            %s1930 = scalar_lea.vmem %s209, %s1929
            %v1931 = vld [vmem:[%s1930] sm:$0xf]
            %v1932 = vld [vmem:[%s1930 + $0x4] sm:$0xf]
            %s1933 = scalar_lea.vmem %s1, 576
            %v1934 = vld [vmem:[%s1933] sm:$0xf]
            %v1935 = vld [vmem:[%s1933 + $0x4] sm:$0xf]
            %v1936 = vld [vmem:[%s1933 + $0x8] sm:$0xf]
            %v1937 = vld [vmem:[%s1933 + $0xc] sm:$0xf]
            %v1938 = vld [vmem:[%s1933 + $0x10] sm:$0xf]
            %v1939 = vld [vmem:[%s1933 + $0x14] sm:$0xf]
            %v1940 = vld [vmem:[%s1933 + $0x18] sm:$0xf]
            %v1941 = vld [vmem:[%s1933 + $0x1c] sm:$0xf]
            %v1944 = vunpack.c.l.b16 %v1931
            %v1945 = vunpack.c.l.b16 %v1932
            %v1946 = vpack.c.b16 %v1945, %v1944
            %v1955 = vunpack.c.l.b16 %v1934
            %v1956 = vunpack.c.l.b16 %v1935
            %v1957 = vunpack.c.l.b16 %v1936
            %v1958 = vunpack.c.l.b16 %v1937
            %v1959 = vunpack.c.l.b16 %v1938
            %v1960 = vunpack.c.l.b16 %v1939
            %v1961 = vunpack.c.l.b16 %v1940
            %v1962 = vunpack.c.l.b16 %v1941
            %v1963 = vpack.c.b16 %v1956, %v1955
            %v1964 = vpack.c.b16 %v1958, %v1957
            %v1965 = vpack.c.b16 %v1960, %v1959
            %v1966 = vpack.c.b16 %v1962, %v1961
            %v1972 = vsel %vm295, %v1946, 0
            %1974 = vmatprep.subr.bf16.mxu0 0
            %1975 = vmatpush1.bf16.msra.mxu0 0
            %1976 = vmatprep.subr.bf16.mxu0 0
            %1977 = vmatpush1.bf16.msra.mxu0 0
            %1978 = vmatprep.subr.bf16.mxu0 0
            %1979 = vmatpush1.bf16.msra.mxu0 0
            %1980 = vmatprep.subr.bf16.mxu0 0
            %1981 = vmatpush1.bf16.msra.mxu0 0
            %1982 = vmatprep.subr.bf16.mxu0 0
            %1983 = vmatpush1.bf16.msra.mxu0 %v1966
            %1984 = vmatprep.subr.bf16.mxu0 0
            %1985 = vmatpush1.bf16.msra.mxu0 %v1965
            %1986 = vmatprep.subr.bf16.mxu0 0
            %1987 = vmatpush1.bf16.msra.mxu0 %v1964
            %1988 = vmatprep.subr.bf16.mxu0 0
            %1989 = vmatpush1.bf16.msra.mxu0 %v1963
            %1990 = vmatprep.subr.bf16.mxu0 0
            %1991 = vmatpush2.bf16.msra.mxu0 0
            %1992 = vmatprep.subr.bf16.mxu0 0
            %1993 = vmatpush2.bf16.msra.mxu0 0
            %1994 = vmatprep.subr.bf16.mxu0 0
            %1995 = vmatpush2.bf16.msra.mxu0 0
            %1996 = vmatprep.subr.bf16.mxu0 0
            %1997 = vmatpush2.bf16.msra.mxu0 0
            %1998 = vmatprep.subr.bf16.mxu0 0
            %1999 = vmatpush2.bf16.msra.mxu0 0
            %2000 = vmatprep.subr.bf16.mxu0 0
            %2001 = vmatpush2.bf16.msra.mxu0 0
            %2002 = vmatprep.subr.bf16.mxu0 0
            %2003 = vmatpush2.bf16.msra.mxu0 0
            %2004 = vmatprep.subr.bf16.mxu0 0
            %2005 = vmatpush2.bf16.msra.mxu0 0
            %2006 = vmatprep.mubr.bf16.mxu0 0
            %2007 = vmatmul.mubr.bf16.gmra.mxu0 %v1972
            %v2008 = vpop.f32.mrf.mxu0
            %v2009 = vadd.f32 0.0, %v2008
            %v2010 = vpop.f32.mrf.mxu0
            %v2011 = vpop.f32.mrf.mxu0
            %v2012 = vadd.f32 0.0, %v2011
            %v2013 = vpop.f32.mrf.mxu0
            %2014 = vdwg.mxu0
            %v2015 = vadd.f32 %v1926, %v2009
            %v2016 = vadd.f32 %v1927, %v2012
            %v2017 = vld [vmem:[%s1930] sm:$0xc]
            %v2018 = vld [vmem:[%s1930 + $0x4] sm:$0xf]
            %v2019 = vld [vmem:[%s1930 + $0x8] sm:$0x3]
            %s2020 = scalar_lea.vmem %s1, 608
            %v2021 = vld [vmem:[%s2020] sm:$0xf]
            %v2022 = vld [vmem:[%s2020 + $0x4] sm:$0xf]
            %v2023 = vld [vmem:[%s2020 + $0x8] sm:$0xf]
            %v2024 = vld [vmem:[%s2020 + $0xc] sm:$0xf]
            %v2025 = vld [vmem:[%s2020 + $0x10] sm:$0xf]
            %v2026 = vld [vmem:[%s2020 + $0x14] sm:$0xf]
            %v2027 = vld [vmem:[%s2020 + $0x18] sm:$0xf]
            %v2028 = vld [vmem:[%s2020 + $0x1c] sm:$0xf]
            %v2032 = vunpack.c.l.b16 %v2017
            %v2033 = vunpack.c.l.b16 %v2018
            %v2034 = vunpack.c.l.b16 %v2019
            %v2035 = vpack.c.b16 %v2033, %v2032
            %v2036 = vpack.c.b16 %v2034, %v2034
            %v2037 = vrot.slane %v2035, 2
            %v2038 = vrot.slane %v2036, 2
            %v2039 = vsel %vm267, %v2037, %v2038
            %v2048 = vunpack.c.l.b16 %v2021
            %v2049 = vunpack.c.l.b16 %v2022
            %v2050 = vunpack.c.l.b16 %v2023
            %v2051 = vunpack.c.l.b16 %v2024
            %v2052 = vunpack.c.l.b16 %v2025
            %v2053 = vunpack.c.l.b16 %v2026
            %v2054 = vunpack.c.l.b16 %v2027
            %v2055 = vunpack.c.l.b16 %v2028
            %v2056 = vpack.c.b16 %v2049, %v2048
            %v2057 = vpack.c.b16 %v2051, %v2050
            %v2058 = vpack.c.b16 %v2053, %v2052
            %v2059 = vpack.c.b16 %v2055, %v2054
            %v2065 = vsel %vm295, %v2039, 0
            %2067 = vmatprep.subr.bf16.mxu0 0
            %2068 = vmatpush1.bf16.msra.mxu0 0
            %2069 = vmatprep.subr.bf16.mxu0 0
            %2070 = vmatpush1.bf16.msra.mxu0 0
            %2071 = vmatprep.subr.bf16.mxu0 0
            %2072 = vmatpush1.bf16.msra.mxu0 0
            %2073 = vmatprep.subr.bf16.mxu0 0
            %2074 = vmatpush1.bf16.msra.mxu0 0
            %2075 = vmatprep.subr.bf16.mxu0 0
            %2076 = vmatpush1.bf16.msra.mxu0 %v2059
            %2077 = vmatprep.subr.bf16.mxu0 0
            %2078 = vmatpush1.bf16.msra.mxu0 %v2058
            %2079 = vmatprep.subr.bf16.mxu0 0
            %2080 = vmatpush1.bf16.msra.mxu0 %v2057
            %2081 = vmatprep.subr.bf16.mxu0 0
            %2082 = vmatpush1.bf16.msra.mxu0 %v2056
            %2083 = vmatprep.subr.bf16.mxu0 0
            %2084 = vmatpush2.bf16.msra.mxu0 0
            %2085 = vmatprep.subr.bf16.mxu0 0
            %2086 = vmatpush2.bf16.msra.mxu0 0
            %2087 = vmatprep.subr.bf16.mxu0 0
            %2088 = vmatpush2.bf16.msra.mxu0 0
            %2089 = vmatprep.subr.bf16.mxu0 0
            %2090 = vmatpush2.bf16.msra.mxu0 0
            %2091 = vmatprep.subr.bf16.mxu0 0
            %2092 = vmatpush2.bf16.msra.mxu0 0
            %2093 = vmatprep.subr.bf16.mxu0 0
            %2094 = vmatpush2.bf16.msra.mxu0 0
            %2095 = vmatprep.subr.bf16.mxu0 0
            %2096 = vmatpush2.bf16.msra.mxu0 0
            %2097 = vmatprep.subr.bf16.mxu0 0
            %2098 = vmatpush2.bf16.msra.mxu0 0
            %2099 = vmatprep.mubr.bf16.mxu0 0
            %2100 = vmatmul.mubr.bf16.gmra.mxu0 %v2065
            %v2101 = vpop.f32.mrf.mxu0
            %v2102 = vadd.f32 0.0, %v2101
            %v2103 = vpop.f32.mrf.mxu0
            %v2104 = vpop.f32.mrf.mxu0
            %v2105 = vadd.f32 0.0, %v2104
            %v2106 = vpop.f32.mrf.mxu0
            %2107 = vdwg.mxu0
            %v2108 = vadd.f32 %v2015, %v2102
            %v2109 = vadd.f32 %v2016, %v2105
            %v2110 = vld [vmem:[%s1930 + $0x8] sm:$0xf]
            %s2111 = scalar_lea.vmem %s1, 640
            %v2112 = vld [vmem:[%s2111] sm:$0xf]
            %v2113 = vld [vmem:[%s2111 + $0x4] sm:$0xf]
            %v2114 = vld [vmem:[%s2111 + $0x8] sm:$0xf]
            %v2115 = vld [vmem:[%s2111 + $0xc] sm:$0xf]
            %v2116 = vld [vmem:[%s2111 + $0x10] sm:$0xf]
            %v2117 = vld [vmem:[%s2111 + $0x14] sm:$0xf]
            %v2118 = vld [vmem:[%s2111 + $0x18] sm:$0xf]
            %v2119 = vld [vmem:[%s2111 + $0x1c] sm:$0xf]
            %v2121 = vunpack.c.l.b16 %v2110
            %v2122 = vpack.c.b16 %v2121, %v2033
            %v2131 = vunpack.c.l.b16 %v2112
            %v2132 = vunpack.c.l.b16 %v2113
            %v2133 = vunpack.c.l.b16 %v2114
            %v2134 = vunpack.c.l.b16 %v2115
            %v2135 = vunpack.c.l.b16 %v2116
            %v2136 = vunpack.c.l.b16 %v2117
            %v2137 = vunpack.c.l.b16 %v2118
            %v2138 = vunpack.c.l.b16 %v2119
            %v2139 = vpack.c.b16 %v2132, %v2131
            %v2140 = vpack.c.b16 %v2134, %v2133
            %v2141 = vpack.c.b16 %v2136, %v2135
            %v2142 = vpack.c.b16 %v2138, %v2137
            %v2148 = vsel %vm295, %v2122, 0
            %2150 = vmatprep.subr.bf16.mxu0 0
            %2151 = vmatpush1.bf16.msra.mxu0 0
            %2152 = vmatprep.subr.bf16.mxu0 0
            %2153 = vmatpush1.bf16.msra.mxu0 0
            %2154 = vmatprep.subr.bf16.mxu0 0
            %2155 = vmatpush1.bf16.msra.mxu0 0
            %2156 = vmatprep.subr.bf16.mxu0 0
            %2157 = vmatpush1.bf16.msra.mxu0 0
            %2158 = vmatprep.subr.bf16.mxu0 0
            %2159 = vmatpush1.bf16.msra.mxu0 %v2142
            %2160 = vmatprep.subr.bf16.mxu0 0
            %2161 = vmatpush1.bf16.msra.mxu0 %v2141
            %2162 = vmatprep.subr.bf16.mxu0 0
            %2163 = vmatpush1.bf16.msra.mxu0 %v2140
            %2164 = vmatprep.subr.bf16.mxu0 0
            %2165 = vmatpush1.bf16.msra.mxu0 %v2139
            %2166 = vmatprep.subr.bf16.mxu0 0
            %2167 = vmatpush2.bf16.msra.mxu0 0
            %2168 = vmatprep.subr.bf16.mxu0 0
            %2169 = vmatpush2.bf16.msra.mxu0 0
            %2170 = vmatprep.subr.bf16.mxu0 0
            %2171 = vmatpush2.bf16.msra.mxu0 0
            %2172 = vmatprep.subr.bf16.mxu0 0
            %2173 = vmatpush2.bf16.msra.mxu0 0
            %2174 = vmatprep.subr.bf16.mxu0 0
            %2175 = vmatpush2.bf16.msra.mxu0 0
            %2176 = vmatprep.subr.bf16.mxu0 0
            %2177 = vmatpush2.bf16.msra.mxu0 0
            %2178 = vmatprep.subr.bf16.mxu0 0
            %2179 = vmatpush2.bf16.msra.mxu0 0
            %2180 = vmatprep.subr.bf16.mxu0 0
            %2181 = vmatpush2.bf16.msra.mxu0 0
            %2182 = vmatprep.mubr.bf16.mxu0 0
            %2183 = vmatmul.mubr.bf16.gmra.mxu0 %v2148
            %v2184 = vpop.f32.mrf.mxu0
            %v2185 = vadd.f32 0.0, %v2184
            %v2186 = vpop.f32.mrf.mxu0
            %v2187 = vpop.f32.mrf.mxu0
            %v2188 = vadd.f32 0.0, %v2187
            %v2189 = vpop.f32.mrf.mxu0
            %2190 = vdwg.mxu0
            %v2191 = vadd.f32 %v2108, %v2185
            %v2192 = vadd.f32 %v2109, %v2188
            %v2193 = vld [vmem:[%s533] sm:$0xf]
            %v2194 = vld [vmem:[%s533 + $0x4] sm:$0xf]
            %s2195 = scalar_lea.vmem %s1, 672
            %v2196 = vld [vmem:[%s2195] sm:$0xf]
            %v2197 = vld [vmem:[%s2195 + $0x4] sm:$0xf]
            %v2198 = vld [vmem:[%s2195 + $0x8] sm:$0xf]
            %v2199 = vld [vmem:[%s2195 + $0xc] sm:$0xf]
            %v2200 = vld [vmem:[%s2195 + $0x10] sm:$0xf]
            %v2201 = vld [vmem:[%s2195 + $0x14] sm:$0xf]
            %v2202 = vld [vmem:[%s2195 + $0x18] sm:$0xf]
            %v2203 = vld [vmem:[%s2195 + $0x1c] sm:$0xf]
            %v2206 = vunpack.c.l.b16 %v2193
            %v2207 = vunpack.c.l.b16 %v2194
            %v2208 = vpack.c.b16 %v2207, %v2206
            %v2217 = vunpack.c.l.b16 %v2196
            %v2218 = vunpack.c.l.b16 %v2197
            %v2219 = vunpack.c.l.b16 %v2198
            %v2220 = vunpack.c.l.b16 %v2199
            %v2221 = vunpack.c.l.b16 %v2200
            %v2222 = vunpack.c.l.b16 %v2201
            %v2223 = vunpack.c.l.b16 %v2202
            %v2224 = vunpack.c.l.b16 %v2203
            %v2225 = vpack.c.b16 %v2218, %v2217
            %v2226 = vpack.c.b16 %v2220, %v2219
            %v2227 = vpack.c.b16 %v2222, %v2221
            %v2228 = vpack.c.b16 %v2224, %v2223
            %v2234 = vsel %vm295, %v2208, 0
            %2236 = vmatprep.subr.bf16.mxu0 0
            %2237 = vmatpush1.bf16.msra.mxu0 0
            %2238 = vmatprep.subr.bf16.mxu0 0
            %2239 = vmatpush1.bf16.msra.mxu0 0
            %2240 = vmatprep.subr.bf16.mxu0 0
            %2241 = vmatpush1.bf16.msra.mxu0 0
            %2242 = vmatprep.subr.bf16.mxu0 0
            %2243 = vmatpush1.bf16.msra.mxu0 0
            %2244 = vmatprep.subr.bf16.mxu0 0
            %2245 = vmatpush1.bf16.msra.mxu0 %v2228
            %2246 = vmatprep.subr.bf16.mxu0 0
            %2247 = vmatpush1.bf16.msra.mxu0 %v2227
            %2248 = vmatprep.subr.bf16.mxu0 0
            %2249 = vmatpush1.bf16.msra.mxu0 %v2226
            %2250 = vmatprep.subr.bf16.mxu0 0
            %2251 = vmatpush1.bf16.msra.mxu0 %v2225
            %2252 = vmatprep.subr.bf16.mxu0 0
            %2253 = vmatpush2.bf16.msra.mxu0 0
            %2254 = vmatprep.subr.bf16.mxu0 0
            %2255 = vmatpush2.bf16.msra.mxu0 0
            %2256 = vmatprep.subr.bf16.mxu0 0
            %2257 = vmatpush2.bf16.msra.mxu0 0
            %2258 = vmatprep.subr.bf16.mxu0 0
            %2259 = vmatpush2.bf16.msra.mxu0 0
            %2260 = vmatprep.subr.bf16.mxu0 0
            %2261 = vmatpush2.bf16.msra.mxu0 0
            %2262 = vmatprep.subr.bf16.mxu0 0
            %2263 = vmatpush2.bf16.msra.mxu0 0
            %2264 = vmatprep.subr.bf16.mxu0 0
            %2265 = vmatpush2.bf16.msra.mxu0 0
            %2266 = vmatprep.subr.bf16.mxu0 0
            %2267 = vmatpush2.bf16.msra.mxu0 0
            %2268 = vmatprep.mubr.bf16.mxu0 0
            %2269 = vmatmul.mubr.bf16.gmra.mxu0 %v2234
            %v2270 = vpop.f32.mrf.mxu0
            %v2271 = vadd.f32 0.0, %v2270
            %v2272 = vpop.f32.mrf.mxu0
            %v2273 = vpop.f32.mrf.mxu0
            %v2274 = vadd.f32 0.0, %v2273
            %v2275 = vpop.f32.mrf.mxu0
            %2276 = vdwg.mxu0
            %v2277 = vadd.f32 %v2191, %v2271
            %v2278 = vadd.f32 %v2192, %v2274
            %s2279 = scalar_lea.vmem %s1, 704
            %v2280 = vld [vmem:[%s2279] sm:$0xf]
            %v2281 = vld [vmem:[%s2279 + $0x4] sm:$0xf]
            %v2282 = vld [vmem:[%s2279 + $0x8] sm:$0xf]
            %v2283 = vld [vmem:[%s2279 + $0xc] sm:$0xf]
            %v2284 = vld [vmem:[%s2279 + $0x10] sm:$0xf]
            %v2285 = vld [vmem:[%s2279 + $0x14] sm:$0xf]
            %v2286 = vld [vmem:[%s2279 + $0x18] sm:$0xf]
            %v2287 = vld [vmem:[%s2279 + $0x1c] sm:$0xf]
            %v2296 = vunpack.c.l.b16 %v2280
            %v2297 = vunpack.c.l.b16 %v2281
            %v2298 = vunpack.c.l.b16 %v2282
            %v2299 = vunpack.c.l.b16 %v2283
            %v2300 = vunpack.c.l.b16 %v2284
            %v2301 = vunpack.c.l.b16 %v2285
            %v2302 = vunpack.c.l.b16 %v2286
            %v2303 = vunpack.c.l.b16 %v2287
            %v2304 = vpack.c.b16 %v2297, %v2296
            %v2305 = vpack.c.b16 %v2299, %v2298
            %v2306 = vpack.c.b16 %v2301, %v2300
            %v2307 = vpack.c.b16 %v2303, %v2302
            %2312 = vmatprep.subr.bf16.mxu0 0
            %2313 = vmatpush1.bf16.msra.mxu0 0
            %2314 = vmatprep.subr.bf16.mxu0 0
            %2315 = vmatpush1.bf16.msra.mxu0 0
            %2316 = vmatprep.subr.bf16.mxu0 0
            %2317 = vmatpush1.bf16.msra.mxu0 0
            %2318 = vmatprep.subr.bf16.mxu0 0
            %2319 = vmatpush1.bf16.msra.mxu0 0
            %2320 = vmatprep.subr.bf16.mxu0 0
            %2321 = vmatpush1.bf16.msra.mxu0 %v2307
            %2322 = vmatprep.subr.bf16.mxu0 0
            %2323 = vmatpush1.bf16.msra.mxu0 %v2306
            %2324 = vmatprep.subr.bf16.mxu0 0
            %2325 = vmatpush1.bf16.msra.mxu0 %v2305
            %2326 = vmatprep.subr.bf16.mxu0 0
            %2327 = vmatpush1.bf16.msra.mxu0 %v2304
            %2328 = vmatprep.subr.bf16.mxu0 0
            %2329 = vmatpush2.bf16.msra.mxu0 0
            %2330 = vmatprep.subr.bf16.mxu0 0
            %2331 = vmatpush2.bf16.msra.mxu0 0
            %2332 = vmatprep.subr.bf16.mxu0 0
            %2333 = vmatpush2.bf16.msra.mxu0 0
            %2334 = vmatprep.subr.bf16.mxu0 0
            %2335 = vmatpush2.bf16.msra.mxu0 0
            %2336 = vmatprep.subr.bf16.mxu0 0
            %2337 = vmatpush2.bf16.msra.mxu0 0
            %2338 = vmatprep.subr.bf16.mxu0 0
            %2339 = vmatpush2.bf16.msra.mxu0 0
            %2340 = vmatprep.subr.bf16.mxu0 0
            %2341 = vmatpush2.bf16.msra.mxu0 0
            %2342 = vmatprep.subr.bf16.mxu0 0
            %2343 = vmatpush2.bf16.msra.mxu0 0
            %2344 = vmatprep.mubr.bf16.mxu0 0
            %2345 = vmatmul.mubr.bf16.gmra.mxu0 %v682
            %v2346 = vpop.f32.mrf.mxu0
            %v2347 = vadd.f32 0.0, %v2346
            %v2348 = vpop.f32.mrf.mxu0
            %v2349 = vpop.f32.mrf.mxu0
            %v2350 = vadd.f32 0.0, %v2349
            %v2351 = vpop.f32.mrf.mxu0
            %2352 = vdwg.mxu0
            %v2353 = vadd.f32 %v2277, %v2347
            %v2354 = vadd.f32 %v2278, %v2350
            %v2355 = vld [vmem:[%s533 + $0x8] sm:$0xf]
            %s2356 = scalar_lea.vmem %s1, 736
            %v2357 = vld [vmem:[%s2356] sm:$0xf]
            %v2358 = vld [vmem:[%s2356 + $0x4] sm:$0xf]
            %v2359 = vld [vmem:[%s2356 + $0x8] sm:$0xf]
            %v2360 = vld [vmem:[%s2356 + $0xc] sm:$0xf]
            %v2361 = vld [vmem:[%s2356 + $0x10] sm:$0xf]
            %v2362 = vld [vmem:[%s2356 + $0x14] sm:$0xf]
            %v2363 = vld [vmem:[%s2356 + $0x18] sm:$0xf]
            %v2364 = vld [vmem:[%s2356 + $0x1c] sm:$0xf]
            %v2366 = vunpack.c.l.b16 %v2355
            %v2367 = vpack.c.b16 %v2366, %v550
            %v2376 = vunpack.c.l.b16 %v2357
            %v2377 = vunpack.c.l.b16 %v2358
            %v2378 = vunpack.c.l.b16 %v2359
            %v2379 = vunpack.c.l.b16 %v2360
            %v2380 = vunpack.c.l.b16 %v2361
            %v2381 = vunpack.c.l.b16 %v2362
            %v2382 = vunpack.c.l.b16 %v2363
            %v2383 = vunpack.c.l.b16 %v2364
            %v2384 = vpack.c.b16 %v2377, %v2376
            %v2385 = vpack.c.b16 %v2379, %v2378
            %v2386 = vpack.c.b16 %v2381, %v2380
            %v2387 = vpack.c.b16 %v2383, %v2382
            %v2393 = vsel %vm295, %v2367, 0
            %2395 = vmatprep.subr.bf16.mxu0 0
            %2396 = vmatpush1.bf16.msra.mxu0 0
            %2397 = vmatprep.subr.bf16.mxu0 0
            %2398 = vmatpush1.bf16.msra.mxu0 0
            %2399 = vmatprep.subr.bf16.mxu0 0
            %2400 = vmatpush1.bf16.msra.mxu0 0
            %2401 = vmatprep.subr.bf16.mxu0 0
            %2402 = vmatpush1.bf16.msra.mxu0 0
            %2403 = vmatprep.subr.bf16.mxu0 0
            %2404 = vmatpush1.bf16.msra.mxu0 %v2387
            %2405 = vmatprep.subr.bf16.mxu0 0
            %2406 = vmatpush1.bf16.msra.mxu0 %v2386
            %2407 = vmatprep.subr.bf16.mxu0 0
            %2408 = vmatpush1.bf16.msra.mxu0 %v2385
            %2409 = vmatprep.subr.bf16.mxu0 0
            %2410 = vmatpush1.bf16.msra.mxu0 %v2384
            %2411 = vmatprep.subr.bf16.mxu0 0
            %2412 = vmatpush2.bf16.msra.mxu0 0
            %2413 = vmatprep.subr.bf16.mxu0 0
            %2414 = vmatpush2.bf16.msra.mxu0 0
            %2415 = vmatprep.subr.bf16.mxu0 0
            %2416 = vmatpush2.bf16.msra.mxu0 0
            %2417 = vmatprep.subr.bf16.mxu0 0
            %2418 = vmatpush2.bf16.msra.mxu0 0
            %2419 = vmatprep.subr.bf16.mxu0 0
            %2420 = vmatpush2.bf16.msra.mxu0 0
            %2421 = vmatprep.subr.bf16.mxu0 0
            %2422 = vmatpush2.bf16.msra.mxu0 0
            %2423 = vmatprep.subr.bf16.mxu0 0
            %2424 = vmatpush2.bf16.msra.mxu0 0
            %2425 = vmatprep.subr.bf16.mxu0 0
            %2426 = vmatpush2.bf16.msra.mxu0 0
            %2427 = vmatprep.mubr.bf16.mxu0 0
            %2428 = vmatmul.mubr.bf16.gmra.mxu0 %v2393
            %v2429 = vpop.f32.mrf.mxu0
            %v2430 = vadd.f32 0.0, %v2429
            %v2431 = vpop.f32.mrf.mxu0
            %v2432 = vpop.f32.mrf.mxu0
            %v2433 = vadd.f32 0.0, %v2432
            %v2434 = vpop.f32.mrf.mxu0
            %2435 = vdwg.mxu0
            %v2436 = vadd.f32 %v2353, %v2430
            %v2437 = vadd.f32 %v2354, %v2433
            %s2438 = sadd.s32 %s227, 8
            %s2439 = smul.u32 %s2438, 3
            %s2440 = smul.addr %s2439, 4
            %s2441 = scalar_lea.vmem %s209, %s2440
            %v2442 = vld [vmem:[%s2441] sm:$0xf]
            %v2443 = vld [vmem:[%s2441 + $0x4] sm:$0xf]
            %s2444 = scalar_lea.vmem %s1, 768
            %v2445 = vld [vmem:[%s2444] sm:$0xf]
            %v2446 = vld [vmem:[%s2444 + $0x4] sm:$0xf]
            %v2447 = vld [vmem:[%s2444 + $0x8] sm:$0xf]
            %v2448 = vld [vmem:[%s2444 + $0xc] sm:$0xf]
            %v2449 = vld [vmem:[%s2444 + $0x10] sm:$0xf]
            %v2450 = vld [vmem:[%s2444 + $0x14] sm:$0xf]
            %v2451 = vld [vmem:[%s2444 + $0x18] sm:$0xf]
            %v2452 = vld [vmem:[%s2444 + $0x1c] sm:$0xf]
            %v2455 = vunpack.c.l.b16 %v2442
            %v2456 = vunpack.c.l.b16 %v2443
            %v2457 = vpack.c.b16 %v2456, %v2455
            %v2466 = vunpack.c.l.b16 %v2445
            %v2467 = vunpack.c.l.b16 %v2446
            %v2468 = vunpack.c.l.b16 %v2447
            %v2469 = vunpack.c.l.b16 %v2448
            %v2470 = vunpack.c.l.b16 %v2449
            %v2471 = vunpack.c.l.b16 %v2450
            %v2472 = vunpack.c.l.b16 %v2451
            %v2473 = vunpack.c.l.b16 %v2452
            %v2474 = vpack.c.b16 %v2467, %v2466
            %v2475 = vpack.c.b16 %v2469, %v2468
            %v2476 = vpack.c.b16 %v2471, %v2470
            %v2477 = vpack.c.b16 %v2473, %v2472
            %v2483 = vsel %vm295, %v2457, 0
            %2485 = vmatprep.subr.bf16.mxu0 0
            %2486 = vmatpush1.bf16.msra.mxu0 0
            %2487 = vmatprep.subr.bf16.mxu0 0
            %2488 = vmatpush1.bf16.msra.mxu0 0
            %2489 = vmatprep.subr.bf16.mxu0 0
            %2490 = vmatpush1.bf16.msra.mxu0 0
            %2491 = vmatprep.subr.bf16.mxu0 0
            %2492 = vmatpush1.bf16.msra.mxu0 0
            %2493 = vmatprep.subr.bf16.mxu0 0
            %2494 = vmatpush1.bf16.msra.mxu0 %v2477
            %2495 = vmatprep.subr.bf16.mxu0 0
            %2496 = vmatpush1.bf16.msra.mxu0 %v2476
            %2497 = vmatprep.subr.bf16.mxu0 0
            %2498 = vmatpush1.bf16.msra.mxu0 %v2475
            %2499 = vmatprep.subr.bf16.mxu0 0
            %2500 = vmatpush1.bf16.msra.mxu0 %v2474
            %2501 = vmatprep.subr.bf16.mxu0 0
            %2502 = vmatpush2.bf16.msra.mxu0 0
            %2503 = vmatprep.subr.bf16.mxu0 0
            %2504 = vmatpush2.bf16.msra.mxu0 0
            %2505 = vmatprep.subr.bf16.mxu0 0
            %2506 = vmatpush2.bf16.msra.mxu0 0
            %2507 = vmatprep.subr.bf16.mxu0 0
            %2508 = vmatpush2.bf16.msra.mxu0 0
            %2509 = vmatprep.subr.bf16.mxu0 0
            %2510 = vmatpush2.bf16.msra.mxu0 0
            %2511 = vmatprep.subr.bf16.mxu0 0
            %2512 = vmatpush2.bf16.msra.mxu0 0
            %2513 = vmatprep.subr.bf16.mxu0 0
            %2514 = vmatpush2.bf16.msra.mxu0 0
            %2515 = vmatprep.subr.bf16.mxu0 0
            %2516 = vmatpush2.bf16.msra.mxu0 0
            %2517 = vmatprep.mubr.bf16.mxu0 0
            %2518 = vmatmul.mubr.bf16.gmra.mxu0 %v2483
            %v2519 = vpop.f32.mrf.mxu0
            %v2520 = vadd.f32 0.0, %v2519
            %v2521 = vpop.f32.mrf.mxu0
            %v2522 = vpop.f32.mrf.mxu0
            %v2523 = vadd.f32 0.0, %v2522
            %v2524 = vpop.f32.mrf.mxu0
            %2525 = vdwg.mxu0
            %v2526 = vadd.f32 %v2436, %v2520
            %v2527 = vadd.f32 %v2437, %v2523
            %v2528 = vld [vmem:[%s2441] sm:$0xc]
            %v2529 = vld [vmem:[%s2441 + $0x4] sm:$0xf]
            %v2530 = vld [vmem:[%s2441 + $0x8] sm:$0x3]
            %s2531 = scalar_lea.vmem %s1, 800
            %v2532 = vld [vmem:[%s2531] sm:$0xf]
            %v2533 = vld [vmem:[%s2531 + $0x4] sm:$0xf]
            %v2534 = vld [vmem:[%s2531 + $0x8] sm:$0xf]
            %v2535 = vld [vmem:[%s2531 + $0xc] sm:$0xf]
            %v2536 = vld [vmem:[%s2531 + $0x10] sm:$0xf]
            %v2537 = vld [vmem:[%s2531 + $0x14] sm:$0xf]
            %v2538 = vld [vmem:[%s2531 + $0x18] sm:$0xf]
            %v2539 = vld [vmem:[%s2531 + $0x1c] sm:$0xf]
            %v2543 = vunpack.c.l.b16 %v2528
            %v2544 = vunpack.c.l.b16 %v2529
            %v2545 = vunpack.c.l.b16 %v2530
            %v2546 = vpack.c.b16 %v2544, %v2543
            %v2547 = vpack.c.b16 %v2545, %v2545
            %v2548 = vrot.slane %v2546, 2
            %v2549 = vrot.slane %v2547, 2
            %v2550 = vsel %vm267, %v2548, %v2549
            %v2559 = vunpack.c.l.b16 %v2532
            %v2560 = vunpack.c.l.b16 %v2533
            %v2561 = vunpack.c.l.b16 %v2534
            %v2562 = vunpack.c.l.b16 %v2535
            %v2563 = vunpack.c.l.b16 %v2536
            %v2564 = vunpack.c.l.b16 %v2537
            %v2565 = vunpack.c.l.b16 %v2538
            %v2566 = vunpack.c.l.b16 %v2539
            %v2567 = vpack.c.b16 %v2560, %v2559
            %v2568 = vpack.c.b16 %v2562, %v2561
            %v2569 = vpack.c.b16 %v2564, %v2563
            %v2570 = vpack.c.b16 %v2566, %v2565
            %v2576 = vsel %vm295, %v2550, 0
            %2578 = vmatprep.subr.bf16.mxu0 0
            %2579 = vmatpush1.bf16.msra.mxu0 0
            %2580 = vmatprep.subr.bf16.mxu0 0
            %2581 = vmatpush1.bf16.msra.mxu0 0
            %2582 = vmatprep.subr.bf16.mxu0 0
            %2583 = vmatpush1.bf16.msra.mxu0 0
            %2584 = vmatprep.subr.bf16.mxu0 0
            %2585 = vmatpush1.bf16.msra.mxu0 0
            %2586 = vmatprep.subr.bf16.mxu0 0
            %2587 = vmatpush1.bf16.msra.mxu0 %v2570
            %2588 = vmatprep.subr.bf16.mxu0 0
            %2589 = vmatpush1.bf16.msra.mxu0 %v2569
            %2590 = vmatprep.subr.bf16.mxu0 0
            %2591 = vmatpush1.bf16.msra.mxu0 %v2568
            %2592 = vmatprep.subr.bf16.mxu0 0
            %2593 = vmatpush1.bf16.msra.mxu0 %v2567
            %2594 = vmatprep.subr.bf16.mxu0 0
            %2595 = vmatpush2.bf16.msra.mxu0 0
            %2596 = vmatprep.subr.bf16.mxu0 0
            %2597 = vmatpush2.bf16.msra.mxu0 0
            %2598 = vmatprep.subr.bf16.mxu0 0
            %2599 = vmatpush2.bf16.msra.mxu0 0
            %2600 = vmatprep.subr.bf16.mxu0 0
            %2601 = vmatpush2.bf16.msra.mxu0 0
            %2602 = vmatprep.subr.bf16.mxu0 0
            %2603 = vmatpush2.bf16.msra.mxu0 0
            %2604 = vmatprep.subr.bf16.mxu0 0
            %2605 = vmatpush2.bf16.msra.mxu0 0
            %2606 = vmatprep.subr.bf16.mxu0 0
            %2607 = vmatpush2.bf16.msra.mxu0 0
            %2608 = vmatprep.subr.bf16.mxu0 0
            %2609 = vmatpush2.bf16.msra.mxu0 0
            %2610 = vmatprep.mubr.bf16.mxu0 0
            %2611 = vmatmul.mubr.bf16.gmra.mxu0 %v2576
            %v2612 = vpop.f32.mrf.mxu0
            %v2613 = vadd.f32 0.0, %v2612
            %v2614 = vpop.f32.mrf.mxu0
            %v2615 = vpop.f32.mrf.mxu0
            %v2616 = vadd.f32 0.0, %v2615
            %v2617 = vpop.f32.mrf.mxu0
            %2618 = vdwg.mxu0
            %v2619 = vadd.f32 %v2526, %v2613
            %v2620 = vadd.f32 %v2527, %v2616
            %v2621 = vld [vmem:[%s2441 + $0x8] sm:$0xf]
            %s2622 = scalar_lea.vmem %s1, 832
            %v2623 = vld [vmem:[%s2622] sm:$0xf]
            %v2624 = vld [vmem:[%s2622 + $0x4] sm:$0xf]
            %v2625 = vld [vmem:[%s2622 + $0x8] sm:$0xf]
            %v2626 = vld [vmem:[%s2622 + $0xc] sm:$0xf]
            %v2627 = vld [vmem:[%s2622 + $0x10] sm:$0xf]
            %v2628 = vld [vmem:[%s2622 + $0x14] sm:$0xf]
            %v2629 = vld [vmem:[%s2622 + $0x18] sm:$0xf]
            %v2630 = vld [vmem:[%s2622 + $0x1c] sm:$0xf]
            %v2632 = vunpack.c.l.b16 %v2621
            %v2633 = vpack.c.b16 %v2632, %v2544
            %v2642 = vunpack.c.l.b16 %v2623
            %v2643 = vunpack.c.l.b16 %v2624
            %v2644 = vunpack.c.l.b16 %v2625
            %v2645 = vunpack.c.l.b16 %v2626
            %v2646 = vunpack.c.l.b16 %v2627
            %v2647 = vunpack.c.l.b16 %v2628
            %v2648 = vunpack.c.l.b16 %v2629
            %v2649 = vunpack.c.l.b16 %v2630
            %v2650 = vpack.c.b16 %v2643, %v2642
            %v2651 = vpack.c.b16 %v2645, %v2644
            %v2652 = vpack.c.b16 %v2647, %v2646
            %v2653 = vpack.c.b16 %v2649, %v2648
            %v2659 = vsel %vm295, %v2633, 0
            %2661 = vmatprep.subr.bf16.mxu0 0
            %2662 = vmatpush1.bf16.msra.mxu0 0
            %2663 = vmatprep.subr.bf16.mxu0 0
            %2664 = vmatpush1.bf16.msra.mxu0 0
            %2665 = vmatprep.subr.bf16.mxu0 0
            %2666 = vmatpush1.bf16.msra.mxu0 0
            %2667 = vmatprep.subr.bf16.mxu0 0
            %2668 = vmatpush1.bf16.msra.mxu0 0
            %2669 = vmatprep.subr.bf16.mxu0 0
            %2670 = vmatpush1.bf16.msra.mxu0 %v2653
            %2671 = vmatprep.subr.bf16.mxu0 0
            %2672 = vmatpush1.bf16.msra.mxu0 %v2652
            %2673 = vmatprep.subr.bf16.mxu0 0
            %2674 = vmatpush1.bf16.msra.mxu0 %v2651
            %2675 = vmatprep.subr.bf16.mxu0 0
            %2676 = vmatpush1.bf16.msra.mxu0 %v2650
            %2677 = vmatprep.subr.bf16.mxu0 0
            %2678 = vmatpush2.bf16.msra.mxu0 0
            %2679 = vmatprep.subr.bf16.mxu0 0
            %2680 = vmatpush2.bf16.msra.mxu0 0
            %2681 = vmatprep.subr.bf16.mxu0 0
            %2682 = vmatpush2.bf16.msra.mxu0 0
            %2683 = vmatprep.subr.bf16.mxu0 0
            %2684 = vmatpush2.bf16.msra.mxu0 0
            %2685 = vmatprep.subr.bf16.mxu0 0
            %2686 = vmatpush2.bf16.msra.mxu0 0
            %2687 = vmatprep.subr.bf16.mxu0 0
            %2688 = vmatpush2.bf16.msra.mxu0 0
            %2689 = vmatprep.subr.bf16.mxu0 0
            %2690 = vmatpush2.bf16.msra.mxu0 0
            %2691 = vmatprep.subr.bf16.mxu0 0
            %2692 = vmatpush2.bf16.msra.mxu0 0
            %2693 = vmatprep.mubr.bf16.mxu0 0
            %2694 = vmatmul.mubr.bf16.gmra.mxu0 %v2659
            %v2695 = vpop.f32.mrf.mxu0
            %v2696 = vadd.f32 0.0, %v2695
            %v2697 = vpop.f32.mrf.mxu0
            %v2698 = vpop.f32.mrf.mxu0
            %v2699 = vadd.f32 0.0, %v2698
            %v2700 = vpop.f32.mrf.mxu0
            %2701 = vdwg.mxu0
            %v2702 = vadd.f32 %v2619, %v2696
            %v2703 = vadd.f32 %v2620, %v2699
            %v2704 = vld [vmem:[%s2] sm:$0x1]
            %v2706 = vlaneseq
            %v2707 = vshrl.u32 %v2706, 7
            %v2708 = vsub.s32 0, %v2707
            %v2709 = vrot.slane %v2704, %v2708
            %v2711 = vadd.f32 %v2702, %v2709
            %v2712 = vadd.f32 %v2703, %v2709
            %2713 = vxpose.xlu0.b32.start [1/16] %v2711, 128
            %2714 = vxpose.xlu0.b32.cont [2/16] %v2712, 128
            %2715 = vxpose.xlu0.b32.cont [3/16] 0.0, 128
            %2716 = vxpose.xlu0.b32.cont [4/16] 0.0, 128
            %2717 = vxpose.xlu0.b32.cont [5/16] 0.0, 128
            %2718 = vxpose.xlu0.b32.cont [6/16] 0.0, 128
            %2719 = vxpose.xlu0.b32.cont [7/16] 0.0, 128
            %2720 = vxpose.xlu0.b32.cont [8/16] 0.0, 128
            %2721 = vxpose.xlu0.b32.cont [9/16] 0.0, 128
            %2722 = vxpose.xlu0.b32.cont [10/16] 0.0, 128
            %2723 = vxpose.xlu0.b32.cont [11/16] 0.0, 128
            %2724 = vxpose.xlu0.b32.cont [12/16] 0.0, 128
            %2725 = vxpose.xlu0.b32.cont [13/16] 0.0, 128
            %2726 = vxpose.xlu0.b32.cont [14/16] 0.0, 128
            %2727 = vxpose.xlu0.b32.cont [15/16] 0.0, 128
            %2728 = vxpose.xlu0.b32.end [16/16] 0.0, 128
            %v2729 = vpop.trf.xlu0
            %v2730 = vpop.trf.xlu0
            %v2731 = vpop.trf.xlu0
            %v2732 = vpop.trf.xlu0
            %v2733 = vpop.trf.xlu0
            %v2734 = vpop.trf.xlu0
            %v2735 = vpop.trf.xlu0
            %v2736 = vpop.trf.xlu0
            %v2737 = vpop.trf.xlu0
            %v2738 = vpop.trf.xlu0
            %v2739 = vpop.trf.xlu0
            %v2740 = vpop.trf.xlu0
            %v2741 = vpop.trf.xlu0
            %v2742 = vpop.trf.xlu0
            %v2743 = vpop.trf.xlu0
            %v2744 = vpop.trf.xlu0
            %2746 = vrot.lane.b32.xlu0 %v2729, 1
            %v2747 = vpop.permute.xlu0 %2746
            %s2749 = scalar_lea.vmem [#allocation2], %s221
            %vm2750 = vcmask 131080
            %2751 = vst.msk [vmem:[%s2749] sm:$0x1] %vm2750, %v2747
            %s2752 = sadd.s32 %s221, 16
            %s2753 = scalar_lea.vmem [#allocation2], %s2752
            %vm2754 = vcmask 132105
            %2755 = vst.msk [vmem:[%s2753 - $0x1] sm:$0x2] %vm2754, %v2747
            %s2756 = sadd.s32 %s221, 32
            %s2757 = scalar_lea.vmem [#allocation2], %s2756
            %vm2758 = vcmask 133130
            %2759 = vst.msk [vmem:[%s2757 - $0x2] sm:$0x4] %vm2758, %v2747
          $region47: #{hdro_forward.1} parent=40 // pred_fallthru
            _
        $region41: #{hdro_forward.1} parent=35 // loop_footer
          %s225 = sadd.s32 1, %s221
        $region42: #{hdro_forward.1} parent=35 // loop_footer_branch
          %220 = sbr.rel target = $region38
        $region43: #{hdro_forward.1} parent=35 // loop_exit
          _
        %v2760 = vld [vmem:[%s3] sm:$0x1]
        loop: start=0, step=1, limit=8
        $region48: #{hdro_forward.1} parent=35 // loop_pre_header
          _
        $region49: #{hdro_forward.1} parent=35 // loop_header
          %s2762 = sphi 0, %s2766
          %p2763 = scmp.ge.s32.totalorder %s2762, 8
        $region50: #{hdro_forward.1} parent=35 // loop_header_branch
          %2765 = sbr.rel (%p2763) target = $region54
        $region51: #{hdro_forward.1} parent=35 // loop_body
          %2768 = vset.pattern.permute.xlu0 27
          %2769 = vperm.xlu0 %2768, %v2760
          %v2770 = vpop.permute.xlu0 %2769
          %v2772 = vlaneseq
          %v2773 = vshrl.u32 %v2772, 7
          %v2774 = vsub.s32 0, %v2773
          %v2775 = vrot.slane %v2770, %v2774
          %v2776 = vadd.f32 %v2775, 0.0
          %s2777 = scalar_lea.vmem [#allocation2], %s2762
          %v2778 = vld [vmem:[%s2777] sm:$0x1]
          %2779 = vset.pattern.permute.xlu0 0
          %2780 = vperm.xlu0 %2779, %v2760
          %v2781 = vpop.permute.xlu0 %2780
          %v2783 = vlaneseq
          %v2784 = vshrl.u32 %v2783, 7
          %v2785 = vsub.s32 0, %v2784
          %v2786 = vrot.slane %v2781, %v2785
          %v2787 = vmul.f32 %v2786, %v2778
          %v2788 = vadd.f32 %v2776, %v2787
          %2789 = vset.pattern.permute.xlu0 1
          %2790 = vperm.xlu0 %2789, %v2760
          %v2791 = vpop.permute.xlu0 %2790
          %v2793 = vlaneseq
          %v2794 = vshrl.u32 %v2793, 7
          %v2795 = vsub.s32 0, %v2794
          %v2796 = vrot.slane %v2791, %v2795
          %v2797 = vmul.f32 %v2796, %v2778
          %2799 = vrot.lane.b32.xlu0 %v2797, 127
          %v2800 = vpop.permute.xlu0 %2799
          %v2802 = vadd.f32 %v2788, %v2800
          %2803 = vset.pattern.permute.xlu0 2
          %2804 = vperm.xlu0 %2803, %v2760
          %v2805 = vpop.permute.xlu0 %2804
          %v2807 = vlaneseq
          %v2808 = vshrl.u32 %v2807, 7
          %v2809 = vsub.s32 0, %v2808
          %v2810 = vrot.slane %v2805, %v2809
          %v2811 = vmul.f32 %v2810, %v2778
          %2813 = vrot.lane.b32.xlu0 %v2811, 126
          %v2814 = vpop.permute.xlu0 %2813
          %v2816 = vadd.f32 %v2802, %v2814
          %s2817 = sadd.s32 %s2762, 1
          %s2818 = scalar_lea.vmem [#allocation2], %s2817
          %v2819 = vld [vmem:[%s2818] sm:$0x1]
          %2820 = vset.pattern.permute.xlu0 3
          %2821 = vperm.xlu0 %2820, %v2760
          %v2822 = vpop.permute.xlu0 %2821
          %v2824 = vlaneseq
          %v2825 = vshrl.u32 %v2824, 7
          %v2826 = vsub.s32 0, %v2825
          %v2827 = vrot.slane %v2822, %v2826
          %v2828 = vmul.f32 %v2827, %v2819
          %v2829 = vadd.f32 %v2816, %v2828
          %2830 = vset.pattern.permute.xlu0 4
          %2831 = vperm.xlu0 %2830, %v2760
          %v2832 = vpop.permute.xlu0 %2831
          %v2834 = vlaneseq
          %v2835 = vshrl.u32 %v2834, 7
          %v2836 = vsub.s32 0, %v2835
          %v2837 = vrot.slane %v2832, %v2836
          %v2838 = vmul.f32 %v2837, %v2819
          %2840 = vrot.lane.b32.xlu0 %v2838, 127
          %v2841 = vpop.permute.xlu0 %2840
          %v2843 = vadd.f32 %v2829, %v2841
          %2844 = vset.pattern.permute.xlu0 5
          %2845 = vperm.xlu0 %2844, %v2760
          %v2846 = vpop.permute.xlu0 %2845
          %v2848 = vlaneseq
          %v2849 = vshrl.u32 %v2848, 7
          %v2850 = vsub.s32 0, %v2849
          %v2851 = vrot.slane %v2846, %v2850
          %v2852 = vmul.f32 %v2851, %v2819
          %2854 = vrot.lane.b32.xlu0 %v2852, 126
          %v2855 = vpop.permute.xlu0 %2854
          %v2857 = vadd.f32 %v2843, %v2855
          %s2858 = sadd.s32 %s2762, 2
          %s2859 = scalar_lea.vmem [#allocation2], %s2858
          %v2860 = vld [vmem:[%s2859] sm:$0x1]
          %2861 = vset.pattern.permute.xlu0 6
          %2862 = vperm.xlu0 %2861, %v2760
          %v2863 = vpop.permute.xlu0 %2862
          %v2865 = vlaneseq
          %v2866 = vshrl.u32 %v2865, 7
          %v2867 = vsub.s32 0, %v2866
          %v2868 = vrot.slane %v2863, %v2867
          %v2869 = vmul.f32 %v2868, %v2860
          %v2870 = vadd.f32 %v2857, %v2869
          %2871 = vset.pattern.permute.xlu0 7
          %2872 = vperm.xlu0 %2871, %v2760
          %v2873 = vpop.permute.xlu0 %2872
          %v2875 = vlaneseq
          %v2876 = vshrl.u32 %v2875, 7
          %v2877 = vsub.s32 0, %v2876
          %v2878 = vrot.slane %v2873, %v2877
          %v2879 = vmul.f32 %v2878, %v2860
          %2881 = vrot.lane.b32.xlu0 %v2879, 127
          %v2882 = vpop.permute.xlu0 %2881
          %v2884 = vadd.f32 %v2870, %v2882
          %2885 = vset.pattern.permute.xlu0 8
          %2886 = vperm.xlu0 %2885, %v2760
          %v2887 = vpop.permute.xlu0 %2886
          %v2889 = vlaneseq
          %v2890 = vshrl.u32 %v2889, 7
          %v2891 = vsub.s32 0, %v2890
          %v2892 = vrot.slane %v2887, %v2891
          %v2893 = vmul.f32 %v2892, %v2860
          %2895 = vrot.lane.b32.xlu0 %v2893, 126
          %v2896 = vpop.permute.xlu0 %2895
          %v2898 = vadd.f32 %v2884, %v2896
          %s2899 = sadd.s32 %s2762, 16
          %s2900 = scalar_lea.vmem [#allocation2], %s2899
          %v2901 = vld [vmem:[%s2900] sm:$0x1]
          %2902 = vset.pattern.permute.xlu0 9
          %2903 = vperm.xlu0 %2902, %v2760
          %v2904 = vpop.permute.xlu0 %2903
          %v2906 = vlaneseq
          %v2907 = vshrl.u32 %v2906, 7
          %v2908 = vsub.s32 0, %v2907
          %v2909 = vrot.slane %v2904, %v2908
          %v2910 = vmul.f32 %v2909, %v2901
          %v2911 = vadd.f32 %v2898, %v2910
          %2912 = vset.pattern.permute.xlu0 10
          %2913 = vperm.xlu0 %2912, %v2760
          %v2914 = vpop.permute.xlu0 %2913
          %v2916 = vlaneseq
          %v2917 = vshrl.u32 %v2916, 7
          %v2918 = vsub.s32 0, %v2917
          %v2919 = vrot.slane %v2914, %v2918
          %v2920 = vmul.f32 %v2919, %v2901
          %2922 = vrot.lane.b32.xlu0 %v2920, 127
          %v2923 = vpop.permute.xlu0 %2922
          %v2925 = vadd.f32 %v2911, %v2923
          %2926 = vset.pattern.permute.xlu0 11
          %2927 = vperm.xlu0 %2926, %v2760
          %v2928 = vpop.permute.xlu0 %2927
          %v2930 = vlaneseq
          %v2931 = vshrl.u32 %v2930, 7
          %v2932 = vsub.s32 0, %v2931
          %v2933 = vrot.slane %v2928, %v2932
          %v2934 = vmul.f32 %v2933, %v2901
          %2936 = vrot.lane.b32.xlu0 %v2934, 126
          %v2937 = vpop.permute.xlu0 %2936
          %v2939 = vadd.f32 %v2925, %v2937
          %s2940 = sadd.s32 %s2817, 16
          %s2941 = scalar_lea.vmem [#allocation2], %s2940
          %v2942 = vld [vmem:[%s2941] sm:$0x1]
          %2943 = vset.pattern.permute.xlu0 12
          %2944 = vperm.xlu0 %2943, %v2760
          %v2945 = vpop.permute.xlu0 %2944
          %v2947 = vlaneseq
          %v2948 = vshrl.u32 %v2947, 7
          %v2949 = vsub.s32 0, %v2948
          %v2950 = vrot.slane %v2945, %v2949
          %v2951 = vmul.f32 %v2950, %v2942
          %v2952 = vadd.f32 %v2939, %v2951
          %2953 = vset.pattern.permute.xlu0 13
          %2954 = vperm.xlu0 %2953, %v2760
          %v2955 = vpop.permute.xlu0 %2954
          %v2957 = vlaneseq
          %v2958 = vshrl.u32 %v2957, 7
          %v2959 = vsub.s32 0, %v2958
          %v2960 = vrot.slane %v2955, %v2959
          %v2961 = vmul.f32 %v2960, %v2942
          %2963 = vrot.lane.b32.xlu0 %v2961, 127
          %v2964 = vpop.permute.xlu0 %2963
          %v2966 = vadd.f32 %v2952, %v2964
          %2967 = vset.pattern.permute.xlu0 14
          %2968 = vperm.xlu0 %2967, %v2760
          %v2969 = vpop.permute.xlu0 %2968
          %v2971 = vlaneseq
          %v2972 = vshrl.u32 %v2971, 7
          %v2973 = vsub.s32 0, %v2972
          %v2974 = vrot.slane %v2969, %v2973
          %v2975 = vmul.f32 %v2974, %v2942
          %2977 = vrot.lane.b32.xlu0 %v2975, 126
          %v2978 = vpop.permute.xlu0 %2977
          %v2980 = vadd.f32 %v2966, %v2978
          %s2981 = sadd.s32 %s2858, 16
          %s2982 = scalar_lea.vmem [#allocation2], %s2981
          %v2983 = vld [vmem:[%s2982] sm:$0x1]
          %2984 = vset.pattern.permute.xlu0 15
          %2985 = vperm.xlu0 %2984, %v2760
          %v2986 = vpop.permute.xlu0 %2985
          %v2988 = vlaneseq
          %v2989 = vshrl.u32 %v2988, 7
          %v2990 = vsub.s32 0, %v2989
          %v2991 = vrot.slane %v2986, %v2990
          %v2992 = vmul.f32 %v2991, %v2983
          %v2993 = vadd.f32 %v2980, %v2992
          %2994 = vset.pattern.permute.xlu0 16
          %2995 = vperm.xlu0 %2994, %v2760
          %v2996 = vpop.permute.xlu0 %2995
          %v2998 = vlaneseq
          %v2999 = vshrl.u32 %v2998, 7
          %v3000 = vsub.s32 0, %v2999
          %v3001 = vrot.slane %v2996, %v3000
          %v3002 = vmul.f32 %v3001, %v2983
          %3004 = vrot.lane.b32.xlu0 %v3002, 127
          %v3005 = vpop.permute.xlu0 %3004
          %v3007 = vadd.f32 %v2993, %v3005
          %3008 = vset.pattern.permute.xlu0 17
          %3009 = vperm.xlu0 %3008, %v2760
          %v3010 = vpop.permute.xlu0 %3009
          %v3012 = vlaneseq
          %v3013 = vshrl.u32 %v3012, 7
          %v3014 = vsub.s32 0, %v3013
          %v3015 = vrot.slane %v3010, %v3014
          %v3016 = vmul.f32 %v3015, %v2983
          %3018 = vrot.lane.b32.xlu0 %v3016, 126
          %v3019 = vpop.permute.xlu0 %3018
          %v3021 = vadd.f32 %v3007, %v3019
          %s3022 = sadd.s32 %s2762, 32
          %s3023 = scalar_lea.vmem [#allocation2], %s3022
          %v3024 = vld [vmem:[%s3023] sm:$0x1]
          %3025 = vset.pattern.permute.xlu0 18
          %3026 = vperm.xlu0 %3025, %v2760
          %v3027 = vpop.permute.xlu0 %3026
          %v3029 = vlaneseq
          %v3030 = vshrl.u32 %v3029, 7
          %v3031 = vsub.s32 0, %v3030
          %v3032 = vrot.slane %v3027, %v3031
          %v3033 = vmul.f32 %v3032, %v3024
          %v3034 = vadd.f32 %v3021, %v3033
          %3035 = vset.pattern.permute.xlu0 19
          %3036 = vperm.xlu0 %3035, %v2760
          %v3037 = vpop.permute.xlu0 %3036
          %v3039 = vlaneseq
          %v3040 = vshrl.u32 %v3039, 7
          %v3041 = vsub.s32 0, %v3040
          %v3042 = vrot.slane %v3037, %v3041
          %v3043 = vmul.f32 %v3042, %v3024
          %3045 = vrot.lane.b32.xlu0 %v3043, 127
          %v3046 = vpop.permute.xlu0 %3045
          %v3048 = vadd.f32 %v3034, %v3046
          %3049 = vset.pattern.permute.xlu0 20
          %3050 = vperm.xlu0 %3049, %v2760
          %v3051 = vpop.permute.xlu0 %3050
          %v3053 = vlaneseq
          %v3054 = vshrl.u32 %v3053, 7
          %v3055 = vsub.s32 0, %v3054
          %v3056 = vrot.slane %v3051, %v3055
          %v3057 = vmul.f32 %v3056, %v3024
          %3059 = vrot.lane.b32.xlu0 %v3057, 126
          %v3060 = vpop.permute.xlu0 %3059
          %v3062 = vadd.f32 %v3048, %v3060
          %s3063 = sadd.s32 %s2817, 32
          %s3064 = scalar_lea.vmem [#allocation2], %s3063
          %v3065 = vld [vmem:[%s3064] sm:$0x1]
          %3066 = vset.pattern.permute.xlu0 21
          %3067 = vperm.xlu0 %3066, %v2760
          %v3068 = vpop.permute.xlu0 %3067
          %v3070 = vlaneseq
          %v3071 = vshrl.u32 %v3070, 7
          %v3072 = vsub.s32 0, %v3071
          %v3073 = vrot.slane %v3068, %v3072
          %v3074 = vmul.f32 %v3073, %v3065
          %v3075 = vadd.f32 %v3062, %v3074
          %3076 = vset.pattern.permute.xlu0 22
          %3077 = vperm.xlu0 %3076, %v2760
          %v3078 = vpop.permute.xlu0 %3077
          %v3080 = vlaneseq
          %v3081 = vshrl.u32 %v3080, 7
          %v3082 = vsub.s32 0, %v3081
          %v3083 = vrot.slane %v3078, %v3082
          %v3084 = vmul.f32 %v3083, %v3065
          %3086 = vrot.lane.b32.xlu0 %v3084, 127
          %v3087 = vpop.permute.xlu0 %3086
          %v3089 = vadd.f32 %v3075, %v3087
          %3090 = vset.pattern.permute.xlu0 23
          %3091 = vperm.xlu0 %3090, %v2760
          %v3092 = vpop.permute.xlu0 %3091
          %v3094 = vlaneseq
          %v3095 = vshrl.u32 %v3094, 7
          %v3096 = vsub.s32 0, %v3095
          %v3097 = vrot.slane %v3092, %v3096
          %v3098 = vmul.f32 %v3097, %v3065
          %3100 = vrot.lane.b32.xlu0 %v3098, 126
          %v3101 = vpop.permute.xlu0 %3100
          %v3103 = vadd.f32 %v3089, %v3101
          %s3104 = sadd.s32 %s2858, 32
          %s3105 = scalar_lea.vmem [#allocation2], %s3104
          %v3106 = vld [vmem:[%s3105] sm:$0x1]
          %3107 = vset.pattern.permute.xlu0 24
          %3108 = vperm.xlu0 %3107, %v2760
          %v3109 = vpop.permute.xlu0 %3108
          %v3111 = vlaneseq
          %v3112 = vshrl.u32 %v3111, 7
          %v3113 = vsub.s32 0, %v3112
          %v3114 = vrot.slane %v3109, %v3113
          %v3115 = vmul.f32 %v3114, %v3106
          %v3116 = vadd.f32 %v3103, %v3115
          %3117 = vset.pattern.permute.xlu0 25
          %3118 = vperm.xlu0 %3117, %v2760
          %v3119 = vpop.permute.xlu0 %3118
          %v3121 = vlaneseq
          %v3122 = vshrl.u32 %v3121, 7
          %v3123 = vsub.s32 0, %v3122
          %v3124 = vrot.slane %v3119, %v3123
          %v3125 = vmul.f32 %v3124, %v3106
          %3127 = vrot.lane.b32.xlu0 %v3125, 127
          %v3128 = vpop.permute.xlu0 %3127
          %v3130 = vadd.f32 %v3116, %v3128
          %3131 = vset.pattern.permute.xlu0 26
          %3132 = vperm.xlu0 %3131, %v2760
          %v3133 = vpop.permute.xlu0 %3132
          %v3135 = vlaneseq
          %v3136 = vshrl.u32 %v3135, 7
          %v3137 = vsub.s32 0, %v3136
          %v3138 = vrot.slane %v3133, %v3137
          %v3139 = vmul.f32 %v3138, %v3106
          %3141 = vrot.lane.b32.xlu0 %v3139, 126
          %v3142 = vpop.permute.xlu0 %3141
          %v3144 = vadd.f32 %v3130, %v3142
          %s3145 = scalar_lea.vmem %s204, %s2762 [#allocation3]
          %vm3146 = vcmask 122880
          %3147 = vst.msk [vmem:[%s3145] sm:$0x1] %vm3146, %v3144
        $region52: #{hdro_forward.1} parent=35 // loop_footer
          %s2766 = sadd.s32 1, %s2762
        $region53: #{hdro_forward.1} parent=35 // loop_footer_branch
          %2761 = sbr.rel target = $region49
        $region54: #{hdro_forward.1} parent=35 // loop_exit
          _
        %s3148 = sand.u32 %s129, 1
        %s3149 = scalar_lea.sflag [#allocation4], %s3148
        %s3150 = sand.u32 %s129, 1
        %s3151 = smul.addr %s3150, 8
        %s3152 = scalar_lea.vmem [#allocation3], %s3151
        // Predicated region
        $region55: #{hdro_forward.1} parent=35 // pred_check
          %p3153 = pneg %p139
        $region56: #{hdro_forward.1} parent=35 // pred_check_branch
          %3155 = sbr.rel (%p3153) target = $region58
        $region57: #{hdro_forward.1} parent=35 // pred_region
          %s3157 = ssub.s32 128, 128
          %3158 = vsyncadd %s3149, %s3157
          %s3159 = smul.addr %s22, 2
          %s3160 = sadd.s32 %s23, %s3159
          %s3161 = smul.addr %s3160, 128
          %s3162 = scalar_lea.hbm %s4, %s3161
          %s3164 = sshll.u32 %s3152, 4
          %s3165 = int_to_ptr.vmem [resolvable:$true] %s3164
          %3167 = dma.vmem_to_hbm [thread:$0]  %s3165, 128, %s3162, %s3149
        $region58: #{hdro_forward.1} parent=35 // pred_fallthru
          _
      $region36: #{hdro_forward.1} parent=5 // pred_fallthru
        _
      %p3168 = scmp.le.s32.totalorder 2, %s13
      // Predicated region
      $region59: #{hdro_forward.1} parent=5 // pred_check
        %p3169 = pneg %p3168
      $region60: #{hdro_forward.1} parent=5 // pred_check_branch
        %3171 = sbr.rel (%p3169) target = $region62
      $region61: #{hdro_forward.1} parent=5 // pred_region
        %s3172 = ssub.s32 %s13, 2
        // Predicated region
        $region63: #{hdro_forward.1} parent=61 // pred_check
          %p3173 = pneg %p145
        $region64: #{hdro_forward.1} parent=61 // pred_check_branch
          %3175 = sbr.rel (%p3173) target = $region66
        $region65: #{hdro_forward.1} parent=61 // pred_region
          %s3176 = sand.u32 %s130, 1
          %s3177 = scalar_lea.sflag [#allocation4], %s3176
          %s3178 = sand.u32 %s130, 1
          %s3179 = smul.addr %s3178, 8
          %s3180 = scalar_lea.vmem [#allocation3], %s3179
          %3181 = dma.done %s3177, 128
        $region66: #{hdro_forward.1} parent=61 // pred_fallthru
          _
      $region62: #{hdro_forward.1} parent=5 // pred_fallthru
        _
    $region6: #{hdro_forward.1} parent=1 // loop_footer
      %s17 = sadd.s32 1, %s13
    $region7: #{hdro_forward.1} parent=1 // loop_footer_branch
      %12 = sbr.rel target = $region3
    $region8: #{hdro_forward.1} parent=1 // loop_exit
      _
    %3182 = vsyncpa [#allocation4], 1
    %s3183 = scalar_lea.sflag [#allocation4], 1
    %3184 = vsyncpa %s3183, 1

</llo_original>
